<compile_context>
chip_gen: v5e
topology: v5e:2x2
jax: 0.10.0
libtpu: 0.0.40
codegen_flags: <defaults>
</compile_context>

<pallas_src>
import functools

import jax
import jax.numpy as jnp
from jax import lax
from jax.experimental import pallas as pl
from jax.experimental.pallas import tpu as pltpu

# ---------------- problem configuration (small, TPU-aligned) ----------------
N_ATOMS = 16       # number of atoms
D = 128            # atom_embeddings_dim (lane-aligned)
N_RBF = 128        # number of radial basis functions (lane-aligned)
P = 200            # number of pairs / edges (NOT a multiple of TP -> exercises masking)
TP = 256           # pair tile size: full MXU height on v6e/v7x, P=200 fits in one tile

RBF_MIN = 0.0
RBF_MAX = 5.0
GAMMA = 10.0
EPS = 1e-8         # RMSNorm eps
# Dropout(p) -> identity at inference.
# TODO(synk): training-mode dropout (pltpu.prng_seed / prng_random_bits masking) not implemented.


def _softplus(x):
    return jnp.logaddexp(x, 0.0)


def cfconv_kernel(pairs_ref,            # (TP, 8) f32: lane0=R, lane1=idx_i, lane2=idx_j
                  centers_ref,          # (1, N_RBF) f32
                  w1_ref, s1_ref,       # (N_RBF, D) bf16, (1, D) f32
                  w2_ref, s2_ref,       # (D, D) bf16,     (1, D) f32
                  x_ref,                # (N_ATOMS, D) bf16 (full X)
                  o_ref,                # (N_ATOMS, D) f32 resident accumulator
                  *, n_valid_pairs):
    t = pl.program_id(0)   # pair-tile axis ("arbitrary": accumulation)

    @pl.when(t == 0)
    def _():
        o_ref[...] = jnp.zeros_like(o_ref)

    # ---- unpack the pair stream --------------------------------------------
    pairs = pairs_ref[...]                       # (TP, 8)
    r = pairs[:, 0:1]                            # (TP, 1) f32
    idx_i = pairs[:, 1:2].astype(jnp.int32)      # exact: small non-negative ints
    idx_j = pairs[:, 2:3].astype(jnp.int32)

    # ---- radial basis functions (f32 EUP) -----------------------------------
    diff = r - centers_ref[...]                  # (TP, N_RBF)
    rbf = jnp.exp(-GAMMA * diff * diff)

    # ---- filter network: Linear -> RMSNorm -> (Dropout) -> Softplus, x2 -----
    # bf16 operands on the MXU, f32 accumulation; transcendentals kept f32
    # (uniform across v5e/v6e/v7x; v6e/v7x could run the softplus path in bf16).
    h = jnp.dot(rbf.astype(jnp.bfloat16), w1_ref[...],
                preferred_element_type=jnp.float32)                     # (TP, D) f32
    inv = lax.rsqrt(jnp.sum(h * h, axis=-1, keepdims=True) * (1.0 / D) + EPS)
    h = _softplus(h * (s1_ref[...] * inv))       # scale folded into one multiply

    h = jnp.dot(h.astype(jnp.bfloat16), w2_ref[...],
                preferred_element_type=jnp.float32)
    inv = lax.rsqrt(jnp.sum(h * h, axis=-1, keepdims=True) * (1.0 / D) + EPS)
    wij = _softplus(h * (s2_ref[...] * inv))     # (TP, D) f32

    # ---- gather X[idx_j], multiply, scatter-add -- all via one-hot matmuls ---
    # one_hot_j @ X gathers X[idx_j]; contracting one_hot_i over the pair axis
    # sums duplicate idx_i contributions (rides the otherwise-idle MXU).
    atom_ids = lax.broadcasted_iota(jnp.int32, (TP, N_ATOMS), 1)
    pair_ids = t * TP + lax.broadcasted_iota(jnp.int32, (TP, 1), 0)
    valid = pair_ids < n_valid_pairs             # mask padded pairs

    one_hot_j = (idx_j == atom_ids).astype(jnp.bfloat16)                # (TP, N_ATOMS)
    one_hot_i = ((idx_i == atom_ids) & valid).astype(jnp.bfloat16)

    x_g = jnp.dot(one_hot_j, x_ref[...], preferred_element_type=jnp.float32)  # (TP, D)
    msg = (x_g * wij).astype(jnp.bfloat16)

    # contraction over the TP axis of both operands: no explicit .T / XLU transpose
    o_ref[...] += lax.dot_general(
        one_hot_i, msg,
        dimension_numbers=(((0,), (0,)), ((), ())),
        preferred_element_type=jnp.float32)                             # (N_ATOMS, D)


@jax.jit
def cfconv_forward(X, R_distances, idx_i, idx_j, centers, w1, scale1, w2, scale2):
    n_tiles = pl.cdiv(P, TP)           # = 1 at these shapes
    p_pad = n_tiles * TP

    # pack the three pair streams into one lane-packed array: 1 DMA per tile
    pairs = jnp.concatenate(
        [R_distances.reshape(P, 1).astype(jnp.float32),
         idx_i.reshape(P, 1).astype(jnp.float32),
         idx_j.reshape(P, 1).astype(jnp.float32),
         jnp.zeros((P, 5), jnp.float32)], axis=1)
    pairs = jnp.pad(pairs, ((0, p_pad - P), (0, 0)))          # padded pairs masked in-kernel

    centers2d = centers.reshape(1, N_RBF).astype(jnp.float32)
    s1 = scale1.reshape(1, D).astype(jnp.float32)
    s2 = scale2.reshape(1, D).astype(jnp.float32)
    w1b = w1.astype(jnp.bfloat16)                              # bf16 MXU operands:
    w2b = w2.astype(jnp.bfloat16)                              # half the weight DMA/VMEM
    xb = X.astype(jnp.bfloat16)

    def full(shape):
        return pl.BlockSpec(shape, lambda t: (0, 0))

    cost = pl.CostEstimate(
        flops=2 * p_pad * (N_RBF * D + D * D + 2 * N_ATOMS * D),
        transcendentals=p_pad * (N_RBF + 4 * D + 2),
        bytes_accessed=(4 * (p_pad * 8 + N_RBF + 2 * D + N_ATOMS * D)
                        + 2 * (N_RBF * D + D * D + N_ATOMS * D)),
    )

    return pl.pallas_call(
        functools.partial(cfconv_kernel, n_valid_pairs=P),
        out_shape=jax.ShapeDtypeStruct((N_ATOMS, D), jnp.float32),
        grid=(n_tiles,),
        in_specs=[
            pl.BlockSpec((TP, 8), lambda t: (t, 0)),   # packed pair stream
            full((1, N_RBF)),                          # centers
            full((N_RBF, D)),                          # W1 (bf16)
            full((1, D)),                              # scale1
            full((D, D)),                              # W2 (bf16)
            full((1, D)),                              # scale2
            full((N_ATOMS, D)),                        # X (bf16, full)
        ],
        out_specs=pl.BlockSpec((N_ATOMS, D), lambda t: (0, 0)),
        compiler_params=pltpu.CompilerParams(
            dimension_semantics=("arbitrary",),
            vmem_limit_bytes=32 * 1024 * 1024),        # re-derive for v7x at production TP/D
        cost_estimate=cost,
    )(pairs, centers2d, w1b, s1, w2b, s2, xb)


def cfconv_reference(X, R_distances, idx_i, idx_j, centers, w1, scale1, w2, scale2):
    diff = R_distances[:, None] - centers[None, :]
    rbf = jnp.exp(-GAMMA * diff ** 2)
    h = rbf @ w1
    norm = jnp.linalg.norm(h, axis=-1, keepdims=True)
    h = _softplus(scale1 * (h / (norm * (D ** -0.5) + EPS)))
    h = h @ w2
    norm = jnp.linalg.norm(h, axis=-1, keepdims=True)
    wij = _softplus(scale2 * (h / (norm * (D ** -0.5) + EPS)))
    x_ij = X[idx_j] * wij
    return jnp.zeros((N_ATOMS, D), jnp.float32).at[idx_i].add(x_ij)


if __name__ == "__main__":
    key = jax.random.PRNGKey(0)
    k_x, k_r, k_i, k_j, k_w1, k_w2 = jax.random.split(key, 6)

    # inputs
    X = jax.random.normal(k_x, (N_ATOMS, D), jnp.float32)
    R_distances = jax.random.uniform(k_r, (P,), jnp.float32,
                                     minval=RBF_MIN, maxval=RBF_MAX)
    idx_i = jax.random.randint(k_i, (P,), 0, N_ATOMS, jnp.int32)
    idx_j = jax.random.randint(k_j, (P,), 0, N_ATOMS, jnp.int32)

    # parameters (PyTorch-style uniform(+/-1/sqrt(fan_in)) for Linear,
    # ones for RMSNorm scale, matching the module's __init__)
    centers = jnp.linspace(RBF_MIN, RBF_MAX, N_RBF).astype(jnp.float32)
    b1 = 1.0 / (N_RBF ** 0.5)
    w1 = jax.random.uniform(k_w1, (N_RBF, D), jnp.float32, minval=-b1, maxval=b1)
    b2 = 1.0 / (D ** 0.5)
    w2 = jax.random.uniform(k_w2, (D, D), jnp.float32, minval=-b2, maxval=b2)
    scale1 = jnp.ones((D,), jnp.float32)
    scale2 = jnp.ones((D,), jnp.float32)

    out = cfconv_forward(X, R_distances, idx_i, idx_j,
                         centers, w1, scale1, w2, scale2)
    out = jax.block_until_ready(out)

    ref = cfconv_reference(X, R_distances, idx_i, idx_j,
                           centers, w1, scale1, w2, scale2)
    assert out.shape == (N_ATOMS, D)
    # bf16 MXU operands (+ rsqrt-fused RMSNorm) intentionally deviate from the f32
    # reference; use a relative-Frobenius-norm check, robust to per-element rounding.
    rel = jnp.linalg.norm(out - ref) / jnp.maximum(jnp.linalg.norm(ref), 1e-6)
    assert bool(rel < 3e-2), f"relative error vs reference too large: {float(rel)}"

    print("KERNEL_OK")
</pallas_src>

<mosaic_0001>
module attributes {stable_mosaic.version = 11 : i64} {
  func.func @cfconv_kernel(%arg0: i32, %arg1: memref<256x8xf32, #tpu.memory_space<vmem>>, %arg2: memref<1x128xf32, #tpu.memory_space<vmem>>, %arg3: memref<128x128xbf16, #tpu.memory_space<vmem>>, %arg4: memref<1x128xf32, #tpu.memory_space<vmem>>, %arg5: memref<128x128xbf16, #tpu.memory_space<vmem>>, %arg6: memref<1x128xf32, #tpu.memory_space<vmem>>, %arg7: memref<16x128xbf16, #tpu.memory_space<vmem>>, %arg8: memref<16x128xf32, #tpu.memory_space<vmem>>) attributes {dimension_semantics = [#tpu.dimension_semantics<arbitrary>], iteration_bounds = array<i64: 1>, scalar_prefetch = 0 : i64, scratch_operands = 0 : i64, tpu.core_type = #tpu.core_type<tc>, window_params = [{transform_indices = @transform_0, window_bounds = array<i64: 256, 8>}, {pipeline_mode = #tpu.pipeline_mode<synchronous>, transform_indices = @transform_1, window_bounds = array<i64: 1, 128>}, {pipeline_mode = #tpu.pipeline_mode<synchronous>, transform_indices = @transform_2, window_bounds = array<i64: 128, 128>}, {pipeline_mode = #tpu.pipeline_mode<synchronous>, transform_indices = @transform_3, window_bounds = array<i64: 1, 128>}, {pipeline_mode = #tpu.pipeline_mode<synchronous>, transform_indices = @transform_4, window_bounds = array<i64: 128, 128>}, {pipeline_mode = #tpu.pipeline_mode<synchronous>, transform_indices = @transform_5, window_bounds = array<i64: 1, 128>}, {pipeline_mode = #tpu.pipeline_mode<synchronous>, transform_indices = @transform_6, window_bounds = array<i64: 16, 128>}, {pipeline_mode = #tpu.pipeline_mode<synchronous>, transform_indices = @transform_7, window_bounds = array<i64: 16, 128>}]} {
    %c0_i32 = arith.constant 0 : i32
    %0 = arith.cmpi eq, %arg0, %c0_i32 : i32
    %1 = arith.extui %0 : i1 to i32
    %c0_i32_0 = arith.constant 0 : i32
    %2 = arith.cmpi ne, %1, %c0_i32_0 : i32
    scf.if %2 {
      %cst_32 = arith.constant 0.000000e+00 : f32
      %104 = vector.broadcast %cst_32 : f32 to vector<16x128xf32>
      %c0_33 = arith.constant 0 : index
      %c0_34 = arith.constant 0 : index
      %105 = vector.load %arg8[%c0_33, %c0_34] : memref<16x128xf32, #tpu.memory_space<vmem>>, vector<16x128xf32>
      tpu.vector_store %arg8[%c0_33, %c0_34], %104 {strides = array<i32>} : memref<16x128xf32, #tpu.memory_space<vmem>>, vector<16x128xf32>,
    } else {
    }
    %c0 = arith.constant 0 : index
    %c0_1 = arith.constant 0 : index
    %3 = vector.load %arg1[%c0, %c0_1] : memref<256x8xf32, #tpu.memory_space<vmem>>, vector<256x8xf32>
    %4 = vector.extract_strided_slice %3 {offsets = [0, 0], sizes = [256, 1], strides = [1, 1]} : vector<256x8xf32> to vector<256x1xf32>
    %5 = vector.extract_strided_slice %3 {offsets = [0, 1], sizes = [256, 1], strides = [1, 1]} : vector<256x8xf32> to vector<256x1xf32>
    %6 = arith.fptosi %5 : vector<256x1xf32> to vector<256x1xi32>
    %7 = vector.extract_strided_slice %3 {offsets = [0, 2], sizes = [256, 1], strides = [1, 1]} : vector<256x8xf32> to vector<256x1xf32>
    %8 = arith.fptosi %7 : vector<256x1xf32> to vector<256x1xi32>
    %c0_2 = arith.constant 0 : index
    %c0_3 = arith.constant 0 : index
    %9 = vector.load %arg2[%c0_2, %c0_3] : memref<1x128xf32, #tpu.memory_space<vmem>>, vector<1x128xf32>
    %10 = vector.broadcast %4 : vector<256x1xf32> to vector<256x128xf32>
    %11 = vector.broadcast %9 : vector<1x128xf32> to vector<256x128xf32>
    %12 = arith.subf %10, %11 : vector<256x128xf32>
    %cst = arith.constant -1.000000e+01 : f32
    %13 = vector.broadcast %cst : f32 to vector<256x128xf32>
    %14 = arith.mulf %13, %12 : vector<256x128xf32>
    %15 = arith.mulf %14, %12 : vector<256x128xf32>
    %16 = math.exp %15 : vector<256x128xf32>
    %17 = arith.truncf %16 : vector<256x128xf32> to vector<256x128xbf16>
    %c0_4 = arith.constant 0 : index
    %c0_5 = arith.constant 0 : index
    %18 = vector.load %arg3[%c0_4, %c0_5] : memref<128x128xbf16, #tpu.memory_space<vmem>>, vector<128x128xbf16>
    %cst_6 = arith.constant dense<0.000000e+00> : vector<256x128xf32>
    %19 = tpu.matmul %17, %18, %cst_6 {dimension_numbers = #tpu.dot_dimension_numbers<[1], [0], [0], [1], [0, 0, 1, 1], [], []>} : vector<256x128xbf16>, vector<128x128xbf16>, vector<256x128xf32> -> vector<256x128xf32>
    %20 = arith.mulf %19, %19 : vector<256x128xf32>
    %cst_7 = arith.constant dense<0.000000e+00> : vector<256xf32>
    %21 = vector.multi_reduction <add>, %20, %cst_7 [1] : vector<256x128xf32> to vector<256xf32>
    %22 = vector.shape_cast %21 : vector<256xf32> to vector<256x1xf32>
    %cst_8 = arith.constant 7.812500e-03 : f32
    %23 = vector.broadcast %cst_8 : f32 to vector<256x1xf32>
    %24 = arith.mulf %22, %23 : vector<256x1xf32>
    %cst_9 = arith.constant 9.99999993E-9 : f32
    %25 = vector.broadcast %cst_9 : f32 to vector<256x1xf32>
    %26 = arith.addf %24, %25 : vector<256x1xf32>
    %27 = math.rsqrt %26 : vector<256x1xf32>
    %c0_10 = arith.constant 0 : index
    %c0_11 = arith.constant 0 : index
    %28 = vector.load %arg4[%c0_10, %c0_11] : memref<1x128xf32, #tpu.memory_space<vmem>>, vector<1x128xf32>
    %29 = vector.broadcast %28 : vector<1x128xf32> to vector<256x128xf32>
    %30 = vector.broadcast %27 : vector<256x1xf32> to vector<256x128xf32>
    %31 = arith.mulf %29, %30 : vector<256x128xf32>
    %32 = arith.mulf %19, %31 : vector<256x128xf32>
    %cst_12 = arith.constant 0.000000e+00 : f32
    %33 = vector.broadcast %cst_12 : f32 to vector<256x128xf32>
    %34 = arith.maximumf %32, %33 : vector<256x128xf32>
    %35 = vector.broadcast %cst_12 : f32 to vector<256x128xf32>
    %36 = arith.subf %32, %35 : vector<256x128xf32>
    %37 = arith.cmpf one, %36, %36 : vector<256x128xf32>
    %38 = vector.broadcast %cst_12 : f32 to vector<256x128xf32>
    %39 = arith.addf %32, %38 : vector<256x128xf32>
    %40 = math.absf %36 : vector<256x128xf32>
    %cst_13 = arith.constant 0.000000e+00 : f32
    %41 = vector.broadcast %cst_13 : f32 to vector<256x128xf32>
    %42 = arith.subf %41, %40 : vector<256x128xf32>
    %43 = math.exp %42 : vector<256x128xf32>
    %44 = math.log1p %43 : vector<256x128xf32>
    %45 = arith.addf %34, %44 : vector<256x128xf32>
    %46 = arith.select %37, %39, %45 : vector<256x128xi1>, vector<256x128xf32>
    %47 = arith.truncf %46 : vector<256x128xf32> to vector<256x128xbf16>
    %c0_14 = arith.constant 0 : index
    %c0_15 = arith.constant 0 : index
    %48 = vector.load %arg5[%c0_14, %c0_15] : memref<128x128xbf16, #tpu.memory_space<vmem>>, vector<128x128xbf16>
    %cst_16 = arith.constant dense<0.000000e+00> : vector<256x128xf32>
    %49 = tpu.matmul %47, %48, %cst_16 {dimension_numbers = #tpu.dot_dimension_numbers<[1], [0], [0], [1], [0, 0, 1, 1], [], []>} : vector<256x128xbf16>, vector<128x128xbf16>, vector<256x128xf32> -> vector<256x128xf32>
    %50 = arith.mulf %49, %49 : vector<256x128xf32>
    %cst_17 = arith.constant dense<0.000000e+00> : vector<256xf32>
    %51 = vector.multi_reduction <add>, %50, %cst_17 [1] : vector<256x128xf32> to vector<256xf32>
    %52 = vector.shape_cast %51 : vector<256xf32> to vector<256x1xf32>
    %cst_18 = arith.constant 7.812500e-03 : f32
    %53 = vector.broadcast %cst_18 : f32 to vector<256x1xf32>
    %54 = arith.mulf %52, %53 : vector<256x1xf32>
    %cst_19 = arith.constant 9.99999993E-9 : f32
    %55 = vector.broadcast %cst_19 : f32 to vector<256x1xf32>
    %56 = arith.addf %54, %55 : vector<256x1xf32>
    %57 = math.rsqrt %56 : vector<256x1xf32>
    %c0_20 = arith.constant 0 : index
    %c0_21 = arith.constant 0 : index
    %58 = vector.load %arg6[%c0_20, %c0_21] : memref<1x128xf32, #tpu.memory_space<vmem>>, vector<1x128xf32>
    %59 = vector.broadcast %58 : vector<1x128xf32> to vector<256x128xf32>
    %60 = vector.broadcast %57 : vector<256x1xf32> to vector<256x128xf32>
    %61 = arith.mulf %59, %60 : vector<256x128xf32>
    %62 = arith.mulf %49, %61 : vector<256x128xf32>
    %cst_22 = arith.constant 0.000000e+00 : f32
    %63 = vector.broadcast %cst_22 : f32 to vector<256x128xf32>
    %64 = arith.maximumf %62, %63 : vector<256x128xf32>
    %65 = vector.broadcast %cst_22 : f32 to vector<256x128xf32>
    %66 = arith.subf %62, %65 : vector<256x128xf32>
    %67 = arith.cmpf one, %66, %66 : vector<256x128xf32>
    %68 = vector.broadcast %cst_22 : f32 to vector<256x128xf32>
    %69 = arith.addf %62, %68 : vector<256x128xf32>
    %70 = math.absf %66 : vector<256x128xf32>
    %cst_23 = arith.constant 0.000000e+00 : f32
    %71 = vector.broadcast %cst_23 : f32 to vector<256x128xf32>
    %72 = arith.subf %71, %70 : vector<256x128xf32>
    %73 = math.exp %72 : vector<256x128xf32>
    %74 = math.log1p %73 : vector<256x128xf32>
    %75 = arith.addf %64, %74 : vector<256x128xf32>
    %76 = arith.select %67, %69, %75 : vector<256x128xi1>, vector<256x128xf32>
    %77 = tpu.iota {dimensions = array<i32: 1>} : vector<256x16xi32>
    %c256_i32 = arith.constant 256 : i32
    %78 = arith.muli %arg0, %c256_i32 : i32
    %79 = tpu.iota {dimensions = array<i32: 0>} : vector<256x1xi32>
    %80 = vector.broadcast %78 : i32 to vector<256x1xi32>
    %81 = arith.addi %80, %79 : vector<256x1xi32>
    %c200_i32 = arith.constant 200 : i32
    %82 = vector.broadcast %c200_i32 : i32 to vector<256x1xi32>
    %83 = arith.cmpi slt, %81, %82 : vector<256x1xi32>
    %84 = vector.broadcast %8 : vector<256x1xi32> to vector<256x16xi32>
    %85 = arith.cmpi eq, %84, %77 : vector<256x16xi32>
    %86 = arith.extui %85 : vector<256x16xi1> to vector<256x16xi32>
    %87 = arith.sitofp %86 : vector<256x16xi32> to vector<256x16xf32>
    %88 = arith.truncf %87 : vector<256x16xf32> to vector<256x16xbf16>
    %89 = vector.broadcast %6 : vector<256x1xi32> to vector<256x16xi32>
    %90 = arith.cmpi eq, %89, %77 : vector<256x16xi32>
    %91 = vector.broadcast %83 : vector<256x1xi1> to vector<256x16xi1>
    %92 = arith.andi %90, %91 : vector<256x16xi1>
    %93 = arith.extui %92 : vector<256x16xi1> to vector<256x16xi32>
    %94 = arith.sitofp %93 : vector<256x16xi32> to vector<256x16xf32>
    %95 = arith.truncf %94 : vector<256x16xf32> to vector<256x16xbf16>
    %c0_24 = arith.constant 0 : index
    %c0_25 = arith.constant 0 : index
    %96 = vector.load %arg7[%c0_24, %c0_25] : memref<16x128xbf16, #tpu.memory_space<vmem>>, vector<16x128xbf16>
    %cst_26 = arith.constant dense<0.000000e+00> : vector<256x128xf32>
    %97 = tpu.matmul %88, %96, %cst_26 {dimension_numbers = #tpu.dot_dimension_numbers<[1], [0], [0], [1], [0, 0, 1, 1], [], []>} : vector<256x16xbf16>, vector<16x128xbf16>, vector<256x128xf32> -> vector<256x128xf32>
    %98 = arith.mulf %97, %76 : vector<256x128xf32>
    %99 = arith.truncf %98 : vector<256x128xf32> to vector<256x128xbf16>
    %c0_27 = arith.constant 0 : index
    %c0_28 = arith.constant 0 : index
    %100 = vector.load %arg8[%c0_27, %c0_28] : memref<16x128xf32, #tpu.memory_space<vmem>>, vector<16x128xf32>
    %cst_29 = arith.constant dense<0.000000e+00> : vector<16x128xf32>
    %101 = tpu.matmul %95, %99, %cst_29 {dimension_numbers = #tpu.dot_dimension_numbers<[0], [0], [1], [1], [0, 1, 1, 1], [], []>} : vector<256x16xbf16>, vector<256x128xbf16>, vector<16x128xf32> -> vector<16x128xf32>
    %102 = arith.addf %100, %101 : vector<16x128xf32>
    %c0_30 = arith.constant 0 : index
    %c0_31 = arith.constant 0 : index
    %103 = vector.load %arg8[%c0_30, %c0_31] : memref<16x128xf32, #tpu.memory_space<vmem>>, vector<16x128xf32>
    tpu.vector_store %arg8[%c0_30, %c0_31], %102 {strides = array<i32>} : memref<16x128xf32, #tpu.memory_space<vmem>>, vector<16x128xf32>,
    return
  }
  func.func @transform_0(%arg0: i32) -> (i32, i32) {
    %c0_i32 = arith.constant 0 : i32
    %c0_i32_0 = arith.constant 0 : i32
    return %arg0, %c0_i32 : i32, i32
  }
  func.func @transform_1(%arg0: i32) -> (i32, i32) {
    %c0_i32 = arith.constant 0 : i32
    %c0_i32_0 = arith.constant 0 : i32
    %c0_i32_1 = arith.constant 0 : i32
    return %c0_i32, %c0_i32_0 : i32, i32
  }
  func.func @transform_2(%arg0: i32) -> (i32, i32) {
    %c0_i32 = arith.constant 0 : i32
    %c0_i32_0 = arith.constant 0 : i32
    %c0_i32_1 = arith.constant 0 : i32
    return %c0_i32, %c0_i32_0 : i32, i32
  }
  func.func @transform_3(%arg0: i32) -> (i32, i32) {
    %c0_i32 = arith.constant 0 : i32
    %c0_i32_0 = arith.constant 0 : i32
    %c0_i32_1 = arith.constant 0 : i32
    return %c0_i32, %c0_i32_0 : i32, i32
  }
  func.func @transform_4(%arg0: i32) -> (i32, i32) {
    %c0_i32 = arith.constant 0 : i32
    %c0_i32_0 = arith.constant 0 : i32
    %c0_i32_1 = arith.constant 0 : i32
    return %c0_i32, %c0_i32_0 : i32, i32
  }
  func.func @transform_5(%arg0: i32) -> (i32, i32) {
    %c0_i32 = arith.constant 0 : i32
    %c0_i32_0 = arith.constant 0 : i32
    %c0_i32_1 = arith.constant 0 : i32
    return %c0_i32, %c0_i32_0 : i32, i32
  }
  func.func @transform_6(%arg0: i32) -> (i32, i32) {
    %c0_i32 = arith.constant 0 : i32
    %c0_i32_0 = arith.constant 0 : i32
    %c0_i32_1 = arith.constant 0 : i32
    return %c0_i32, %c0_i32_0 : i32, i32
  }
  func.func @transform_7(%arg0: i32) -> (i32, i32) {
    %c0_i32 = arith.constant 0 : i32
    %c0_i32_0 = arith.constant 0 : i32
    %c0_i32_1 = arith.constant 0 : i32
    return %c0_i32, %c0_i32_0 : i32, i32
  }
}

</mosaic_0001>

<llo_original>
// kernel: cfconv_forward.1
$region0: #{cfconv_forward.1}
  #allocation0 [shape = 'u32[]', space=smem, size = 0x4, offset = 0x4, fixed_abs, tag = 'smem constant byte address 0x4 - core index']
  #allocation1 [shape = 'u32[72,128]{1,0:T(1,128)}', space=vmem, size = 0x9000, scoped, tag = 'internal scratch']
  %s0 = inlined_call_operand.vmem [shape: f32[256,8], index: 0, kind: input, shape index: {}]
  %s1 = inlined_call_operand.vmem [shape: f32[1,128], index: 1, kind: input, shape index: {}]
  %s2 = inlined_call_operand.vmem [shape: bf16[128,128], index: 2, kind: input, shape index: {}]
  %s3 = inlined_call_operand.vmem [shape: f32[1,128], index: 3, kind: input, shape index: {}]
  %s4 = inlined_call_operand.vmem [shape: bf16[128,128], index: 4, kind: input, shape index: {}]
  %s5 = inlined_call_operand.vmem [shape: f32[1,128], index: 5, kind: input, shape index: {}]
  %s6 = inlined_call_operand.vmem [shape: bf16[16,128], index: 6, kind: input, shape index: {}]
  %s7 = inlined_call_operand.hbm [shape: f32[16,128], index: 7, kind: output, shape index: {}]
  %s8 = sld [smem:[#allocation0]]
  $region42: #{cfconv_forward.1} parent=0
    _
  %s10 = ssub.s32 1, %s8
  %s11 = scalar_select 0, %s10, %s8
  $region1: #{cfconv_forward.1} parent=0
    #allocation2 [shape = 'u8[8192]{0}', space=vmem, size = 0x2000, scoped, tag = 'output window, operand 0, single buffered']
    #allocation3 [shape = 's32[1]{0}', space=sflag, size = 0x4, scoped, tag = 'scoped memory for cfconv_forward.1']
    %12 = vsyncpa [#allocation3], 0
    // Predicated region
    $region2: #{cfconv_forward.1} parent=1 // pred_check
      _
    $region3: #{cfconv_forward.1} parent=1 // pred_check_branch
      %14 = sbr.rel (0) target = $region5
    $region4: #{cfconv_forward.1} parent=1 // pred_region
      _
    $region5: #{cfconv_forward.1} parent=1 // pred_fallthru
      _
    // Predicated region
    $region6: #{cfconv_forward.1} parent=1 // pred_check
      _
    $region7: #{cfconv_forward.1} parent=1 // pred_check_branch
      %16 = sbr.rel (0) target = $region9
    $region8: #{cfconv_forward.1} parent=1 // pred_region
      _
    $region9: #{cfconv_forward.1} parent=1 // pred_fallthru
      _
    // Predicated region
    $region10: #{cfconv_forward.1} parent=1 // pred_check
      _
    $region11: #{cfconv_forward.1} parent=1 // pred_check_branch
      %18 = sbr.rel (0) target = $region13
    $region12: #{cfconv_forward.1} parent=1 // pred_region
      _
    $region13: #{cfconv_forward.1} parent=1 // pred_fallthru
      _
    // Predicated region
    $region14: #{cfconv_forward.1} parent=1 // pred_check
      _
    $region15: #{cfconv_forward.1} parent=1 // pred_check_branch
      %20 = sbr.rel (0) target = $region17
    $region16: #{cfconv_forward.1} parent=1 // pred_region
      _
    $region17: #{cfconv_forward.1} parent=1 // pred_fallthru
      _
    // Predicated region
    $region18: #{cfconv_forward.1} parent=1 // pred_check
      _
    $region19: #{cfconv_forward.1} parent=1 // pred_check_branch
      %22 = sbr.rel (0) target = $region21
    $region20: #{cfconv_forward.1} parent=1 // pred_region
      _
    $region21: #{cfconv_forward.1} parent=1 // pred_fallthru
      _
    // Predicated region
    $region22: #{cfconv_forward.1} parent=1 // pred_check
      _
    $region23: #{cfconv_forward.1} parent=1 // pred_check_branch
      %24 = sbr.rel (0) target = $region25
    $region24: #{cfconv_forward.1} parent=1 // pred_region
      _
    $region25: #{cfconv_forward.1} parent=1 // pred_fallthru
      _
    // Predicated region
    $region26: #{cfconv_forward.1} parent=1 // pred_check
      _
    $region27: #{cfconv_forward.1} parent=1 // pred_check_branch
      %26 = sbr.rel (0) target = $region29
    $region28: #{cfconv_forward.1} parent=1 // pred_region
      _
    $region29: #{cfconv_forward.1} parent=1 // pred_fallthru
      _
    %p28 = scmp.eq.s32.totalorder 0, 0
    // Predicated region
    $region30: #{cfconv_forward.1} parent=1 // pred_check
      %p29 = pneg %p28
    $region31: #{cfconv_forward.1} parent=1 // pred_check_branch
      %31 = sbr.rel (%p29) target = $region33
    $region32: #{cfconv_forward.1} parent=1 // pred_region
      %32 = vst [vmem:[#allocation2] sm:$0xff] 0.0
      %33 = vst [vmem:[#allocation2 + $0x8] sm:$0xff] 0.0
    $region33: #{cfconv_forward.1} parent=1 // pred_fallthru
      _
    %v34 = vld [vmem:[%s0] sm:$0xff]
    %v35 = vld [vmem:[%s0 + $0x8] sm:$0xff]
    %v36 = vld [vmem:[%s0 + $0x10] sm:$0xff]
    %v37 = vld [vmem:[%s0 + $0x18] sm:$0xff]
    %v38 = vld [vmem:[%s0 + $0x20] sm:$0xff]
    %v39 = vld [vmem:[%s0 + $0x28] sm:$0xff]
    %v40 = vld [vmem:[%s0 + $0x30] sm:$0xff]
    %v41 = vld [vmem:[%s0 + $0x38] sm:$0xff]
    %v42 = vld [vmem:[%s0 + $0x40] sm:$0xff]
    %v43 = vld [vmem:[%s0 + $0x48] sm:$0xff]
    %v44 = vld [vmem:[%s0 + $0x50] sm:$0xff]
    %v45 = vld [vmem:[%s0 + $0x58] sm:$0xff]
    %v46 = vld [vmem:[%s0 + $0x60] sm:$0xff]
    %v47 = vld [vmem:[%s0 + $0x68] sm:$0xff]
    %v48 = vld [vmem:[%s0 + $0x70] sm:$0xff]
    %v49 = vld [vmem:[%s0 + $0x78] sm:$0xff]
    %v50 = vld [vmem:[%s0 + $0x80] sm:$0xff]
    %v51 = vld [vmem:[%s0 + $0x88] sm:$0xff]
    %v52 = vld [vmem:[%s0 + $0x90] sm:$0xff]
    %v53 = vld [vmem:[%s0 + $0x98] sm:$0xff]
    %v54 = vld [vmem:[%s0 + $0xa0] sm:$0xff]
    %v55 = vld [vmem:[%s0 + $0xa8] sm:$0xff]
    %v56 = vld [vmem:[%s0 + $0xb0] sm:$0xff]
    %v57 = vld [vmem:[%s0 + $0xb8] sm:$0xff]
    %v58 = vld [vmem:[%s0 + $0xc0] sm:$0xff]
    %v59 = vld [vmem:[%s0 + $0xc8] sm:$0xff]
    %v60 = vld [vmem:[%s0 + $0xd0] sm:$0xff]
    %v61 = vld [vmem:[%s0 + $0xd8] sm:$0xff]
    %v62 = vld [vmem:[%s0 + $0xe0] sm:$0xff]
    %v63 = vld [vmem:[%s0 + $0xe8] sm:$0xff]
    %v64 = vld [vmem:[%s0 + $0xf0] sm:$0xff]
    %v65 = vld [vmem:[%s0 + $0xf8] sm:$0xff]
    %v66 = vcvt.f32.s32.to.zero.pseudo %v34
    %v67 = vcvt.f32.s32.to.zero.pseudo %v35
    %v68 = vcvt.f32.s32.to.zero.pseudo %v36
    %v69 = vcvt.f32.s32.to.zero.pseudo %v37
    %v70 = vcvt.f32.s32.to.zero.pseudo %v38
    %v71 = vcvt.f32.s32.to.zero.pseudo %v39
    %v72 = vcvt.f32.s32.to.zero.pseudo %v40
    %v73 = vcvt.f32.s32.to.zero.pseudo %v41
    %v74 = vcvt.f32.s32.to.zero.pseudo %v42
    %v75 = vcvt.f32.s32.to.zero.pseudo %v43
    %v76 = vcvt.f32.s32.to.zero.pseudo %v44
    %v77 = vcvt.f32.s32.to.zero.pseudo %v45
    %v78 = vcvt.f32.s32.to.zero.pseudo %v46
    %v79 = vcvt.f32.s32.to.zero.pseudo %v47
    %v80 = vcvt.f32.s32.to.zero.pseudo %v48
    %v81 = vcvt.f32.s32.to.zero.pseudo %v49
    %v82 = vcvt.f32.s32.to.zero.pseudo %v50
    %v83 = vcvt.f32.s32.to.zero.pseudo %v51
    %v84 = vcvt.f32.s32.to.zero.pseudo %v52
    %v85 = vcvt.f32.s32.to.zero.pseudo %v53
    %v86 = vcvt.f32.s32.to.zero.pseudo %v54
    %v87 = vcvt.f32.s32.to.zero.pseudo %v55
    %v88 = vcvt.f32.s32.to.zero.pseudo %v56
    %v89 = vcvt.f32.s32.to.zero.pseudo %v57
    %v90 = vcvt.f32.s32.to.zero.pseudo %v58
    %v91 = vcvt.f32.s32.to.zero.pseudo %v59
    %v92 = vcvt.f32.s32.to.zero.pseudo %v60
    %v93 = vcvt.f32.s32.to.zero.pseudo %v61
    %v94 = vcvt.f32.s32.to.zero.pseudo %v62
    %v95 = vcvt.f32.s32.to.zero.pseudo %v63
    %v96 = vcvt.f32.s32.to.zero.pseudo %v64
    %v97 = vcvt.f32.s32.to.zero.pseudo %v65
    %v98 = vld [vmem:[%s1] sm:$0x1]
    %100 = vset.pattern.permute.xlu0 0
    %101 = vperm.xlu0 %100, %v34
    %v102 = vpop.permute.xlu0 %101
    %105 = vset.pattern.permute.xlu0 0
    %106 = vperm.xlu0 %105, %v35
    %v107 = vpop.permute.xlu0 %106
    %110 = vset.pattern.permute.xlu0 0
    %111 = vperm.xlu0 %110, %v36
    %v112 = vpop.permute.xlu0 %111
    %115 = vset.pattern.permute.xlu0 0
    %116 = vperm.xlu0 %115, %v37
    %v117 = vpop.permute.xlu0 %116
    %120 = vset.pattern.permute.xlu0 0
    %121 = vperm.xlu0 %120, %v38
    %v122 = vpop.permute.xlu0 %121
    %125 = vset.pattern.permute.xlu0 0
    %126 = vperm.xlu0 %125, %v39
    %v127 = vpop.permute.xlu0 %126
    %130 = vset.pattern.permute.xlu0 0
    %131 = vperm.xlu0 %130, %v40
    %v132 = vpop.permute.xlu0 %131
    %135 = vset.pattern.permute.xlu0 0
    %136 = vperm.xlu0 %135, %v41
    %v137 = vpop.permute.xlu0 %136
    %140 = vset.pattern.permute.xlu0 0
    %141 = vperm.xlu0 %140, %v42
    %v142 = vpop.permute.xlu0 %141
    %145 = vset.pattern.permute.xlu0 0
    %146 = vperm.xlu0 %145, %v43
    %v147 = vpop.permute.xlu0 %146
    %150 = vset.pattern.permute.xlu0 0
    %151 = vperm.xlu0 %150, %v44
    %v152 = vpop.permute.xlu0 %151
    %155 = vset.pattern.permute.xlu0 0
    %156 = vperm.xlu0 %155, %v45
    %v157 = vpop.permute.xlu0 %156
    %160 = vset.pattern.permute.xlu0 0
    %161 = vperm.xlu0 %160, %v46
    %v162 = vpop.permute.xlu0 %161
    %165 = vset.pattern.permute.xlu0 0
    %166 = vperm.xlu0 %165, %v47
    %v167 = vpop.permute.xlu0 %166
    %170 = vset.pattern.permute.xlu0 0
    %171 = vperm.xlu0 %170, %v48
    %v172 = vpop.permute.xlu0 %171
    %175 = vset.pattern.permute.xlu0 0
    %176 = vperm.xlu0 %175, %v49
    %v177 = vpop.permute.xlu0 %176
    %180 = vset.pattern.permute.xlu0 0
    %181 = vperm.xlu0 %180, %v50
    %v182 = vpop.permute.xlu0 %181
    %185 = vset.pattern.permute.xlu0 0
    %186 = vperm.xlu0 %185, %v51
    %v187 = vpop.permute.xlu0 %186
    %190 = vset.pattern.permute.xlu0 0
    %191 = vperm.xlu0 %190, %v52
    %v192 = vpop.permute.xlu0 %191
    %195 = vset.pattern.permute.xlu0 0
    %196 = vperm.xlu0 %195, %v53
    %v197 = vpop.permute.xlu0 %196
    %200 = vset.pattern.permute.xlu0 0
    %201 = vperm.xlu0 %200, %v54
    %v202 = vpop.permute.xlu0 %201
    %205 = vset.pattern.permute.xlu0 0
    %206 = vperm.xlu0 %205, %v55
    %v207 = vpop.permute.xlu0 %206
    %210 = vset.pattern.permute.xlu0 0
    %211 = vperm.xlu0 %210, %v56
    %v212 = vpop.permute.xlu0 %211
    %215 = vset.pattern.permute.xlu0 0
    %216 = vperm.xlu0 %215, %v57
    %v217 = vpop.permute.xlu0 %216
    %220 = vset.pattern.permute.xlu0 0
    %221 = vperm.xlu0 %220, %v58
    %v222 = vpop.permute.xlu0 %221
    %225 = vset.pattern.permute.xlu0 0
    %226 = vperm.xlu0 %225, %v59
    %v227 = vpop.permute.xlu0 %226
    %230 = vset.pattern.permute.xlu0 0
    %231 = vperm.xlu0 %230, %v60
    %v232 = vpop.permute.xlu0 %231
    %235 = vset.pattern.permute.xlu0 0
    %236 = vperm.xlu0 %235, %v61
    %v237 = vpop.permute.xlu0 %236
    %240 = vset.pattern.permute.xlu0 0
    %241 = vperm.xlu0 %240, %v62
    %v242 = vpop.permute.xlu0 %241
    %245 = vset.pattern.permute.xlu0 0
    %246 = vperm.xlu0 %245, %v63
    %v247 = vpop.permute.xlu0 %246
    %250 = vset.pattern.permute.xlu0 0
    %251 = vperm.xlu0 %250, %v64
    %v252 = vpop.permute.xlu0 %251
    %255 = vset.pattern.permute.xlu0 0
    %256 = vperm.xlu0 %255, %v65
    %v257 = vpop.permute.xlu0 %256
    %v260 = vperm.slane %v98, 0
    %v262 = vsub.f32 %v102, %v260
    %v263 = vsub.f32 %v107, %v260
    %v264 = vsub.f32 %v112, %v260
    %v265 = vsub.f32 %v117, %v260
    %v266 = vsub.f32 %v122, %v260
    %v267 = vsub.f32 %v127, %v260
    %v268 = vsub.f32 %v132, %v260
    %v269 = vsub.f32 %v137, %v260
    %v270 = vsub.f32 %v142, %v260
    %v271 = vsub.f32 %v147, %v260
    %v272 = vsub.f32 %v152, %v260
    %v273 = vsub.f32 %v157, %v260
    %v274 = vsub.f32 %v162, %v260
    %v275 = vsub.f32 %v167, %v260
    %v276 = vsub.f32 %v172, %v260
    %v277 = vsub.f32 %v177, %v260
    %v278 = vsub.f32 %v182, %v260
    %v279 = vsub.f32 %v187, %v260
    %v280 = vsub.f32 %v192, %v260
    %v281 = vsub.f32 %v197, %v260
    %v282 = vsub.f32 %v202, %v260
    %v283 = vsub.f32 %v207, %v260
    %v284 = vsub.f32 %v212, %v260
    %v285 = vsub.f32 %v217, %v260
    %v286 = vsub.f32 %v222, %v260
    %v287 = vsub.f32 %v227, %v260
    %v288 = vsub.f32 %v232, %v260
    %v289 = vsub.f32 %v237, %v260
    %v290 = vsub.f32 %v242, %v260
    %v291 = vsub.f32 %v247, %v260
    %v292 = vsub.f32 %v252, %v260
    %v293 = vsub.f32 %v257, %v260
    %v294 = vmul.f32 %v262, -10.0
    %v295 = vmul.f32 %v263, -10.0
    %v296 = vmul.f32 %v264, -10.0
    %v297 = vmul.f32 %v265, -10.0
    %v298 = vmul.f32 %v266, -10.0
    %v299 = vmul.f32 %v267, -10.0
    %v300 = vmul.f32 %v268, -10.0
    %v301 = vmul.f32 %v269, -10.0
    %v302 = vmul.f32 %v270, -10.0
    %v303 = vmul.f32 %v271, -10.0
    %v304 = vmul.f32 %v272, -10.0
    %v305 = vmul.f32 %v273, -10.0
    %v306 = vmul.f32 %v274, -10.0
    %v307 = vmul.f32 %v275, -10.0
    %v308 = vmul.f32 %v276, -10.0
    %v309 = vmul.f32 %v277, -10.0
    %v310 = vmul.f32 %v278, -10.0
    %v311 = vmul.f32 %v279, -10.0
    %v312 = vmul.f32 %v280, -10.0
    %v313 = vmul.f32 %v281, -10.0
    %v314 = vmul.f32 %v282, -10.0
    %v315 = vmul.f32 %v283, -10.0
    %v316 = vmul.f32 %v284, -10.0
    %v317 = vmul.f32 %v285, -10.0
    %v318 = vmul.f32 %v286, -10.0
    %v319 = vmul.f32 %v287, -10.0
    %v320 = vmul.f32 %v288, -10.0
    %v321 = vmul.f32 %v289, -10.0
    %v322 = vmul.f32 %v290, -10.0
    %v323 = vmul.f32 %v291, -10.0
    %v324 = vmul.f32 %v292, -10.0
    %v325 = vmul.f32 %v293, -10.0
    %v326 = vmul.f32 %v294, %v262
    %v327 = vmul.f32 %v295, %v263
    %v328 = vmul.f32 %v296, %v264
    %v329 = vmul.f32 %v297, %v265
    %v330 = vmul.f32 %v298, %v266
    %v331 = vmul.f32 %v299, %v267
    %v332 = vmul.f32 %v300, %v268
    %v333 = vmul.f32 %v301, %v269
    %v334 = vmul.f32 %v302, %v270
    %v335 = vmul.f32 %v303, %v271
    %v336 = vmul.f32 %v304, %v272
    %v337 = vmul.f32 %v305, %v273
    %v338 = vmul.f32 %v306, %v274
    %v339 = vmul.f32 %v307, %v275
    %v340 = vmul.f32 %v308, %v276
    %v341 = vmul.f32 %v309, %v277
    %v342 = vmul.f32 %v310, %v278
    %v343 = vmul.f32 %v311, %v279
    %v344 = vmul.f32 %v312, %v280
    %v345 = vmul.f32 %v313, %v281
    %v346 = vmul.f32 %v314, %v282
    %v347 = vmul.f32 %v315, %v283
    %v348 = vmul.f32 %v316, %v284
    %v349 = vmul.f32 %v317, %v285
    %v350 = vmul.f32 %v318, %v286
    %v351 = vmul.f32 %v319, %v287
    %v352 = vmul.f32 %v320, %v288
    %v353 = vmul.f32 %v321, %v289
    %v354 = vmul.f32 %v322, %v290
    %v355 = vmul.f32 %v323, %v291
    %v356 = vmul.f32 %v324, %v292
    %v357 = vmul.f32 %v325, %v293
    %v358 = vmul.f32 %v326, 1.442695
    %v359 = vpow.pop %v358
    %v360 = vmul.f32 %v327, 1.442695
    %v361 = vpow.pop %v360
    %v362 = vmul.f32 %v328, 1.442695
    %v363 = vpow.pop %v362
    %v364 = vmul.f32 %v329, 1.442695
    %v365 = vpow.pop %v364
    %v366 = vmul.f32 %v330, 1.442695
    %v367 = vpow.pop %v366
    %v368 = vmul.f32 %v331, 1.442695
    %v369 = vpow.pop %v368
    %v370 = vmul.f32 %v332, 1.442695
    %v371 = vpow.pop %v370
    %v372 = vmul.f32 %v333, 1.442695
    %v373 = vpow.pop %v372
    %v374 = vmul.f32 %v334, 1.442695
    %v375 = vpow.pop %v374
    %v376 = vmul.f32 %v335, 1.442695
    %v377 = vpow.pop %v376
    %v378 = vmul.f32 %v336, 1.442695
    %v379 = vpow.pop %v378
    %v380 = vmul.f32 %v337, 1.442695
    %v381 = vpow.pop %v380
    %v382 = vmul.f32 %v338, 1.442695
    %v383 = vpow.pop %v382
    %v384 = vmul.f32 %v339, 1.442695
    %v385 = vpow.pop %v384
    %v386 = vmul.f32 %v340, 1.442695
    %v387 = vpow.pop %v386
    %v388 = vmul.f32 %v341, 1.442695
    %v389 = vpow.pop %v388
    %v390 = vmul.f32 %v342, 1.442695
    %v391 = vpow.pop %v390
    %v392 = vmul.f32 %v343, 1.442695
    %v393 = vpow.pop %v392
    %v394 = vmul.f32 %v344, 1.442695
    %v395 = vpow.pop %v394
    %v396 = vmul.f32 %v345, 1.442695
    %v397 = vpow.pop %v396
    %v398 = vmul.f32 %v346, 1.442695
    %v399 = vpow.pop %v398
    %v400 = vmul.f32 %v347, 1.442695
    %v401 = vpow.pop %v400
    %v402 = vmul.f32 %v348, 1.442695
    %v403 = vpow.pop %v402
    %v404 = vmul.f32 %v349, 1.442695
    %v405 = vpow.pop %v404
    %v406 = vmul.f32 %v350, 1.442695
    %v407 = vpow.pop %v406
    %v408 = vmul.f32 %v351, 1.442695
    %v409 = vpow.pop %v408
    %v410 = vmul.f32 %v352, 1.442695
    %v411 = vpow.pop %v410
    %v412 = vmul.f32 %v353, 1.442695
    %v413 = vpow.pop %v412
    %v414 = vmul.f32 %v354, 1.442695
    %v415 = vpow.pop %v414
    %v416 = vmul.f32 %v355, 1.442695
    %v417 = vpow.pop %v416
    %v418 = vmul.f32 %v356, 1.442695
    %v419 = vpow.pop %v418
    %v420 = vmul.f32 %v357, 1.442695
    %v421 = vpow.pop %v420
    %v422 = vpack.c.bf16 %v361, %v359
    %v423 = vpack.c.bf16 %v365, %v363
    %v424 = vpack.c.bf16 %v369, %v367
    %v425 = vpack.c.bf16 %v373, %v371
    %v426 = vpack.c.bf16 %v377, %v375
    %v427 = vpack.c.bf16 %v381, %v379
    %v428 = vpack.c.bf16 %v385, %v383
    %v429 = vpack.c.bf16 %v389, %v387
    %v430 = vpack.c.bf16 %v393, %v391
    %v431 = vpack.c.bf16 %v397, %v395
    %v432 = vpack.c.bf16 %v401, %v399
    %v433 = vpack.c.bf16 %v405, %v403
    %v434 = vpack.c.bf16 %v409, %v407
    %v435 = vpack.c.bf16 %v413, %v411
    %v436 = vpack.c.bf16 %v417, %v415
    %v437 = vpack.c.bf16 %v421, %v419
    %v438 = vld [vmem:[%s2] sm:$0xf]
    %v439 = vld [vmem:[%s2 + $0x4] sm:$0xf]
    %v440 = vld [vmem:[%s2 + $0x8] sm:$0xf]
    %v441 = vld [vmem:[%s2 + $0xc] sm:$0xf]
    %v442 = vld [vmem:[%s2 + $0x10] sm:$0xf]
    %v443 = vld [vmem:[%s2 + $0x14] sm:$0xf]
    %v444 = vld [vmem:[%s2 + $0x18] sm:$0xf]
    %v445 = vld [vmem:[%s2 + $0x1c] sm:$0xf]
    %v446 = vld [vmem:[%s2 + $0x20] sm:$0xf]
    %v447 = vld [vmem:[%s2 + $0x24] sm:$0xf]
    %v448 = vld [vmem:[%s2 + $0x28] sm:$0xf]
    %v449 = vld [vmem:[%s2 + $0x2c] sm:$0xf]
    %v450 = vld [vmem:[%s2 + $0x30] sm:$0xf]
    %v451 = vld [vmem:[%s2 + $0x34] sm:$0xf]
    %v452 = vld [vmem:[%s2 + $0x38] sm:$0xf]
    %v453 = vld [vmem:[%s2 + $0x3c] sm:$0xf]
    %v470 = vunpack.c.l.b16 %v438
    %v471 = vunpack.c.l.b16 %v439
    %v472 = vunpack.c.l.b16 %v440
    %v473 = vunpack.c.l.b16 %v441
    %v474 = vunpack.c.l.b16 %v442
    %v475 = vunpack.c.l.b16 %v443
    %v476 = vunpack.c.l.b16 %v444
    %v477 = vunpack.c.l.b16 %v445
    %v478 = vunpack.c.l.b16 %v446
    %v479 = vunpack.c.l.b16 %v447
    %v480 = vunpack.c.l.b16 %v448
    %v481 = vunpack.c.l.b16 %v449
    %v482 = vunpack.c.l.b16 %v450
    %v483 = vunpack.c.l.b16 %v451
    %v484 = vunpack.c.l.b16 %v452
    %v485 = vunpack.c.l.b16 %v453
    %v486 = vpack.c.b16 %v471, %v470
    %v487 = vpack.c.b16 %v473, %v472
    %v488 = vpack.c.b16 %v475, %v474
    %v489 = vpack.c.b16 %v477, %v476
    %v490 = vpack.c.b16 %v479, %v478
    %v491 = vpack.c.b16 %v481, %v480
    %v492 = vpack.c.b16 %v483, %v482
    %v493 = vpack.c.b16 %v485, %v484
    %502 = vmatpush.bf16.msra.mxu0 %v493
    %503 = vmatpush.bf16.msra.mxu0 %v492
    %504 = vmatpush.bf16.msra.mxu0 %v491
    %505 = vmatpush.bf16.msra.mxu0 %v490
    %506 = vmatpush.bf16.msra.mxu0 %v489
    %507 = vmatpush.bf16.msra.mxu0 %v488
    %508 = vmatpush.bf16.msra.mxu0 %v487
    %509 = vmatpush.bf16.msra.mxu0 %v486
    %510 = vmatmul.bf16.gmra.mxu0 %v422
    %v511 = vpop.f32.mrf.mxu0
    %v512 = vadd.f32 0.0, %v511
    %v513 = vpop.f32.mrf.mxu0
    %v514 = vadd.f32 0.0, %v513
    %515 = vmatmul.bf16.gmra.mxu0 %v423
    %v516 = vpop.f32.mrf.mxu0
    %v517 = vadd.f32 0.0, %v516
    %v518 = vpop.f32.mrf.mxu0
    %v519 = vadd.f32 0.0, %v518
    %520 = vmatmul.bf16.gmra.mxu0 %v424
    %v521 = vpop.f32.mrf.mxu0
    %v522 = vadd.f32 0.0, %v521
    %v523 = vpop.f32.mrf.mxu0
    %v524 = vadd.f32 0.0, %v523
    %525 = vmatmul.bf16.gmra.mxu0 %v425
    %v526 = vpop.f32.mrf.mxu0
    %v527 = vadd.f32 0.0, %v526
    %v528 = vpop.f32.mrf.mxu0
    %v529 = vadd.f32 0.0, %v528
    %530 = vmatmul.bf16.gmra.mxu0 %v426
    %v531 = vpop.f32.mrf.mxu0
    %v532 = vadd.f32 0.0, %v531
    %v533 = vpop.f32.mrf.mxu0
    %v534 = vadd.f32 0.0, %v533
    %535 = vmatmul.bf16.gmra.mxu0 %v427
    %v536 = vpop.f32.mrf.mxu0
    %v537 = vadd.f32 0.0, %v536
    %v538 = vpop.f32.mrf.mxu0
    %v539 = vadd.f32 0.0, %v538
    %540 = vmatmul.bf16.gmra.mxu0 %v428
    %v541 = vpop.f32.mrf.mxu0
    %v542 = vadd.f32 0.0, %v541
    %v543 = vpop.f32.mrf.mxu0
    %v544 = vadd.f32 0.0, %v543
    %545 = vmatmul.bf16.gmra.mxu0 %v429
    %v546 = vpop.f32.mrf.mxu0
    %v547 = vadd.f32 0.0, %v546
    %v548 = vpop.f32.mrf.mxu0
    %v549 = vadd.f32 0.0, %v548
    %550 = vmatmul.bf16.gmra.mxu0 %v430
    %v551 = vpop.f32.mrf.mxu0
    %v552 = vadd.f32 0.0, %v551
    %v553 = vpop.f32.mrf.mxu0
    %v554 = vadd.f32 0.0, %v553
    %555 = vmatmul.bf16.gmra.mxu0 %v431
    %v556 = vpop.f32.mrf.mxu0
    %v557 = vadd.f32 0.0, %v556
    %v558 = vpop.f32.mrf.mxu0
    %v559 = vadd.f32 0.0, %v558
    %560 = vmatmul.bf16.gmra.mxu0 %v432
    %v561 = vpop.f32.mrf.mxu0
    %v562 = vadd.f32 0.0, %v561
    %v563 = vpop.f32.mrf.mxu0
    %v564 = vadd.f32 0.0, %v563
    %565 = vmatmul.bf16.gmra.mxu0 %v433
    %v566 = vpop.f32.mrf.mxu0
    %v567 = vadd.f32 0.0, %v566
    %v568 = vpop.f32.mrf.mxu0
    %v569 = vadd.f32 0.0, %v568
    %570 = vmatmul.bf16.gmra.mxu0 %v434
    %v571 = vpop.f32.mrf.mxu0
    %v572 = vadd.f32 0.0, %v571
    %v573 = vpop.f32.mrf.mxu0
    %v574 = vadd.f32 0.0, %v573
    %575 = vmatmul.bf16.gmra.mxu0 %v435
    %v576 = vpop.f32.mrf.mxu0
    %v577 = vadd.f32 0.0, %v576
    %v578 = vpop.f32.mrf.mxu0
    %v579 = vadd.f32 0.0, %v578
    %580 = vmatmul.bf16.gmra.mxu0 %v436
    %v581 = vpop.f32.mrf.mxu0
    %v582 = vadd.f32 0.0, %v581
    %v583 = vpop.f32.mrf.mxu0
    %v584 = vadd.f32 0.0, %v583
    %585 = vmatmul.bf16.gmra.mxu0 %v437
    %v586 = vpop.f32.mrf.mxu0
    %v587 = vadd.f32 0.0, %v586
    %v588 = vpop.f32.mrf.mxu0
    %v589 = vadd.f32 0.0, %v588
    %590 = vdwg.mxu0
    %v591 = vmul.f32 %v512, %v512
    %v592 = vmul.f32 %v514, %v514
    %v593 = vmul.f32 %v517, %v517
    %v594 = vmul.f32 %v519, %v519
    %v595 = vmul.f32 %v522, %v522
    %v596 = vmul.f32 %v524, %v524
    %v597 = vmul.f32 %v527, %v527
    %v598 = vmul.f32 %v529, %v529
    %v599 = vmul.f32 %v532, %v532
    %v600 = vmul.f32 %v534, %v534
    %v601 = vmul.f32 %v537, %v537
    %v602 = vmul.f32 %v539, %v539
    %v603 = vmul.f32 %v542, %v542
    %v604 = vmul.f32 %v544, %v544
    %v605 = vmul.f32 %v547, %v547
    %v606 = vmul.f32 %v549, %v549
    %v607 = vmul.f32 %v552, %v552
    %v608 = vmul.f32 %v554, %v554
    %v609 = vmul.f32 %v557, %v557
    %v610 = vmul.f32 %v559, %v559
    %v611 = vmul.f32 %v562, %v562
    %v612 = vmul.f32 %v564, %v564
    %v613 = vmul.f32 %v567, %v567
    %v614 = vmul.f32 %v569, %v569
    %v615 = vmul.f32 %v572, %v572
    %v616 = vmul.f32 %v574, %v574
    %v617 = vmul.f32 %v577, %v577
    %v618 = vmul.f32 %v579, %v579
    %v619 = vmul.f32 %v582, %v582
    %v620 = vmul.f32 %v584, %v584
    %v621 = vmul.f32 %v587, %v587
    %v622 = vmul.f32 %v589, %v589
    %623 = vadd.xlane.f32.xlu0 %v591
    %v624 = vpop.xlane.xlu0 %623
    %625 = vadd.xlane.f32.xlu0 %v592
    %v626 = vpop.xlane.xlu0 %625
    %627 = vadd.xlane.f32.xlu0 %v593
    %v628 = vpop.xlane.xlu0 %627
    %629 = vadd.xlane.f32.xlu0 %v594
    %v630 = vpop.xlane.xlu0 %629
    %631 = vadd.xlane.f32.xlu0 %v595
    %v632 = vpop.xlane.xlu0 %631
    %633 = vadd.xlane.f32.xlu0 %v596
    %v634 = vpop.xlane.xlu0 %633
    %635 = vadd.xlane.f32.xlu0 %v597
    %v636 = vpop.xlane.xlu0 %635
    %637 = vadd.xlane.f32.xlu0 %v598
    %v638 = vpop.xlane.xlu0 %637
    %639 = vadd.xlane.f32.xlu0 %v599
    %v640 = vpop.xlane.xlu0 %639
    %641 = vadd.xlane.f32.xlu0 %v600
    %v642 = vpop.xlane.xlu0 %641
    %643 = vadd.xlane.f32.xlu0 %v601
    %v644 = vpop.xlane.xlu0 %643
    %645 = vadd.xlane.f32.xlu0 %v602
    %v646 = vpop.xlane.xlu0 %645
    %647 = vadd.xlane.f32.xlu0 %v603
    %v648 = vpop.xlane.xlu0 %647
    %649 = vadd.xlane.f32.xlu0 %v604
    %v650 = vpop.xlane.xlu0 %649
    %651 = vadd.xlane.f32.xlu0 %v605
    %v652 = vpop.xlane.xlu0 %651
    %653 = vadd.xlane.f32.xlu0 %v606
    %v654 = vpop.xlane.xlu0 %653
    %655 = vadd.xlane.f32.xlu0 %v607
    %v656 = vpop.xlane.xlu0 %655
    %657 = vadd.xlane.f32.xlu0 %v608
    %v658 = vpop.xlane.xlu0 %657
    %659 = vadd.xlane.f32.xlu0 %v609
    %v660 = vpop.xlane.xlu0 %659
    %661 = vadd.xlane.f32.xlu0 %v610
    %v662 = vpop.xlane.xlu0 %661
    %663 = vadd.xlane.f32.xlu0 %v611
    %v664 = vpop.xlane.xlu0 %663
    %665 = vadd.xlane.f32.xlu0 %v612
    %v666 = vpop.xlane.xlu0 %665
    %667 = vadd.xlane.f32.xlu0 %v613
    %v668 = vpop.xlane.xlu0 %667
    %669 = vadd.xlane.f32.xlu0 %v614
    %v670 = vpop.xlane.xlu0 %669
    %671 = vadd.xlane.f32.xlu0 %v615
    %v672 = vpop.xlane.xlu0 %671
    %673 = vadd.xlane.f32.xlu0 %v616
    %v674 = vpop.xlane.xlu0 %673
    %675 = vadd.xlane.f32.xlu0 %v617
    %v676 = vpop.xlane.xlu0 %675
    %677 = vadd.xlane.f32.xlu0 %v618
    %v678 = vpop.xlane.xlu0 %677
    %679 = vadd.xlane.f32.xlu0 %v619
    %v680 = vpop.xlane.xlu0 %679
    %681 = vadd.xlane.f32.xlu0 %v620
    %v682 = vpop.xlane.xlu0 %681
    %683 = vadd.xlane.f32.xlu0 %v621
    %v684 = vpop.xlane.xlu0 %683
    %685 = vadd.xlane.f32.xlu0 %v622
    %v686 = vpop.xlane.xlu0 %685
    %v687 = vmul.f32 %v624, 0.0078125
    %v688 = vmul.f32 %v626, 0.0078125
    %v689 = vmul.f32 %v628, 0.0078125
    %v690 = vmul.f32 %v630, 0.0078125
    %v691 = vmul.f32 %v632, 0.0078125
    %v692 = vmul.f32 %v634, 0.0078125
    %v693 = vmul.f32 %v636, 0.0078125
    %v694 = vmul.f32 %v638, 0.0078125
    %v695 = vmul.f32 %v640, 0.0078125
    %v696 = vmul.f32 %v642, 0.0078125
    %v697 = vmul.f32 %v644, 0.0078125
    %v698 = vmul.f32 %v646, 0.0078125
    %v699 = vmul.f32 %v648, 0.0078125
    %v700 = vmul.f32 %v650, 0.0078125
    %v701 = vmul.f32 %v652, 0.0078125
    %v702 = vmul.f32 %v654, 0.0078125
    %v703 = vmul.f32 %v656, 0.0078125
    %v704 = vmul.f32 %v658, 0.0078125
    %v705 = vmul.f32 %v660, 0.0078125
    %v706 = vmul.f32 %v662, 0.0078125
    %v707 = vmul.f32 %v664, 0.0078125
    %v708 = vmul.f32 %v666, 0.0078125
    %v709 = vmul.f32 %v668, 0.0078125
    %v710 = vmul.f32 %v670, 0.0078125
    %v711 = vmul.f32 %v672, 0.0078125
    %v712 = vmul.f32 %v674, 0.0078125
    %v713 = vmul.f32 %v676, 0.0078125
    %v714 = vmul.f32 %v678, 0.0078125
    %v715 = vmul.f32 %v680, 0.0078125
    %v716 = vmul.f32 %v682, 0.0078125
    %v717 = vmul.f32 %v684, 0.0078125
    %v718 = vmul.f32 %v686, 0.0078125
    %v719 = vadd.f32 %v687, 1e-08
    %v720 = vadd.f32 %v688, 1e-08
    %v721 = vadd.f32 %v689, 1e-08
    %v722 = vadd.f32 %v690, 1e-08
    %v723 = vadd.f32 %v691, 1e-08
    %v724 = vadd.f32 %v692, 1e-08
    %v725 = vadd.f32 %v693, 1e-08
    %v726 = vadd.f32 %v694, 1e-08
    %v727 = vadd.f32 %v695, 1e-08
    %v728 = vadd.f32 %v696, 1e-08
    %v729 = vadd.f32 %v697, 1e-08
    %v730 = vadd.f32 %v698, 1e-08
    %v731 = vadd.f32 %v699, 1e-08
    %v732 = vadd.f32 %v700, 1e-08
    %v733 = vadd.f32 %v701, 1e-08
    %v734 = vadd.f32 %v702, 1e-08
    %v735 = vadd.f32 %v703, 1e-08
    %v736 = vadd.f32 %v704, 1e-08
    %v737 = vadd.f32 %v705, 1e-08
    %v738 = vadd.f32 %v706, 1e-08
    %v739 = vadd.f32 %v707, 1e-08
    %v740 = vadd.f32 %v708, 1e-08
    %v741 = vadd.f32 %v709, 1e-08
    %v742 = vadd.f32 %v710, 1e-08
    %v743 = vadd.f32 %v711, 1e-08
    %v744 = vadd.f32 %v712, 1e-08
    %v745 = vadd.f32 %v713, 1e-08
    %v746 = vadd.f32 %v714, 1e-08
    %v747 = vadd.f32 %v715, 1e-08
    %v748 = vadd.f32 %v716, 1e-08
    %v749 = vadd.f32 %v717, 1e-08
    %v750 = vadd.f32 %v718, 1e-08
    %v751 = vrsqrt.pop %v719
    %v752 = vmul.f32 %v751, %v719
    %v753 = vmul.f32 %v752, %v751
    %v754 = vmul.f32 0.5, %v753
    %v755 = vsub.f32 1.5, %v754
    %v756 = vmul.f32 %v751, %v755
    %vm757 = vweird.f32 %v719
    %vm758 = vweird.f32 %v751
    %vm759 = vmor %vm757, %vm758
    %v760 = vsel %vm759, %v751, %v756
    %v761 = vrsqrt.pop %v720
    %v762 = vmul.f32 %v761, %v720
    %v763 = vmul.f32 %v762, %v761
    %v764 = vmul.f32 0.5, %v763
    %v765 = vsub.f32 1.5, %v764
    %v766 = vmul.f32 %v761, %v765
    %vm767 = vweird.f32 %v720
    %vm768 = vweird.f32 %v761
    %vm769 = vmor %vm767, %vm768
    %v770 = vsel %vm769, %v761, %v766
    %v771 = vrsqrt.pop %v721
    %v772 = vmul.f32 %v771, %v721
    %v773 = vmul.f32 %v772, %v771
    %v774 = vmul.f32 0.5, %v773
    %v775 = vsub.f32 1.5, %v774
    %v776 = vmul.f32 %v771, %v775
    %vm777 = vweird.f32 %v721
    %vm778 = vweird.f32 %v771
    %vm779 = vmor %vm777, %vm778
    %v780 = vsel %vm779, %v771, %v776
    %v781 = vrsqrt.pop %v722
    %v782 = vmul.f32 %v781, %v722
    %v783 = vmul.f32 %v782, %v781
    %v784 = vmul.f32 0.5, %v783
    %v785 = vsub.f32 1.5, %v784
    %v786 = vmul.f32 %v781, %v785
    %vm787 = vweird.f32 %v722
    %vm788 = vweird.f32 %v781
    %vm789 = vmor %vm787, %vm788
    %v790 = vsel %vm789, %v781, %v786
    %v791 = vrsqrt.pop %v723
    %v792 = vmul.f32 %v791, %v723
    %v793 = vmul.f32 %v792, %v791
    %v794 = vmul.f32 0.5, %v793
    %v795 = vsub.f32 1.5, %v794
    %v796 = vmul.f32 %v791, %v795
    %vm797 = vweird.f32 %v723
    %vm798 = vweird.f32 %v791
    %vm799 = vmor %vm797, %vm798
    %v800 = vsel %vm799, %v791, %v796
    %v801 = vrsqrt.pop %v724
    %v802 = vmul.f32 %v801, %v724
    %v803 = vmul.f32 %v802, %v801
    %v804 = vmul.f32 0.5, %v803
    %v805 = vsub.f32 1.5, %v804
    %v806 = vmul.f32 %v801, %v805
    %vm807 = vweird.f32 %v724
    %vm808 = vweird.f32 %v801
    %vm809 = vmor %vm807, %vm808
    %v810 = vsel %vm809, %v801, %v806
    %v811 = vrsqrt.pop %v725
    %v812 = vmul.f32 %v811, %v725
    %v813 = vmul.f32 %v812, %v811
    %v814 = vmul.f32 0.5, %v813
    %v815 = vsub.f32 1.5, %v814
    %v816 = vmul.f32 %v811, %v815
    %vm817 = vweird.f32 %v725
    %vm818 = vweird.f32 %v811
    %vm819 = vmor %vm817, %vm818
    %v820 = vsel %vm819, %v811, %v816
    %v821 = vrsqrt.pop %v726
    %v822 = vmul.f32 %v821, %v726
    %v823 = vmul.f32 %v822, %v821
    %v824 = vmul.f32 0.5, %v823
    %v825 = vsub.f32 1.5, %v824
    %v826 = vmul.f32 %v821, %v825
    %vm827 = vweird.f32 %v726
    %vm828 = vweird.f32 %v821
    %vm829 = vmor %vm827, %vm828
    %v830 = vsel %vm829, %v821, %v826
    %v831 = vrsqrt.pop %v727
    %v832 = vmul.f32 %v831, %v727
    %v833 = vmul.f32 %v832, %v831
    %v834 = vmul.f32 0.5, %v833
    %v835 = vsub.f32 1.5, %v834
    %v836 = vmul.f32 %v831, %v835
    %vm837 = vweird.f32 %v727
    %vm838 = vweird.f32 %v831
    %vm839 = vmor %vm837, %vm838
    %v840 = vsel %vm839, %v831, %v836
    %v841 = vrsqrt.pop %v728
    %v842 = vmul.f32 %v841, %v728
    %v843 = vmul.f32 %v842, %v841
    %v844 = vmul.f32 0.5, %v843
    %v845 = vsub.f32 1.5, %v844
    %v846 = vmul.f32 %v841, %v845
    %vm847 = vweird.f32 %v728
    %vm848 = vweird.f32 %v841
    %vm849 = vmor %vm847, %vm848
    %v850 = vsel %vm849, %v841, %v846
    %v851 = vrsqrt.pop %v729
    %v852 = vmul.f32 %v851, %v729
    %v853 = vmul.f32 %v852, %v851
    %v854 = vmul.f32 0.5, %v853
    %v855 = vsub.f32 1.5, %v854
    %v856 = vmul.f32 %v851, %v855
    %vm857 = vweird.f32 %v729
    %vm858 = vweird.f32 %v851
    %vm859 = vmor %vm857, %vm858
    %v860 = vsel %vm859, %v851, %v856
    %v861 = vrsqrt.pop %v730
    %v862 = vmul.f32 %v861, %v730
    %v863 = vmul.f32 %v862, %v861
    %v864 = vmul.f32 0.5, %v863
    %v865 = vsub.f32 1.5, %v864
    %v866 = vmul.f32 %v861, %v865
    %vm867 = vweird.f32 %v730
    %vm868 = vweird.f32 %v861
    %vm869 = vmor %vm867, %vm868
    %v870 = vsel %vm869, %v861, %v866
    %v871 = vrsqrt.pop %v731
    %v872 = vmul.f32 %v871, %v731
    %v873 = vmul.f32 %v872, %v871
    %v874 = vmul.f32 0.5, %v873
    %v875 = vsub.f32 1.5, %v874
    %v876 = vmul.f32 %v871, %v875
    %vm877 = vweird.f32 %v731
    %vm878 = vweird.f32 %v871
    %vm879 = vmor %vm877, %vm878
    %v880 = vsel %vm879, %v871, %v876
    %v881 = vrsqrt.pop %v732
    %v882 = vmul.f32 %v881, %v732
    %v883 = vmul.f32 %v882, %v881
    %v884 = vmul.f32 0.5, %v883
    %v885 = vsub.f32 1.5, %v884
    %v886 = vmul.f32 %v881, %v885
    %vm887 = vweird.f32 %v732
    %vm888 = vweird.f32 %v881
    %vm889 = vmor %vm887, %vm888
    %v890 = vsel %vm889, %v881, %v886
    %v891 = vrsqrt.pop %v733
    %v892 = vmul.f32 %v891, %v733
    %v893 = vmul.f32 %v892, %v891
    %v894 = vmul.f32 0.5, %v893
    %v895 = vsub.f32 1.5, %v894
    %v896 = vmul.f32 %v891, %v895
    %vm897 = vweird.f32 %v733
    %vm898 = vweird.f32 %v891
    %vm899 = vmor %vm897, %vm898
    %v900 = vsel %vm899, %v891, %v896
    %v901 = vrsqrt.pop %v734
    %v902 = vmul.f32 %v901, %v734
    %v903 = vmul.f32 %v902, %v901
    %v904 = vmul.f32 0.5, %v903
    %v905 = vsub.f32 1.5, %v904
    %v906 = vmul.f32 %v901, %v905
    %vm907 = vweird.f32 %v734
    %vm908 = vweird.f32 %v901
    %vm909 = vmor %vm907, %vm908
    %v910 = vsel %vm909, %v901, %v906
    %v911 = vrsqrt.pop %v735
    %v912 = vmul.f32 %v911, %v735
    %v913 = vmul.f32 %v912, %v911
    %v914 = vmul.f32 0.5, %v913
    %v915 = vsub.f32 1.5, %v914
    %v916 = vmul.f32 %v911, %v915
    %vm917 = vweird.f32 %v735
    %vm918 = vweird.f32 %v911
    %vm919 = vmor %vm917, %vm918
    %v920 = vsel %vm919, %v911, %v916
    %v921 = vrsqrt.pop %v736
    %v922 = vmul.f32 %v921, %v736
    %v923 = vmul.f32 %v922, %v921
    %v924 = vmul.f32 0.5, %v923
    %v925 = vsub.f32 1.5, %v924
    %v926 = vmul.f32 %v921, %v925
    %vm927 = vweird.f32 %v736
    %vm928 = vweird.f32 %v921
    %vm929 = vmor %vm927, %vm928
    %v930 = vsel %vm929, %v921, %v926
    %v931 = vrsqrt.pop %v737
    %v932 = vmul.f32 %v931, %v737
    %v933 = vmul.f32 %v932, %v931
    %v934 = vmul.f32 0.5, %v933
    %v935 = vsub.f32 1.5, %v934
    %v936 = vmul.f32 %v931, %v935
    %vm937 = vweird.f32 %v737
    %vm938 = vweird.f32 %v931
    %vm939 = vmor %vm937, %vm938
    %v940 = vsel %vm939, %v931, %v936
    %v941 = vrsqrt.pop %v738
    %v942 = vmul.f32 %v941, %v738
    %v943 = vmul.f32 %v942, %v941
    %v944 = vmul.f32 0.5, %v943
    %v945 = vsub.f32 1.5, %v944
    %v946 = vmul.f32 %v941, %v945
    %vm947 = vweird.f32 %v738
    %vm948 = vweird.f32 %v941
    %vm949 = vmor %vm947, %vm948
    %v950 = vsel %vm949, %v941, %v946
    %v951 = vrsqrt.pop %v739
    %v952 = vmul.f32 %v951, %v739
    %v953 = vmul.f32 %v952, %v951
    %v954 = vmul.f32 0.5, %v953
    %v955 = vsub.f32 1.5, %v954
    %v956 = vmul.f32 %v951, %v955
    %vm957 = vweird.f32 %v739
    %vm958 = vweird.f32 %v951
    %vm959 = vmor %vm957, %vm958
    %v960 = vsel %vm959, %v951, %v956
    %v961 = vrsqrt.pop %v740
    %v962 = vmul.f32 %v961, %v740
    %v963 = vmul.f32 %v962, %v961
    %v964 = vmul.f32 0.5, %v963
    %v965 = vsub.f32 1.5, %v964
    %v966 = vmul.f32 %v961, %v965
    %vm967 = vweird.f32 %v740
    %vm968 = vweird.f32 %v961
    %vm969 = vmor %vm967, %vm968
    %v970 = vsel %vm969, %v961, %v966
    %v971 = vrsqrt.pop %v741
    %v972 = vmul.f32 %v971, %v741
    %v973 = vmul.f32 %v972, %v971
    %v974 = vmul.f32 0.5, %v973
    %v975 = vsub.f32 1.5, %v974
    %v976 = vmul.f32 %v971, %v975
    %vm977 = vweird.f32 %v741
    %vm978 = vweird.f32 %v971
    %vm979 = vmor %vm977, %vm978
    %v980 = vsel %vm979, %v971, %v976
    %v981 = vrsqrt.pop %v742
    %v982 = vmul.f32 %v981, %v742
    %v983 = vmul.f32 %v982, %v981
    %v984 = vmul.f32 0.5, %v983
    %v985 = vsub.f32 1.5, %v984
    %v986 = vmul.f32 %v981, %v985
    %vm987 = vweird.f32 %v742
    %vm988 = vweird.f32 %v981
    %vm989 = vmor %vm987, %vm988
    %v990 = vsel %vm989, %v981, %v986
    %v991 = vrsqrt.pop %v743
    %v992 = vmul.f32 %v991, %v743
    %v993 = vmul.f32 %v992, %v991
    %v994 = vmul.f32 0.5, %v993
    %v995 = vsub.f32 1.5, %v994
    %v996 = vmul.f32 %v991, %v995
    %vm997 = vweird.f32 %v743
    %vm998 = vweird.f32 %v991
    %vm999 = vmor %vm997, %vm998
    %v1000 = vsel %vm999, %v991, %v996
    %v1001 = vrsqrt.pop %v744
    %v1002 = vmul.f32 %v1001, %v744
    %v1003 = vmul.f32 %v1002, %v1001
    %v1004 = vmul.f32 0.5, %v1003
    %v1005 = vsub.f32 1.5, %v1004
    %v1006 = vmul.f32 %v1001, %v1005
    %vm1007 = vweird.f32 %v744
    %vm1008 = vweird.f32 %v1001
    %vm1009 = vmor %vm1007, %vm1008
    %v1010 = vsel %vm1009, %v1001, %v1006
    %v1011 = vrsqrt.pop %v745
    %v1012 = vmul.f32 %v1011, %v745
    %v1013 = vmul.f32 %v1012, %v1011
    %v1014 = vmul.f32 0.5, %v1013
    %v1015 = vsub.f32 1.5, %v1014
    %v1016 = vmul.f32 %v1011, %v1015
    %vm1017 = vweird.f32 %v745
    %vm1018 = vweird.f32 %v1011
    %vm1019 = vmor %vm1017, %vm1018
    %v1020 = vsel %vm1019, %v1011, %v1016
    %v1021 = vrsqrt.pop %v746
    %v1022 = vmul.f32 %v1021, %v746
    %v1023 = vmul.f32 %v1022, %v1021
    %v1024 = vmul.f32 0.5, %v1023
    %v1025 = vsub.f32 1.5, %v1024
    %v1026 = vmul.f32 %v1021, %v1025
    %vm1027 = vweird.f32 %v746
    %vm1028 = vweird.f32 %v1021
    %vm1029 = vmor %vm1027, %vm1028
    %v1030 = vsel %vm1029, %v1021, %v1026
    %v1031 = vrsqrt.pop %v747
    %v1032 = vmul.f32 %v1031, %v747
    %v1033 = vmul.f32 %v1032, %v1031
    %v1034 = vmul.f32 0.5, %v1033
    %v1035 = vsub.f32 1.5, %v1034
    %v1036 = vmul.f32 %v1031, %v1035
    %vm1037 = vweird.f32 %v747
    %vm1038 = vweird.f32 %v1031
    %vm1039 = vmor %vm1037, %vm1038
    %v1040 = vsel %vm1039, %v1031, %v1036
    %v1041 = vrsqrt.pop %v748
    %v1042 = vmul.f32 %v1041, %v748
    %v1043 = vmul.f32 %v1042, %v1041
    %v1044 = vmul.f32 0.5, %v1043
    %v1045 = vsub.f32 1.5, %v1044
    %v1046 = vmul.f32 %v1041, %v1045
    %vm1047 = vweird.f32 %v748
    %vm1048 = vweird.f32 %v1041
    %vm1049 = vmor %vm1047, %vm1048
    %v1050 = vsel %vm1049, %v1041, %v1046
    %v1051 = vrsqrt.pop %v749
    %v1052 = vmul.f32 %v1051, %v749
    %v1053 = vmul.f32 %v1052, %v1051
    %v1054 = vmul.f32 0.5, %v1053
    %v1055 = vsub.f32 1.5, %v1054
    %v1056 = vmul.f32 %v1051, %v1055
    %vm1057 = vweird.f32 %v749
    %vm1058 = vweird.f32 %v1051
    %vm1059 = vmor %vm1057, %vm1058
    %v1060 = vsel %vm1059, %v1051, %v1056
    %v1061 = vrsqrt.pop %v750
    %v1062 = vmul.f32 %v1061, %v750
    %v1063 = vmul.f32 %v1062, %v1061
    %v1064 = vmul.f32 0.5, %v1063
    %v1065 = vsub.f32 1.5, %v1064
    %v1066 = vmul.f32 %v1061, %v1065
    %vm1067 = vweird.f32 %v750
    %vm1068 = vweird.f32 %v1061
    %vm1069 = vmor %vm1067, %vm1068
    %v1070 = vsel %vm1069, %v1061, %v1066
    %v1071 = vld [vmem:[%s3] sm:$0x1]
    %v1073 = vperm.slane %v1071, 0
    %v1075 = vmul.f32 %v1073, %v760
    %v1076 = vmul.f32 %v1073, %v770
    %v1077 = vmul.f32 %v1073, %v780
    %v1078 = vmul.f32 %v1073, %v790
    %v1079 = vmul.f32 %v1073, %v800
    %v1080 = vmul.f32 %v1073, %v810
    %v1081 = vmul.f32 %v1073, %v820
    %v1082 = vmul.f32 %v1073, %v830
    %v1083 = vmul.f32 %v1073, %v840
    %v1084 = vmul.f32 %v1073, %v850
    %v1085 = vmul.f32 %v1073, %v860
    %v1086 = vmul.f32 %v1073, %v870
    %v1087 = vmul.f32 %v1073, %v880
    %v1088 = vmul.f32 %v1073, %v890
    %v1089 = vmul.f32 %v1073, %v900
    %v1090 = vmul.f32 %v1073, %v910
    %v1091 = vmul.f32 %v1073, %v920
    %v1092 = vmul.f32 %v1073, %v930
    %v1093 = vmul.f32 %v1073, %v940
    %v1094 = vmul.f32 %v1073, %v950
    %v1095 = vmul.f32 %v1073, %v960
    %v1096 = vmul.f32 %v1073, %v970
    %v1097 = vmul.f32 %v1073, %v980
    %v1098 = vmul.f32 %v1073, %v990
    %v1099 = vmul.f32 %v1073, %v1000
    %v1100 = vmul.f32 %v1073, %v1010
    %v1101 = vmul.f32 %v1073, %v1020
    %v1102 = vmul.f32 %v1073, %v1030
    %v1103 = vmul.f32 %v1073, %v1040
    %v1104 = vmul.f32 %v1073, %v1050
    %v1105 = vmul.f32 %v1073, %v1060
    %v1106 = vmul.f32 %v1073, %v1070
    %v1107 = vmul.f32 %v512, %v1075
    %v1108 = vmul.f32 %v514, %v1076
    %v1109 = vmul.f32 %v517, %v1077
    %v1110 = vmul.f32 %v519, %v1078
    %v1111 = vmul.f32 %v522, %v1079
    %v1112 = vmul.f32 %v524, %v1080
    %v1113 = vmul.f32 %v527, %v1081
    %v1114 = vmul.f32 %v529, %v1082
    %v1115 = vmul.f32 %v532, %v1083
    %v1116 = vmul.f32 %v534, %v1084
    %v1117 = vmul.f32 %v537, %v1085
    %v1118 = vmul.f32 %v539, %v1086
    %v1119 = vmul.f32 %v542, %v1087
    %v1120 = vmul.f32 %v544, %v1088
    %v1121 = vmul.f32 %v547, %v1089
    %v1122 = vmul.f32 %v549, %v1090
    %v1123 = vmul.f32 %v552, %v1091
    %v1124 = vmul.f32 %v554, %v1092
    %v1125 = vmul.f32 %v557, %v1093
    %v1126 = vmul.f32 %v559, %v1094
    %v1127 = vmul.f32 %v562, %v1095
    %v1128 = vmul.f32 %v564, %v1096
    %v1129 = vmul.f32 %v567, %v1097
    %v1130 = vmul.f32 %v569, %v1098
    %v1131 = vmul.f32 %v572, %v1099
    %v1132 = vmul.f32 %v574, %v1100
    %v1133 = vmul.f32 %v577, %v1101
    %v1134 = vmul.f32 %v579, %v1102
    %v1135 = vmul.f32 %v582, %v1103
    %v1136 = vmul.f32 %v584, %v1104
    %v1137 = vmul.f32 %v587, %v1105
    %v1138 = vmul.f32 %v589, %v1106
    %v1139 = vmax.f32 %v1107, 0.0
    %v1140 = vmax.f32 %v1108, 0.0
    %v1141 = vmax.f32 %v1109, 0.0
    %v1142 = vmax.f32 %v1110, 0.0
    %v1143 = vmax.f32 %v1111, 0.0
    %v1144 = vmax.f32 %v1112, 0.0
    %v1145 = vmax.f32 %v1113, 0.0
    %v1146 = vmax.f32 %v1114, 0.0
    %v1147 = vmax.f32 %v1115, 0.0
    %v1148 = vmax.f32 %v1116, 0.0
    %v1149 = vmax.f32 %v1117, 0.0
    %v1150 = vmax.f32 %v1118, 0.0
    %v1151 = vmax.f32 %v1119, 0.0
    %v1152 = vmax.f32 %v1120, 0.0
    %v1153 = vmax.f32 %v1121, 0.0
    %v1154 = vmax.f32 %v1122, 0.0
    %v1155 = vmax.f32 %v1123, 0.0
    %v1156 = vmax.f32 %v1124, 0.0
    %v1157 = vmax.f32 %v1125, 0.0
    %v1158 = vmax.f32 %v1126, 0.0
    %v1159 = vmax.f32 %v1127, 0.0
    %v1160 = vmax.f32 %v1128, 0.0
    %v1161 = vmax.f32 %v1129, 0.0
    %v1162 = vmax.f32 %v1130, 0.0
    %v1163 = vmax.f32 %v1131, 0.0
    %v1164 = vmax.f32 %v1132, 0.0
    %v1165 = vmax.f32 %v1133, 0.0
    %v1166 = vmax.f32 %v1134, 0.0
    %v1167 = vmax.f32 %v1135, 0.0
    %v1168 = vmax.f32 %v1136, 0.0
    %v1169 = vmax.f32 %v1137, 0.0
    %v1170 = vmax.f32 %v1138, 0.0
    %vm1171 = vcmp.ne.f32.partialorder %v1107, %v1107
    %vm1172 = vcmp.ne.f32.partialorder %v1108, %v1108
    %vm1173 = vcmp.ne.f32.partialorder %v1109, %v1109
    %vm1174 = vcmp.ne.f32.partialorder %v1110, %v1110
    %vm1175 = vcmp.ne.f32.partialorder %v1111, %v1111
    %vm1176 = vcmp.ne.f32.partialorder %v1112, %v1112
    %vm1177 = vcmp.ne.f32.partialorder %v1113, %v1113
    %vm1178 = vcmp.ne.f32.partialorder %v1114, %v1114
    %vm1179 = vcmp.ne.f32.partialorder %v1115, %v1115
    %vm1180 = vcmp.ne.f32.partialorder %v1116, %v1116
    %vm1181 = vcmp.ne.f32.partialorder %v1117, %v1117
    %vm1182 = vcmp.ne.f32.partialorder %v1118, %v1118
    %vm1183 = vcmp.ne.f32.partialorder %v1119, %v1119
    %vm1184 = vcmp.ne.f32.partialorder %v1120, %v1120
    %vm1185 = vcmp.ne.f32.partialorder %v1121, %v1121
    %vm1186 = vcmp.ne.f32.partialorder %v1122, %v1122
    %vm1187 = vcmp.ne.f32.partialorder %v1123, %v1123
    %vm1188 = vcmp.ne.f32.partialorder %v1124, %v1124
    %vm1189 = vcmp.ne.f32.partialorder %v1125, %v1125
    %vm1190 = vcmp.ne.f32.partialorder %v1126, %v1126
    %vm1191 = vcmp.ne.f32.partialorder %v1127, %v1127
    %vm1192 = vcmp.ne.f32.partialorder %v1128, %v1128
    %vm1193 = vcmp.ne.f32.partialorder %v1129, %v1129
    %vm1194 = vcmp.ne.f32.partialorder %v1130, %v1130
    %vm1195 = vcmp.ne.f32.partialorder %v1131, %v1131
    %vm1196 = vcmp.ne.f32.partialorder %v1132, %v1132
    %vm1197 = vcmp.ne.f32.partialorder %v1133, %v1133
    %vm1198 = vcmp.ne.f32.partialorder %v1134, %v1134
    %vm1199 = vcmp.ne.f32.partialorder %v1135, %v1135
    %vm1200 = vcmp.ne.f32.partialorder %v1136, %v1136
    %vm1201 = vcmp.ne.f32.partialorder %v1137, %v1137
    %vm1202 = vcmp.ne.f32.partialorder %v1138, %v1138
    %v1203 = vadd.f32 %v1107, 0.0
    %v1204 = vadd.f32 %v1108, 0.0
    %v1205 = vadd.f32 %v1109, 0.0
    %v1206 = vadd.f32 %v1110, 0.0
    %v1207 = vadd.f32 %v1111, 0.0
    %v1208 = vadd.f32 %v1112, 0.0
    %v1209 = vadd.f32 %v1113, 0.0
    %v1210 = vadd.f32 %v1114, 0.0
    %v1211 = vadd.f32 %v1115, 0.0
    %v1212 = vadd.f32 %v1116, 0.0
    %v1213 = vadd.f32 %v1117, 0.0
    %v1214 = vadd.f32 %v1118, 0.0
    %v1215 = vadd.f32 %v1119, 0.0
    %v1216 = vadd.f32 %v1120, 0.0
    %v1217 = vadd.f32 %v1121, 0.0
    %v1218 = vadd.f32 %v1122, 0.0
    %v1219 = vadd.f32 %v1123, 0.0
    %v1220 = vadd.f32 %v1124, 0.0
    %v1221 = vadd.f32 %v1125, 0.0
    %v1222 = vadd.f32 %v1126, 0.0
    %v1223 = vadd.f32 %v1127, 0.0
    %v1224 = vadd.f32 %v1128, 0.0
    %v1225 = vadd.f32 %v1129, 0.0
    %v1226 = vadd.f32 %v1130, 0.0
    %v1227 = vadd.f32 %v1131, 0.0
    %v1228 = vadd.f32 %v1132, 0.0
    %v1229 = vadd.f32 %v1133, 0.0
    %v1230 = vadd.f32 %v1134, 0.0
    %v1231 = vadd.f32 %v1135, 0.0
    %v1232 = vadd.f32 %v1136, 0.0
    %v1233 = vadd.f32 %v1137, 0.0
    %v1234 = vadd.f32 %v1138, 0.0
    %v1235 = vand.u32 2147483647, %v1107
    %v1236 = vand.u32 2147483647, %v1108
    %v1237 = vand.u32 2147483647, %v1109
    %v1238 = vand.u32 2147483647, %v1110
    %v1239 = vand.u32 2147483647, %v1111
    %v1240 = vand.u32 2147483647, %v1112
    %v1241 = vand.u32 2147483647, %v1113
    %v1242 = vand.u32 2147483647, %v1114
    %v1243 = vand.u32 2147483647, %v1115
    %v1244 = vand.u32 2147483647, %v1116
    %v1245 = vand.u32 2147483647, %v1117
    %v1246 = vand.u32 2147483647, %v1118
    %v1247 = vand.u32 2147483647, %v1119
    %v1248 = vand.u32 2147483647, %v1120
    %v1249 = vand.u32 2147483647, %v1121
    %v1250 = vand.u32 2147483647, %v1122
    %v1251 = vand.u32 2147483647, %v1123
    %v1252 = vand.u32 2147483647, %v1124
    %v1253 = vand.u32 2147483647, %v1125
    %v1254 = vand.u32 2147483647, %v1126
    %v1255 = vand.u32 2147483647, %v1127
    %v1256 = vand.u32 2147483647, %v1128
    %v1257 = vand.u32 2147483647, %v1129
    %v1258 = vand.u32 2147483647, %v1130
    %v1259 = vand.u32 2147483647, %v1131
    %v1260 = vand.u32 2147483647, %v1132
    %v1261 = vand.u32 2147483647, %v1133
    %v1262 = vand.u32 2147483647, %v1134
    %v1263 = vand.u32 2147483647, %v1135
    %v1264 = vand.u32 2147483647, %v1136
    %v1265 = vand.u32 2147483647, %v1137
    %v1266 = vand.u32 2147483647, %v1138
    %v1267 = vsub.f32 0.0, %v1235
    %v1268 = vsub.f32 0.0, %v1236
    %v1269 = vsub.f32 0.0, %v1237
    %v1270 = vsub.f32 0.0, %v1238
    %v1271 = vsub.f32 0.0, %v1239
    %v1272 = vsub.f32 0.0, %v1240
    %v1273 = vsub.f32 0.0, %v1241
    %v1274 = vsub.f32 0.0, %v1242
    %v1275 = vsub.f32 0.0, %v1243
    %v1276 = vsub.f32 0.0, %v1244
    %v1277 = vsub.f32 0.0, %v1245
    %v1278 = vsub.f32 0.0, %v1246
    %v1279 = vsub.f32 0.0, %v1247
    %v1280 = vsub.f32 0.0, %v1248
    %v1281 = vsub.f32 0.0, %v1249
    %v1282 = vsub.f32 0.0, %v1250
    %v1283 = vsub.f32 0.0, %v1251
    %v1284 = vsub.f32 0.0, %v1252
    %v1285 = vsub.f32 0.0, %v1253
    %v1286 = vsub.f32 0.0, %v1254
    %v1287 = vsub.f32 0.0, %v1255
    %v1288 = vsub.f32 0.0, %v1256
    %v1289 = vsub.f32 0.0, %v1257
    %v1290 = vsub.f32 0.0, %v1258
    %v1291 = vsub.f32 0.0, %v1259
    %v1292 = vsub.f32 0.0, %v1260
    %v1293 = vsub.f32 0.0, %v1261
    %v1294 = vsub.f32 0.0, %v1262
    %v1295 = vsub.f32 0.0, %v1263
    %v1296 = vsub.f32 0.0, %v1264
    %v1297 = vsub.f32 0.0, %v1265
    %v1298 = vsub.f32 0.0, %v1266
    %v1299 = vmul.f32 %v1267, 1.442695
    %v1300 = vpow.pop %v1299
    %v1301 = vmul.f32 %v1268, 1.442695
    %v1302 = vpow.pop %v1301
    %v1303 = vmul.f32 %v1269, 1.442695
    %v1304 = vpow.pop %v1303
    %v1305 = vmul.f32 %v1270, 1.442695
    %v1306 = vpow.pop %v1305
    %v1307 = vmul.f32 %v1271, 1.442695
    %v1308 = vpow.pop %v1307
    %v1309 = vmul.f32 %v1272, 1.442695
    %v1310 = vpow.pop %v1309
    %v1311 = vmul.f32 %v1273, 1.442695
    %v1312 = vpow.pop %v1311
    %v1313 = vmul.f32 %v1274, 1.442695
    %v1314 = vpow.pop %v1313
    %v1315 = vmul.f32 %v1275, 1.442695
    %v1316 = vpow.pop %v1315
    %v1317 = vmul.f32 %v1276, 1.442695
    %v1318 = vpow.pop %v1317
    %v1319 = vmul.f32 %v1277, 1.442695
    %v1320 = vpow.pop %v1319
    %v1321 = vmul.f32 %v1278, 1.442695
    %v1322 = vpow.pop %v1321
    %v1323 = vmul.f32 %v1279, 1.442695
    %v1324 = vpow.pop %v1323
    %v1325 = vmul.f32 %v1280, 1.442695
    %v1326 = vpow.pop %v1325
    %v1327 = vmul.f32 %v1281, 1.442695
    %v1328 = vpow.pop %v1327
    %v1329 = vmul.f32 %v1282, 1.442695
    %v1330 = vpow.pop %v1329
    %v1331 = vmul.f32 %v1283, 1.442695
    %v1332 = vpow.pop %v1331
    %v1333 = vmul.f32 %v1284, 1.442695
    %v1334 = vpow.pop %v1333
    %v1335 = vmul.f32 %v1285, 1.442695
    %v1336 = vpow.pop %v1335
    %v1337 = vmul.f32 %v1286, 1.442695
    %v1338 = vpow.pop %v1337
    %v1339 = vmul.f32 %v1287, 1.442695
    %v1340 = vpow.pop %v1339
    %v1341 = vmul.f32 %v1288, 1.442695
    %v1342 = vpow.pop %v1341
    %v1343 = vmul.f32 %v1289, 1.442695
    %v1344 = vpow.pop %v1343
    %v1345 = vmul.f32 %v1290, 1.442695
    %v1346 = vpow.pop %v1345
    %v1347 = vmul.f32 %v1291, 1.442695
    %v1348 = vpow.pop %v1347
    %v1349 = vmul.f32 %v1292, 1.442695
    %v1350 = vpow.pop %v1349
    %v1351 = vmul.f32 %v1293, 1.442695
    %v1352 = vpow.pop %v1351
    %v1353 = vmul.f32 %v1294, 1.442695
    %v1354 = vpow.pop %v1353
    %v1355 = vmul.f32 %v1295, 1.442695
    %v1356 = vpow.pop %v1355
    %v1357 = vmul.f32 %v1296, 1.442695
    %v1358 = vpow.pop %v1357
    %v1359 = vmul.f32 %v1297, 1.442695
    %v1360 = vpow.pop %v1359
    %v1361 = vmul.f32 %v1298, 1.442695
    %v1362 = vpow.pop %v1361
    %v1363 = vadd.f32 %v1300, 1.0
    %v1364 = vlog2.pop %v1363
    %v1365 = vmul.f32 %v1364, 0.6931472
    %v1366 = vmul.f32 -0.5, %v1300
    %v1367 = vadd.f32 %v1366, 1.0
    %v1368 = vmul.f32 %v1367, %v1300
    %v1369 = vand.u32 2147483647, %v1300
    %vm1370 = vcmp.lt.f32.partialorder %v1369, 0.0004427343
    %v1371 = vsel %vm1370, %v1368, %v1365
    %v1372 = vadd.f32 %v1302, 1.0
    %v1373 = vlog2.pop %v1372
    %v1374 = vmul.f32 %v1373, 0.6931472
    %v1375 = vmul.f32 -0.5, %v1302
    %v1376 = vadd.f32 %v1375, 1.0
    %v1377 = vmul.f32 %v1376, %v1302
    %v1378 = vand.u32 2147483647, %v1302
    %vm1379 = vcmp.lt.f32.partialorder %v1378, 0.0004427343
    %v1380 = vsel %vm1379, %v1377, %v1374
    %v1381 = vadd.f32 %v1304, 1.0
    %v1382 = vlog2.pop %v1381
    %v1383 = vmul.f32 %v1382, 0.6931472
    %v1384 = vmul.f32 -0.5, %v1304
    %v1385 = vadd.f32 %v1384, 1.0
    %v1386 = vmul.f32 %v1385, %v1304
    %v1387 = vand.u32 2147483647, %v1304
    %vm1388 = vcmp.lt.f32.partialorder %v1387, 0.0004427343
    %v1389 = vsel %vm1388, %v1386, %v1383
    %v1390 = vadd.f32 %v1306, 1.0
    %v1391 = vlog2.pop %v1390
    %v1392 = vmul.f32 %v1391, 0.6931472
    %v1393 = vmul.f32 -0.5, %v1306
    %v1394 = vadd.f32 %v1393, 1.0
    %v1395 = vmul.f32 %v1394, %v1306
    %v1396 = vand.u32 2147483647, %v1306
    %vm1397 = vcmp.lt.f32.partialorder %v1396, 0.0004427343
    %v1398 = vsel %vm1397, %v1395, %v1392
    %v1399 = vadd.f32 %v1308, 1.0
    %v1400 = vlog2.pop %v1399
    %v1401 = vmul.f32 %v1400, 0.6931472
    %v1402 = vmul.f32 -0.5, %v1308
    %v1403 = vadd.f32 %v1402, 1.0
    %v1404 = vmul.f32 %v1403, %v1308
    %v1405 = vand.u32 2147483647, %v1308
    %vm1406 = vcmp.lt.f32.partialorder %v1405, 0.0004427343
    %v1407 = vsel %vm1406, %v1404, %v1401
    %v1408 = vadd.f32 %v1310, 1.0
    %v1409 = vlog2.pop %v1408
    %v1410 = vmul.f32 %v1409, 0.6931472
    %v1411 = vmul.f32 -0.5, %v1310
    %v1412 = vadd.f32 %v1411, 1.0
    %v1413 = vmul.f32 %v1412, %v1310
    %v1414 = vand.u32 2147483647, %v1310
    %vm1415 = vcmp.lt.f32.partialorder %v1414, 0.0004427343
    %v1416 = vsel %vm1415, %v1413, %v1410
    %v1417 = vadd.f32 %v1312, 1.0
    %v1418 = vlog2.pop %v1417
    %v1419 = vmul.f32 %v1418, 0.6931472
    %v1420 = vmul.f32 -0.5, %v1312
    %v1421 = vadd.f32 %v1420, 1.0
    %v1422 = vmul.f32 %v1421, %v1312
    %v1423 = vand.u32 2147483647, %v1312
    %vm1424 = vcmp.lt.f32.partialorder %v1423, 0.0004427343
    %v1425 = vsel %vm1424, %v1422, %v1419
    %v1426 = vadd.f32 %v1314, 1.0
    %v1427 = vlog2.pop %v1426
    %v1428 = vmul.f32 %v1427, 0.6931472
    %v1429 = vmul.f32 -0.5, %v1314
    %v1430 = vadd.f32 %v1429, 1.0
    %v1431 = vmul.f32 %v1430, %v1314
    %v1432 = vand.u32 2147483647, %v1314
    %vm1433 = vcmp.lt.f32.partialorder %v1432, 0.0004427343
    %v1434 = vsel %vm1433, %v1431, %v1428
    %v1435 = vadd.f32 %v1316, 1.0
    %v1436 = vlog2.pop %v1435
    %v1437 = vmul.f32 %v1436, 0.6931472
    %v1438 = vmul.f32 -0.5, %v1316
    %v1439 = vadd.f32 %v1438, 1.0
    %v1440 = vmul.f32 %v1439, %v1316
    %v1441 = vand.u32 2147483647, %v1316
    %vm1442 = vcmp.lt.f32.partialorder %v1441, 0.0004427343
    %v1443 = vsel %vm1442, %v1440, %v1437
    %v1444 = vadd.f32 %v1318, 1.0
    %v1445 = vlog2.pop %v1444
    %v1446 = vmul.f32 %v1445, 0.6931472
    %v1447 = vmul.f32 -0.5, %v1318
    %v1448 = vadd.f32 %v1447, 1.0
    %v1449 = vmul.f32 %v1448, %v1318
    %v1450 = vand.u32 2147483647, %v1318
    %vm1451 = vcmp.lt.f32.partialorder %v1450, 0.0004427343
    %v1452 = vsel %vm1451, %v1449, %v1446
    %v1453 = vadd.f32 %v1320, 1.0
    %v1454 = vlog2.pop %v1453
    %v1455 = vmul.f32 %v1454, 0.6931472
    %v1456 = vmul.f32 -0.5, %v1320
    %v1457 = vadd.f32 %v1456, 1.0
    %v1458 = vmul.f32 %v1457, %v1320
    %v1459 = vand.u32 2147483647, %v1320
    %vm1460 = vcmp.lt.f32.partialorder %v1459, 0.0004427343
    %v1461 = vsel %vm1460, %v1458, %v1455
    %v1462 = vadd.f32 %v1322, 1.0
    %v1463 = vlog2.pop %v1462
    %v1464 = vmul.f32 %v1463, 0.6931472
    %v1465 = vmul.f32 -0.5, %v1322
    %v1466 = vadd.f32 %v1465, 1.0
    %v1467 = vmul.f32 %v1466, %v1322
    %v1468 = vand.u32 2147483647, %v1322
    %vm1469 = vcmp.lt.f32.partialorder %v1468, 0.0004427343
    %v1470 = vsel %vm1469, %v1467, %v1464
    %v1471 = vadd.f32 %v1324, 1.0
    %v1472 = vlog2.pop %v1471
    %v1473 = vmul.f32 %v1472, 0.6931472
    %v1474 = vmul.f32 -0.5, %v1324
    %v1475 = vadd.f32 %v1474, 1.0
    %v1476 = vmul.f32 %v1475, %v1324
    %v1477 = vand.u32 2147483647, %v1324
    %vm1478 = vcmp.lt.f32.partialorder %v1477, 0.0004427343
    %v1479 = vsel %vm1478, %v1476, %v1473
    %v1480 = vadd.f32 %v1326, 1.0
    %v1481 = vlog2.pop %v1480
    %v1482 = vmul.f32 %v1481, 0.6931472
    %v1483 = vmul.f32 -0.5, %v1326
    %v1484 = vadd.f32 %v1483, 1.0
    %v1485 = vmul.f32 %v1484, %v1326
    %v1486 = vand.u32 2147483647, %v1326
    %vm1487 = vcmp.lt.f32.partialorder %v1486, 0.0004427343
    %v1488 = vsel %vm1487, %v1485, %v1482
    %v1489 = vadd.f32 %v1328, 1.0
    %v1490 = vlog2.pop %v1489
    %v1491 = vmul.f32 %v1490, 0.6931472
    %v1492 = vmul.f32 -0.5, %v1328
    %v1493 = vadd.f32 %v1492, 1.0
    %v1494 = vmul.f32 %v1493, %v1328
    %v1495 = vand.u32 2147483647, %v1328
    %vm1496 = vcmp.lt.f32.partialorder %v1495, 0.0004427343
    %v1497 = vsel %vm1496, %v1494, %v1491
    %v1498 = vadd.f32 %v1330, 1.0
    %v1499 = vlog2.pop %v1498
    %v1500 = vmul.f32 %v1499, 0.6931472
    %v1501 = vmul.f32 -0.5, %v1330
    %v1502 = vadd.f32 %v1501, 1.0
    %v1503 = vmul.f32 %v1502, %v1330
    %v1504 = vand.u32 2147483647, %v1330
    %vm1505 = vcmp.lt.f32.partialorder %v1504, 0.0004427343
    %v1506 = vsel %vm1505, %v1503, %v1500
    %v1507 = vadd.f32 %v1332, 1.0
    %v1508 = vlog2.pop %v1507
    %v1509 = vmul.f32 %v1508, 0.6931472
    %v1510 = vmul.f32 -0.5, %v1332
    %v1511 = vadd.f32 %v1510, 1.0
    %v1512 = vmul.f32 %v1511, %v1332
    %v1513 = vand.u32 2147483647, %v1332
    %vm1514 = vcmp.lt.f32.partialorder %v1513, 0.0004427343
    %v1515 = vsel %vm1514, %v1512, %v1509
    %v1516 = vadd.f32 %v1334, 1.0
    %v1517 = vlog2.pop %v1516
    %v1518 = vmul.f32 %v1517, 0.6931472
    %v1519 = vmul.f32 -0.5, %v1334
    %v1520 = vadd.f32 %v1519, 1.0
    %v1521 = vmul.f32 %v1520, %v1334
    %v1522 = vand.u32 2147483647, %v1334
    %vm1523 = vcmp.lt.f32.partialorder %v1522, 0.0004427343
    %v1524 = vsel %vm1523, %v1521, %v1518
    %v1525 = vadd.f32 %v1336, 1.0
    %v1526 = vlog2.pop %v1525
    %v1527 = vmul.f32 %v1526, 0.6931472
    %v1528 = vmul.f32 -0.5, %v1336
    %v1529 = vadd.f32 %v1528, 1.0
    %v1530 = vmul.f32 %v1529, %v1336
    %v1531 = vand.u32 2147483647, %v1336
    %vm1532 = vcmp.lt.f32.partialorder %v1531, 0.0004427343
    %v1533 = vsel %vm1532, %v1530, %v1527
    %v1534 = vadd.f32 %v1338, 1.0
    %v1535 = vlog2.pop %v1534
    %v1536 = vmul.f32 %v1535, 0.6931472
    %v1537 = vmul.f32 -0.5, %v1338
    %v1538 = vadd.f32 %v1537, 1.0
    %v1539 = vmul.f32 %v1538, %v1338
    %v1540 = vand.u32 2147483647, %v1338
    %vm1541 = vcmp.lt.f32.partialorder %v1540, 0.0004427343
    %v1542 = vsel %vm1541, %v1539, %v1536
    %v1543 = vadd.f32 %v1340, 1.0
    %v1544 = vlog2.pop %v1543
    %v1545 = vmul.f32 %v1544, 0.6931472
    %v1546 = vmul.f32 -0.5, %v1340
    %v1547 = vadd.f32 %v1546, 1.0
    %v1548 = vmul.f32 %v1547, %v1340
    %v1549 = vand.u32 2147483647, %v1340
    %vm1550 = vcmp.lt.f32.partialorder %v1549, 0.0004427343
    %v1551 = vsel %vm1550, %v1548, %v1545
    %v1552 = vadd.f32 %v1342, 1.0
    %v1553 = vlog2.pop %v1552
    %v1554 = vmul.f32 %v1553, 0.6931472
    %v1555 = vmul.f32 -0.5, %v1342
    %v1556 = vadd.f32 %v1555, 1.0
    %v1557 = vmul.f32 %v1556, %v1342
    %v1558 = vand.u32 2147483647, %v1342
    %vm1559 = vcmp.lt.f32.partialorder %v1558, 0.0004427343
    %v1560 = vsel %vm1559, %v1557, %v1554
    %v1561 = vadd.f32 %v1344, 1.0
    %v1562 = vlog2.pop %v1561
    %v1563 = vmul.f32 %v1562, 0.6931472
    %v1564 = vmul.f32 -0.5, %v1344
    %v1565 = vadd.f32 %v1564, 1.0
    %v1566 = vmul.f32 %v1565, %v1344
    %v1567 = vand.u32 2147483647, %v1344
    %vm1568 = vcmp.lt.f32.partialorder %v1567, 0.0004427343
    %v1569 = vsel %vm1568, %v1566, %v1563
    %v1570 = vadd.f32 %v1346, 1.0
    %v1571 = vlog2.pop %v1570
    %v1572 = vmul.f32 %v1571, 0.6931472
    %v1573 = vmul.f32 -0.5, %v1346
    %v1574 = vadd.f32 %v1573, 1.0
    %v1575 = vmul.f32 %v1574, %v1346
    %v1576 = vand.u32 2147483647, %v1346
    %vm1577 = vcmp.lt.f32.partialorder %v1576, 0.0004427343
    %v1578 = vsel %vm1577, %v1575, %v1572
    %v1579 = vadd.f32 %v1348, 1.0
    %v1580 = vlog2.pop %v1579
    %v1581 = vmul.f32 %v1580, 0.6931472
    %v1582 = vmul.f32 -0.5, %v1348
    %v1583 = vadd.f32 %v1582, 1.0
    %v1584 = vmul.f32 %v1583, %v1348
    %v1585 = vand.u32 2147483647, %v1348
    %vm1586 = vcmp.lt.f32.partialorder %v1585, 0.0004427343
    %v1587 = vsel %vm1586, %v1584, %v1581
    %v1588 = vadd.f32 %v1350, 1.0
    %v1589 = vlog2.pop %v1588
    %v1590 = vmul.f32 %v1589, 0.6931472
    %v1591 = vmul.f32 -0.5, %v1350
    %v1592 = vadd.f32 %v1591, 1.0
    %v1593 = vmul.f32 %v1592, %v1350
    %v1594 = vand.u32 2147483647, %v1350
    %vm1595 = vcmp.lt.f32.partialorder %v1594, 0.0004427343
    %v1596 = vsel %vm1595, %v1593, %v1590
    %v1597 = vadd.f32 %v1352, 1.0
    %v1598 = vlog2.pop %v1597
    %v1599 = vmul.f32 %v1598, 0.6931472
    %v1600 = vmul.f32 -0.5, %v1352
    %v1601 = vadd.f32 %v1600, 1.0
    %v1602 = vmul.f32 %v1601, %v1352
    %v1603 = vand.u32 2147483647, %v1352
    %vm1604 = vcmp.lt.f32.partialorder %v1603, 0.0004427343
    %v1605 = vsel %vm1604, %v1602, %v1599
    %v1606 = vadd.f32 %v1354, 1.0
    %v1607 = vlog2.pop %v1606
    %v1608 = vmul.f32 %v1607, 0.6931472
    %v1609 = vmul.f32 -0.5, %v1354
    %v1610 = vadd.f32 %v1609, 1.0
    %v1611 = vmul.f32 %v1610, %v1354
    %v1612 = vand.u32 2147483647, %v1354
    %vm1613 = vcmp.lt.f32.partialorder %v1612, 0.0004427343
    %v1614 = vsel %vm1613, %v1611, %v1608
    %v1615 = vadd.f32 %v1356, 1.0
    %v1616 = vlog2.pop %v1615
    %v1617 = vmul.f32 %v1616, 0.6931472
    %v1618 = vmul.f32 -0.5, %v1356
    %v1619 = vadd.f32 %v1618, 1.0
    %v1620 = vmul.f32 %v1619, %v1356
    %v1621 = vand.u32 2147483647, %v1356
    %vm1622 = vcmp.lt.f32.partialorder %v1621, 0.0004427343
    %v1623 = vsel %vm1622, %v1620, %v1617
    %v1624 = vadd.f32 %v1358, 1.0
    %v1625 = vlog2.pop %v1624
    %v1626 = vmul.f32 %v1625, 0.6931472
    %v1627 = vmul.f32 -0.5, %v1358
    %v1628 = vadd.f32 %v1627, 1.0
    %v1629 = vmul.f32 %v1628, %v1358
    %v1630 = vand.u32 2147483647, %v1358
    %vm1631 = vcmp.lt.f32.partialorder %v1630, 0.0004427343
    %v1632 = vsel %vm1631, %v1629, %v1626
    %v1633 = vadd.f32 %v1360, 1.0
    %v1634 = vlog2.pop %v1633
    %v1635 = vmul.f32 %v1634, 0.6931472
    %v1636 = vmul.f32 -0.5, %v1360
    %v1637 = vadd.f32 %v1636, 1.0
    %v1638 = vmul.f32 %v1637, %v1360
    %v1639 = vand.u32 2147483647, %v1360
    %vm1640 = vcmp.lt.f32.partialorder %v1639, 0.0004427343
    %v1641 = vsel %vm1640, %v1638, %v1635
    %v1642 = vadd.f32 %v1362, 1.0
    %v1643 = vlog2.pop %v1642
    %v1644 = vmul.f32 %v1643, 0.6931472
    %v1645 = vmul.f32 -0.5, %v1362
    %v1646 = vadd.f32 %v1645, 1.0
    %v1647 = vmul.f32 %v1646, %v1362
    %v1648 = vand.u32 2147483647, %v1362
    %vm1649 = vcmp.lt.f32.partialorder %v1648, 0.0004427343
    %v1650 = vsel %vm1649, %v1647, %v1644
    %v1651 = vadd.f32 %v1139, %v1371
    %v1652 = vadd.f32 %v1140, %v1380
    %v1653 = vadd.f32 %v1141, %v1389
    %v1654 = vadd.f32 %v1142, %v1398
    %v1655 = vadd.f32 %v1143, %v1407
    %v1656 = vadd.f32 %v1144, %v1416
    %v1657 = vadd.f32 %v1145, %v1425
    %v1658 = vadd.f32 %v1146, %v1434
    %v1659 = vadd.f32 %v1147, %v1443
    %v1660 = vadd.f32 %v1148, %v1452
    %v1661 = vadd.f32 %v1149, %v1461
    %v1662 = vadd.f32 %v1150, %v1470
    %v1663 = vadd.f32 %v1151, %v1479
    %v1664 = vadd.f32 %v1152, %v1488
    %v1665 = vadd.f32 %v1153, %v1497
    %v1666 = vadd.f32 %v1154, %v1506
    %v1667 = vadd.f32 %v1155, %v1515
    %v1668 = vadd.f32 %v1156, %v1524
    %v1669 = vadd.f32 %v1157, %v1533
    %v1670 = vadd.f32 %v1158, %v1542
    %v1671 = vadd.f32 %v1159, %v1551
    %v1672 = vadd.f32 %v1160, %v1560
    %v1673 = vadd.f32 %v1161, %v1569
    %v1674 = vadd.f32 %v1162, %v1578
    %v1675 = vadd.f32 %v1163, %v1587
    %v1676 = vadd.f32 %v1164, %v1596
    %v1677 = vadd.f32 %v1165, %v1605
    %v1678 = vadd.f32 %v1166, %v1614
    %v1679 = vadd.f32 %v1167, %v1623
    %v1680 = vadd.f32 %v1168, %v1632
    %v1681 = vadd.f32 %v1169, %v1641
    %v1682 = vadd.f32 %v1170, %v1650
    %v1683 = vsel %vm1171, %v1203, %v1651
    %v1684 = vsel %vm1172, %v1204, %v1652
    %v1685 = vsel %vm1173, %v1205, %v1653
    %v1686 = vsel %vm1174, %v1206, %v1654
    %v1687 = vsel %vm1175, %v1207, %v1655
    %v1688 = vsel %vm1176, %v1208, %v1656
    %v1689 = vsel %vm1177, %v1209, %v1657
    %v1690 = vsel %vm1178, %v1210, %v1658
    %v1691 = vsel %vm1179, %v1211, %v1659
    %v1692 = vsel %vm1180, %v1212, %v1660
    %v1693 = vsel %vm1181, %v1213, %v1661
    %v1694 = vsel %vm1182, %v1214, %v1662
    %v1695 = vsel %vm1183, %v1215, %v1663
    %v1696 = vsel %vm1184, %v1216, %v1664
    %v1697 = vsel %vm1185, %v1217, %v1665
    %v1698 = vsel %vm1186, %v1218, %v1666
    %v1699 = vsel %vm1187, %v1219, %v1667
    %v1700 = vsel %vm1188, %v1220, %v1668
    %v1701 = vsel %vm1189, %v1221, %v1669
    %v1702 = vsel %vm1190, %v1222, %v1670
    %v1703 = vsel %vm1191, %v1223, %v1671
    %v1704 = vsel %vm1192, %v1224, %v1672
    %v1705 = vsel %vm1193, %v1225, %v1673
    %v1706 = vsel %vm1194, %v1226, %v1674
    %v1707 = vsel %vm1195, %v1227, %v1675
    %v1708 = vsel %vm1196, %v1228, %v1676
    %v1709 = vsel %vm1197, %v1229, %v1677
    %v1710 = vsel %vm1198, %v1230, %v1678
    %v1711 = vsel %vm1199, %v1231, %v1679
    %v1712 = vsel %vm1200, %v1232, %v1680
    %v1713 = vsel %vm1201, %v1233, %v1681
    %v1714 = vsel %vm1202, %v1234, %v1682
    %v1715 = vpack.c.bf16 %v1684, %v1683
    %v1716 = vpack.c.bf16 %v1686, %v1685
    %v1717 = vpack.c.bf16 %v1688, %v1687
    %v1718 = vpack.c.bf16 %v1690, %v1689
    %v1719 = vpack.c.bf16 %v1692, %v1691
    %v1720 = vpack.c.bf16 %v1694, %v1693
    %v1721 = vpack.c.bf16 %v1696, %v1695
    %v1722 = vpack.c.bf16 %v1698, %v1697
    %v1723 = vpack.c.bf16 %v1700, %v1699
    %v1724 = vpack.c.bf16 %v1702, %v1701
    %v1725 = vpack.c.bf16 %v1704, %v1703
    %v1726 = vpack.c.bf16 %v1706, %v1705
    %v1727 = vpack.c.bf16 %v1708, %v1707
    %v1728 = vpack.c.bf16 %v1710, %v1709
    %v1729 = vpack.c.bf16 %v1712, %v1711
    %v1730 = vpack.c.bf16 %v1714, %v1713
    %v1731 = vld [vmem:[%s4] sm:$0xf]
    %v1732 = vld [vmem:[%s4 + $0x4] sm:$0xf]
    %v1733 = vld [vmem:[%s4 + $0x8] sm:$0xf]
    %v1734 = vld [vmem:[%s4 + $0xc] sm:$0xf]
    %v1735 = vld [vmem:[%s4 + $0x10] sm:$0xf]
    %v1736 = vld [vmem:[%s4 + $0x14] sm:$0xf]
    %v1737 = vld [vmem:[%s4 + $0x18] sm:$0xf]
    %v1738 = vld [vmem:[%s4 + $0x1c] sm:$0xf]
    %v1739 = vld [vmem:[%s4 + $0x20] sm:$0xf]
    %v1740 = vld [vmem:[%s4 + $0x24] sm:$0xf]
    %v1741 = vld [vmem:[%s4 + $0x28] sm:$0xf]
    %v1742 = vld [vmem:[%s4 + $0x2c] sm:$0xf]
    %v1743 = vld [vmem:[%s4 + $0x30] sm:$0xf]
    %v1744 = vld [vmem:[%s4 + $0x34] sm:$0xf]
    %v1745 = vld [vmem:[%s4 + $0x38] sm:$0xf]
    %v1746 = vld [vmem:[%s4 + $0x3c] sm:$0xf]
    %v1763 = vunpack.c.l.b16 %v1731
    %v1764 = vunpack.c.l.b16 %v1732
    %v1765 = vunpack.c.l.b16 %v1733
    %v1766 = vunpack.c.l.b16 %v1734
    %v1767 = vunpack.c.l.b16 %v1735
    %v1768 = vunpack.c.l.b16 %v1736
    %v1769 = vunpack.c.l.b16 %v1737
    %v1770 = vunpack.c.l.b16 %v1738
    %v1771 = vunpack.c.l.b16 %v1739
    %v1772 = vunpack.c.l.b16 %v1740
    %v1773 = vunpack.c.l.b16 %v1741
    %v1774 = vunpack.c.l.b16 %v1742
    %v1775 = vunpack.c.l.b16 %v1743
    %v1776 = vunpack.c.l.b16 %v1744
    %v1777 = vunpack.c.l.b16 %v1745
    %v1778 = vunpack.c.l.b16 %v1746
    %v1779 = vpack.c.b16 %v1764, %v1763
    %v1780 = vpack.c.b16 %v1766, %v1765
    %v1781 = vpack.c.b16 %v1768, %v1767
    %v1782 = vpack.c.b16 %v1770, %v1769
    %v1783 = vpack.c.b16 %v1772, %v1771
    %v1784 = vpack.c.b16 %v1774, %v1773
    %v1785 = vpack.c.b16 %v1776, %v1775
    %v1786 = vpack.c.b16 %v1778, %v1777
    %1795 = vmatpush.bf16.msra.mxu0 %v1786
    %1796 = vmatpush.bf16.msra.mxu0 %v1785
    %1797 = vmatpush.bf16.msra.mxu0 %v1784
    %1798 = vmatpush.bf16.msra.mxu0 %v1783
    %1799 = vmatpush.bf16.msra.mxu0 %v1782
    %1800 = vmatpush.bf16.msra.mxu0 %v1781
    %1801 = vmatpush.bf16.msra.mxu0 %v1780
    %1802 = vmatpush.bf16.msra.mxu0 %v1779
    %1803 = vmatmul.bf16.gmra.mxu0 %v1715
    %v1804 = vpop.f32.mrf.mxu0
    %v1805 = vadd.f32 0.0, %v1804
    %v1806 = vpop.f32.mrf.mxu0
    %v1807 = vadd.f32 0.0, %v1806
    %1808 = vmatmul.bf16.gmra.mxu0 %v1716
    %v1809 = vpop.f32.mrf.mxu0
    %v1810 = vadd.f32 0.0, %v1809
    %v1811 = vpop.f32.mrf.mxu0
    %v1812 = vadd.f32 0.0, %v1811
    %1813 = vmatmul.bf16.gmra.mxu0 %v1717
    %v1814 = vpop.f32.mrf.mxu0
    %v1815 = vadd.f32 0.0, %v1814
    %v1816 = vpop.f32.mrf.mxu0
    %v1817 = vadd.f32 0.0, %v1816
    %1818 = vmatmul.bf16.gmra.mxu0 %v1718
    %v1819 = vpop.f32.mrf.mxu0
    %v1820 = vadd.f32 0.0, %v1819
    %v1821 = vpop.f32.mrf.mxu0
    %v1822 = vadd.f32 0.0, %v1821
    %1823 = vmatmul.bf16.gmra.mxu0 %v1719
    %v1824 = vpop.f32.mrf.mxu0
    %v1825 = vadd.f32 0.0, %v1824
    %v1826 = vpop.f32.mrf.mxu0
    %v1827 = vadd.f32 0.0, %v1826
    %1828 = vmatmul.bf16.gmra.mxu0 %v1720
    %v1829 = vpop.f32.mrf.mxu0
    %v1830 = vadd.f32 0.0, %v1829
    %v1831 = vpop.f32.mrf.mxu0
    %v1832 = vadd.f32 0.0, %v1831
    %1833 = vmatmul.bf16.gmra.mxu0 %v1721
    %v1834 = vpop.f32.mrf.mxu0
    %v1835 = vadd.f32 0.0, %v1834
    %v1836 = vpop.f32.mrf.mxu0
    %v1837 = vadd.f32 0.0, %v1836
    %1838 = vmatmul.bf16.gmra.mxu0 %v1722
    %v1839 = vpop.f32.mrf.mxu0
    %v1840 = vadd.f32 0.0, %v1839
    %v1841 = vpop.f32.mrf.mxu0
    %v1842 = vadd.f32 0.0, %v1841
    %1843 = vmatmul.bf16.gmra.mxu0 %v1723
    %v1844 = vpop.f32.mrf.mxu0
    %v1845 = vadd.f32 0.0, %v1844
    %v1846 = vpop.f32.mrf.mxu0
    %v1847 = vadd.f32 0.0, %v1846
    %1848 = vmatmul.bf16.gmra.mxu0 %v1724
    %v1849 = vpop.f32.mrf.mxu0
    %v1850 = vadd.f32 0.0, %v1849
    %v1851 = vpop.f32.mrf.mxu0
    %v1852 = vadd.f32 0.0, %v1851
    %1853 = vmatmul.bf16.gmra.mxu0 %v1725
    %v1854 = vpop.f32.mrf.mxu0
    %v1855 = vadd.f32 0.0, %v1854
    %v1856 = vpop.f32.mrf.mxu0
    %v1857 = vadd.f32 0.0, %v1856
    %1858 = vmatmul.bf16.gmra.mxu0 %v1726
    %v1859 = vpop.f32.mrf.mxu0
    %v1860 = vadd.f32 0.0, %v1859
    %v1861 = vpop.f32.mrf.mxu0
    %v1862 = vadd.f32 0.0, %v1861
    %1863 = vmatmul.bf16.gmra.mxu0 %v1727
    %v1864 = vpop.f32.mrf.mxu0
    %v1865 = vadd.f32 0.0, %v1864
    %v1866 = vpop.f32.mrf.mxu0
    %v1867 = vadd.f32 0.0, %v1866
    %1868 = vmatmul.bf16.gmra.mxu0 %v1728
    %v1869 = vpop.f32.mrf.mxu0
    %v1870 = vadd.f32 0.0, %v1869
    %v1871 = vpop.f32.mrf.mxu0
    %v1872 = vadd.f32 0.0, %v1871
    %1873 = vmatmul.bf16.gmra.mxu0 %v1729
    %v1874 = vpop.f32.mrf.mxu0
    %v1875 = vadd.f32 0.0, %v1874
    %v1876 = vpop.f32.mrf.mxu0
    %v1877 = vadd.f32 0.0, %v1876
    %1878 = vmatmul.bf16.gmra.mxu0 %v1730
    %v1879 = vpop.f32.mrf.mxu0
    %v1880 = vadd.f32 0.0, %v1879
    %v1881 = vpop.f32.mrf.mxu0
    %v1882 = vadd.f32 0.0, %v1881
    %1883 = vdwg.mxu0
    %v1884 = vmul.f32 %v1805, %v1805
    %v1885 = vmul.f32 %v1807, %v1807
    %v1886 = vmul.f32 %v1810, %v1810
    %v1887 = vmul.f32 %v1812, %v1812
    %v1888 = vmul.f32 %v1815, %v1815
    %v1889 = vmul.f32 %v1817, %v1817
    %v1890 = vmul.f32 %v1820, %v1820
    %v1891 = vmul.f32 %v1822, %v1822
    %v1892 = vmul.f32 %v1825, %v1825
    %v1893 = vmul.f32 %v1827, %v1827
    %v1894 = vmul.f32 %v1830, %v1830
    %v1895 = vmul.f32 %v1832, %v1832
    %v1896 = vmul.f32 %v1835, %v1835
    %v1897 = vmul.f32 %v1837, %v1837
    %v1898 = vmul.f32 %v1840, %v1840
    %v1899 = vmul.f32 %v1842, %v1842
    %v1900 = vmul.f32 %v1845, %v1845
    %v1901 = vmul.f32 %v1847, %v1847
    %v1902 = vmul.f32 %v1850, %v1850
    %v1903 = vmul.f32 %v1852, %v1852
    %v1904 = vmul.f32 %v1855, %v1855
    %v1905 = vmul.f32 %v1857, %v1857
    %v1906 = vmul.f32 %v1860, %v1860
    %v1907 = vmul.f32 %v1862, %v1862
    %v1908 = vmul.f32 %v1865, %v1865
    %v1909 = vmul.f32 %v1867, %v1867
    %v1910 = vmul.f32 %v1870, %v1870
    %v1911 = vmul.f32 %v1872, %v1872
    %v1912 = vmul.f32 %v1875, %v1875
    %v1913 = vmul.f32 %v1877, %v1877
    %v1914 = vmul.f32 %v1880, %v1880
    %v1915 = vmul.f32 %v1882, %v1882
    %1916 = vadd.xlane.f32.xlu0 %v1884
    %v1917 = vpop.xlane.xlu0 %1916
    %1918 = vadd.xlane.f32.xlu0 %v1885
    %v1919 = vpop.xlane.xlu0 %1918
    %1920 = vadd.xlane.f32.xlu0 %v1886
    %v1921 = vpop.xlane.xlu0 %1920
    %1922 = vadd.xlane.f32.xlu0 %v1887
    %v1923 = vpop.xlane.xlu0 %1922
    %1924 = vadd.xlane.f32.xlu0 %v1888
    %v1925 = vpop.xlane.xlu0 %1924
    %1926 = vadd.xlane.f32.xlu0 %v1889
    %v1927 = vpop.xlane.xlu0 %1926
    %1928 = vadd.xlane.f32.xlu0 %v1890
    %v1929 = vpop.xlane.xlu0 %1928
    %1930 = vadd.xlane.f32.xlu0 %v1891
    %v1931 = vpop.xlane.xlu0 %1930
    %1932 = vadd.xlane.f32.xlu0 %v1892
    %v1933 = vpop.xlane.xlu0 %1932
    %1934 = vadd.xlane.f32.xlu0 %v1893
    %v1935 = vpop.xlane.xlu0 %1934
    %1936 = vadd.xlane.f32.xlu0 %v1894
    %v1937 = vpop.xlane.xlu0 %1936
    %1938 = vadd.xlane.f32.xlu0 %v1895
    %v1939 = vpop.xlane.xlu0 %1938
    %1940 = vadd.xlane.f32.xlu0 %v1896
    %v1941 = vpop.xlane.xlu0 %1940
    %1942 = vadd.xlane.f32.xlu0 %v1897
    %v1943 = vpop.xlane.xlu0 %1942
    %1944 = vadd.xlane.f32.xlu0 %v1898
    %v1945 = vpop.xlane.xlu0 %1944
    %1946 = vadd.xlane.f32.xlu0 %v1899
    %v1947 = vpop.xlane.xlu0 %1946
    %1948 = vadd.xlane.f32.xlu0 %v1900
    %v1949 = vpop.xlane.xlu0 %1948
    %1950 = vadd.xlane.f32.xlu0 %v1901
    %v1951 = vpop.xlane.xlu0 %1950
    %1952 = vadd.xlane.f32.xlu0 %v1902
    %v1953 = vpop.xlane.xlu0 %1952
    %1954 = vadd.xlane.f32.xlu0 %v1903
    %v1955 = vpop.xlane.xlu0 %1954
    %1956 = vadd.xlane.f32.xlu0 %v1904
    %v1957 = vpop.xlane.xlu0 %1956
    %1958 = vadd.xlane.f32.xlu0 %v1905
    %v1959 = vpop.xlane.xlu0 %1958
    %1960 = vadd.xlane.f32.xlu0 %v1906
    %v1961 = vpop.xlane.xlu0 %1960
    %1962 = vadd.xlane.f32.xlu0 %v1907
    %v1963 = vpop.xlane.xlu0 %1962
    %1964 = vadd.xlane.f32.xlu0 %v1908
    %v1965 = vpop.xlane.xlu0 %1964
    %1966 = vadd.xlane.f32.xlu0 %v1909
    %v1967 = vpop.xlane.xlu0 %1966
    %1968 = vadd.xlane.f32.xlu0 %v1910
    %v1969 = vpop.xlane.xlu0 %1968
    %1970 = vadd.xlane.f32.xlu0 %v1911
    %v1971 = vpop.xlane.xlu0 %1970
    %1972 = vadd.xlane.f32.xlu0 %v1912
    %v1973 = vpop.xlane.xlu0 %1972
    %1974 = vadd.xlane.f32.xlu0 %v1913
    %v1975 = vpop.xlane.xlu0 %1974
    %1976 = vadd.xlane.f32.xlu0 %v1914
    %v1977 = vpop.xlane.xlu0 %1976
    %1978 = vadd.xlane.f32.xlu0 %v1915
    %v1979 = vpop.xlane.xlu0 %1978
    %v1980 = vmul.f32 %v1917, 0.0078125
    %v1981 = vmul.f32 %v1919, 0.0078125
    %v1982 = vmul.f32 %v1921, 0.0078125
    %v1983 = vmul.f32 %v1923, 0.0078125
    %v1984 = vmul.f32 %v1925, 0.0078125
    %v1985 = vmul.f32 %v1927, 0.0078125
    %v1986 = vmul.f32 %v1929, 0.0078125
    %v1987 = vmul.f32 %v1931, 0.0078125
    %v1988 = vmul.f32 %v1933, 0.0078125
    %v1989 = vmul.f32 %v1935, 0.0078125
    %v1990 = vmul.f32 %v1937, 0.0078125
    %v1991 = vmul.f32 %v1939, 0.0078125
    %v1992 = vmul.f32 %v1941, 0.0078125
    %v1993 = vmul.f32 %v1943, 0.0078125
    %v1994 = vmul.f32 %v1945, 0.0078125
    %v1995 = vmul.f32 %v1947, 0.0078125
    %v1996 = vmul.f32 %v1949, 0.0078125
    %v1997 = vmul.f32 %v1951, 0.0078125
    %v1998 = vmul.f32 %v1953, 0.0078125
    %v1999 = vmul.f32 %v1955, 0.0078125
    %v2000 = vmul.f32 %v1957, 0.0078125
    %v2001 = vmul.f32 %v1959, 0.0078125
    %v2002 = vmul.f32 %v1961, 0.0078125
    %v2003 = vmul.f32 %v1963, 0.0078125
    %v2004 = vmul.f32 %v1965, 0.0078125
    %v2005 = vmul.f32 %v1967, 0.0078125
    %v2006 = vmul.f32 %v1969, 0.0078125
    %v2007 = vmul.f32 %v1971, 0.0078125
    %v2008 = vmul.f32 %v1973, 0.0078125
    %v2009 = vmul.f32 %v1975, 0.0078125
    %v2010 = vmul.f32 %v1977, 0.0078125
    %v2011 = vmul.f32 %v1979, 0.0078125
    %v2012 = vadd.f32 %v1980, 1e-08
    %v2013 = vadd.f32 %v1981, 1e-08
    %v2014 = vadd.f32 %v1982, 1e-08
    %v2015 = vadd.f32 %v1983, 1e-08
    %v2016 = vadd.f32 %v1984, 1e-08
    %v2017 = vadd.f32 %v1985, 1e-08
    %v2018 = vadd.f32 %v1986, 1e-08
    %v2019 = vadd.f32 %v1987, 1e-08
    %v2020 = vadd.f32 %v1988, 1e-08
    %v2021 = vadd.f32 %v1989, 1e-08
    %v2022 = vadd.f32 %v1990, 1e-08
    %v2023 = vadd.f32 %v1991, 1e-08
    %v2024 = vadd.f32 %v1992, 1e-08
    %v2025 = vadd.f32 %v1993, 1e-08
    %v2026 = vadd.f32 %v1994, 1e-08
    %v2027 = vadd.f32 %v1995, 1e-08
    %v2028 = vadd.f32 %v1996, 1e-08
    %v2029 = vadd.f32 %v1997, 1e-08
    %v2030 = vadd.f32 %v1998, 1e-08
    %v2031 = vadd.f32 %v1999, 1e-08
    %v2032 = vadd.f32 %v2000, 1e-08
    %v2033 = vadd.f32 %v2001, 1e-08
    %v2034 = vadd.f32 %v2002, 1e-08
    %v2035 = vadd.f32 %v2003, 1e-08
    %v2036 = vadd.f32 %v2004, 1e-08
    %v2037 = vadd.f32 %v2005, 1e-08
    %v2038 = vadd.f32 %v2006, 1e-08
    %v2039 = vadd.f32 %v2007, 1e-08
    %v2040 = vadd.f32 %v2008, 1e-08
    %v2041 = vadd.f32 %v2009, 1e-08
    %v2042 = vadd.f32 %v2010, 1e-08
    %v2043 = vadd.f32 %v2011, 1e-08
    %v2044 = vrsqrt.pop %v2012
    %v2045 = vmul.f32 %v2044, %v2012
    %v2046 = vmul.f32 %v2045, %v2044
    %v2047 = vmul.f32 0.5, %v2046
    %v2048 = vsub.f32 1.5, %v2047
    %v2049 = vmul.f32 %v2044, %v2048
    %vm2050 = vweird.f32 %v2012
    %vm2051 = vweird.f32 %v2044
    %vm2052 = vmor %vm2050, %vm2051
    %v2053 = vsel %vm2052, %v2044, %v2049
    %v2054 = vrsqrt.pop %v2013
    %v2055 = vmul.f32 %v2054, %v2013
    %v2056 = vmul.f32 %v2055, %v2054
    %v2057 = vmul.f32 0.5, %v2056
    %v2058 = vsub.f32 1.5, %v2057
    %v2059 = vmul.f32 %v2054, %v2058
    %vm2060 = vweird.f32 %v2013
    %vm2061 = vweird.f32 %v2054
    %vm2062 = vmor %vm2060, %vm2061
    %v2063 = vsel %vm2062, %v2054, %v2059
    %v2064 = vrsqrt.pop %v2014
    %v2065 = vmul.f32 %v2064, %v2014
    %v2066 = vmul.f32 %v2065, %v2064
    %v2067 = vmul.f32 0.5, %v2066
    %v2068 = vsub.f32 1.5, %v2067
    %v2069 = vmul.f32 %v2064, %v2068
    %vm2070 = vweird.f32 %v2014
    %vm2071 = vweird.f32 %v2064
    %vm2072 = vmor %vm2070, %vm2071
    %v2073 = vsel %vm2072, %v2064, %v2069
    %v2074 = vrsqrt.pop %v2015
    %v2075 = vmul.f32 %v2074, %v2015
    %v2076 = vmul.f32 %v2075, %v2074
    %v2077 = vmul.f32 0.5, %v2076
    %v2078 = vsub.f32 1.5, %v2077
    %v2079 = vmul.f32 %v2074, %v2078
    %vm2080 = vweird.f32 %v2015
    %vm2081 = vweird.f32 %v2074
    %vm2082 = vmor %vm2080, %vm2081
    %v2083 = vsel %vm2082, %v2074, %v2079
    %v2084 = vrsqrt.pop %v2016
    %v2085 = vmul.f32 %v2084, %v2016
    %v2086 = vmul.f32 %v2085, %v2084
    %v2087 = vmul.f32 0.5, %v2086
    %v2088 = vsub.f32 1.5, %v2087
    %v2089 = vmul.f32 %v2084, %v2088
    %vm2090 = vweird.f32 %v2016
    %vm2091 = vweird.f32 %v2084
    %vm2092 = vmor %vm2090, %vm2091
    %v2093 = vsel %vm2092, %v2084, %v2089
    %v2094 = vrsqrt.pop %v2017
    %v2095 = vmul.f32 %v2094, %v2017
    %v2096 = vmul.f32 %v2095, %v2094
    %v2097 = vmul.f32 0.5, %v2096
    %v2098 = vsub.f32 1.5, %v2097
    %v2099 = vmul.f32 %v2094, %v2098
    %vm2100 = vweird.f32 %v2017
    %vm2101 = vweird.f32 %v2094
    %vm2102 = vmor %vm2100, %vm2101
    %v2103 = vsel %vm2102, %v2094, %v2099
    %v2104 = vrsqrt.pop %v2018
    %v2105 = vmul.f32 %v2104, %v2018
    %v2106 = vmul.f32 %v2105, %v2104
    %v2107 = vmul.f32 0.5, %v2106
    %v2108 = vsub.f32 1.5, %v2107
    %v2109 = vmul.f32 %v2104, %v2108
    %vm2110 = vweird.f32 %v2018
    %vm2111 = vweird.f32 %v2104
    %vm2112 = vmor %vm2110, %vm2111
    %v2113 = vsel %vm2112, %v2104, %v2109
    %v2114 = vrsqrt.pop %v2019
    %v2115 = vmul.f32 %v2114, %v2019
    %v2116 = vmul.f32 %v2115, %v2114
    %v2117 = vmul.f32 0.5, %v2116
    %v2118 = vsub.f32 1.5, %v2117
    %v2119 = vmul.f32 %v2114, %v2118
    %vm2120 = vweird.f32 %v2019
    %vm2121 = vweird.f32 %v2114
    %vm2122 = vmor %vm2120, %vm2121
    %v2123 = vsel %vm2122, %v2114, %v2119
    %v2124 = vrsqrt.pop %v2020
    %v2125 = vmul.f32 %v2124, %v2020
    %v2126 = vmul.f32 %v2125, %v2124
    %v2127 = vmul.f32 0.5, %v2126
    %v2128 = vsub.f32 1.5, %v2127
    %v2129 = vmul.f32 %v2124, %v2128
    %vm2130 = vweird.f32 %v2020
    %vm2131 = vweird.f32 %v2124
    %vm2132 = vmor %vm2130, %vm2131
    %v2133 = vsel %vm2132, %v2124, %v2129
    %v2134 = vrsqrt.pop %v2021
    %v2135 = vmul.f32 %v2134, %v2021
    %v2136 = vmul.f32 %v2135, %v2134
    %v2137 = vmul.f32 0.5, %v2136
    %v2138 = vsub.f32 1.5, %v2137
    %v2139 = vmul.f32 %v2134, %v2138
    %vm2140 = vweird.f32 %v2021
    %vm2141 = vweird.f32 %v2134
    %vm2142 = vmor %vm2140, %vm2141
    %v2143 = vsel %vm2142, %v2134, %v2139
    %v2144 = vrsqrt.pop %v2022
    %v2145 = vmul.f32 %v2144, %v2022
    %v2146 = vmul.f32 %v2145, %v2144
    %v2147 = vmul.f32 0.5, %v2146
    %v2148 = vsub.f32 1.5, %v2147
    %v2149 = vmul.f32 %v2144, %v2148
    %vm2150 = vweird.f32 %v2022
    %vm2151 = vweird.f32 %v2144
    %vm2152 = vmor %vm2150, %vm2151
    %v2153 = vsel %vm2152, %v2144, %v2149
    %v2154 = vrsqrt.pop %v2023
    %v2155 = vmul.f32 %v2154, %v2023
    %v2156 = vmul.f32 %v2155, %v2154
    %v2157 = vmul.f32 0.5, %v2156
    %v2158 = vsub.f32 1.5, %v2157
    %v2159 = vmul.f32 %v2154, %v2158
    %vm2160 = vweird.f32 %v2023
    %vm2161 = vweird.f32 %v2154
    %vm2162 = vmor %vm2160, %vm2161
    %v2163 = vsel %vm2162, %v2154, %v2159
    %v2164 = vrsqrt.pop %v2024
    %v2165 = vmul.f32 %v2164, %v2024
    %v2166 = vmul.f32 %v2165, %v2164
    %v2167 = vmul.f32 0.5, %v2166
    %v2168 = vsub.f32 1.5, %v2167
    %v2169 = vmul.f32 %v2164, %v2168
    %vm2170 = vweird.f32 %v2024
    %vm2171 = vweird.f32 %v2164
    %vm2172 = vmor %vm2170, %vm2171
    %v2173 = vsel %vm2172, %v2164, %v2169
    %v2174 = vrsqrt.pop %v2025
    %v2175 = vmul.f32 %v2174, %v2025
    %v2176 = vmul.f32 %v2175, %v2174
    %v2177 = vmul.f32 0.5, %v2176
    %v2178 = vsub.f32 1.5, %v2177
    %v2179 = vmul.f32 %v2174, %v2178
    %vm2180 = vweird.f32 %v2025
    %vm2181 = vweird.f32 %v2174
    %vm2182 = vmor %vm2180, %vm2181
    %v2183 = vsel %vm2182, %v2174, %v2179
    %v2184 = vrsqrt.pop %v2026
    %v2185 = vmul.f32 %v2184, %v2026
    %v2186 = vmul.f32 %v2185, %v2184
    %v2187 = vmul.f32 0.5, %v2186
    %v2188 = vsub.f32 1.5, %v2187
    %v2189 = vmul.f32 %v2184, %v2188
    %vm2190 = vweird.f32 %v2026
    %vm2191 = vweird.f32 %v2184
    %vm2192 = vmor %vm2190, %vm2191
    %v2193 = vsel %vm2192, %v2184, %v2189
    %v2194 = vrsqrt.pop %v2027
    %v2195 = vmul.f32 %v2194, %v2027
    %v2196 = vmul.f32 %v2195, %v2194
    %v2197 = vmul.f32 0.5, %v2196
    %v2198 = vsub.f32 1.5, %v2197
    %v2199 = vmul.f32 %v2194, %v2198
    %vm2200 = vweird.f32 %v2027
    %vm2201 = vweird.f32 %v2194
    %vm2202 = vmor %vm2200, %vm2201
    %v2203 = vsel %vm2202, %v2194, %v2199
    %v2204 = vrsqrt.pop %v2028
    %v2205 = vmul.f32 %v2204, %v2028
    %v2206 = vmul.f32 %v2205, %v2204
    %v2207 = vmul.f32 0.5, %v2206
    %v2208 = vsub.f32 1.5, %v2207
    %v2209 = vmul.f32 %v2204, %v2208
    %vm2210 = vweird.f32 %v2028
    %vm2211 = vweird.f32 %v2204
    %vm2212 = vmor %vm2210, %vm2211
    %v2213 = vsel %vm2212, %v2204, %v2209
    %v2214 = vrsqrt.pop %v2029
    %v2215 = vmul.f32 %v2214, %v2029
    %v2216 = vmul.f32 %v2215, %v2214
    %v2217 = vmul.f32 0.5, %v2216
    %v2218 = vsub.f32 1.5, %v2217
    %v2219 = vmul.f32 %v2214, %v2218
    %vm2220 = vweird.f32 %v2029
    %vm2221 = vweird.f32 %v2214
    %vm2222 = vmor %vm2220, %vm2221
    %v2223 = vsel %vm2222, %v2214, %v2219
    %v2224 = vrsqrt.pop %v2030
    %v2225 = vmul.f32 %v2224, %v2030
    %v2226 = vmul.f32 %v2225, %v2224
    %v2227 = vmul.f32 0.5, %v2226
    %v2228 = vsub.f32 1.5, %v2227
    %v2229 = vmul.f32 %v2224, %v2228
    %vm2230 = vweird.f32 %v2030
    %vm2231 = vweird.f32 %v2224
    %vm2232 = vmor %vm2230, %vm2231
    %v2233 = vsel %vm2232, %v2224, %v2229
    %v2234 = vrsqrt.pop %v2031
    %v2235 = vmul.f32 %v2234, %v2031
    %v2236 = vmul.f32 %v2235, %v2234
    %v2237 = vmul.f32 0.5, %v2236
    %v2238 = vsub.f32 1.5, %v2237
    %v2239 = vmul.f32 %v2234, %v2238
    %vm2240 = vweird.f32 %v2031
    %vm2241 = vweird.f32 %v2234
    %vm2242 = vmor %vm2240, %vm2241
    %v2243 = vsel %vm2242, %v2234, %v2239
    %v2244 = vrsqrt.pop %v2032
    %v2245 = vmul.f32 %v2244, %v2032
    %v2246 = vmul.f32 %v2245, %v2244
    %v2247 = vmul.f32 0.5, %v2246
    %v2248 = vsub.f32 1.5, %v2247
    %v2249 = vmul.f32 %v2244, %v2248
    %vm2250 = vweird.f32 %v2032
    %vm2251 = vweird.f32 %v2244
    %vm2252 = vmor %vm2250, %vm2251
    %v2253 = vsel %vm2252, %v2244, %v2249
    %v2254 = vrsqrt.pop %v2033
    %v2255 = vmul.f32 %v2254, %v2033
    %v2256 = vmul.f32 %v2255, %v2254
    %v2257 = vmul.f32 0.5, %v2256
    %v2258 = vsub.f32 1.5, %v2257
    %v2259 = vmul.f32 %v2254, %v2258
    %vm2260 = vweird.f32 %v2033
    %vm2261 = vweird.f32 %v2254
    %vm2262 = vmor %vm2260, %vm2261
    %v2263 = vsel %vm2262, %v2254, %v2259
    %v2264 = vrsqrt.pop %v2034
    %v2265 = vmul.f32 %v2264, %v2034
    %v2266 = vmul.f32 %v2265, %v2264
    %v2267 = vmul.f32 0.5, %v2266
    %v2268 = vsub.f32 1.5, %v2267
    %v2269 = vmul.f32 %v2264, %v2268
    %vm2270 = vweird.f32 %v2034
    %vm2271 = vweird.f32 %v2264
    %vm2272 = vmor %vm2270, %vm2271
    %v2273 = vsel %vm2272, %v2264, %v2269
    %v2274 = vrsqrt.pop %v2035
    %v2275 = vmul.f32 %v2274, %v2035
    %v2276 = vmul.f32 %v2275, %v2274
    %v2277 = vmul.f32 0.5, %v2276
    %v2278 = vsub.f32 1.5, %v2277
    %v2279 = vmul.f32 %v2274, %v2278
    %vm2280 = vweird.f32 %v2035
    %vm2281 = vweird.f32 %v2274
    %vm2282 = vmor %vm2280, %vm2281
    %v2283 = vsel %vm2282, %v2274, %v2279
    %v2284 = vrsqrt.pop %v2036
    %v2285 = vmul.f32 %v2284, %v2036
    %v2286 = vmul.f32 %v2285, %v2284
    %v2287 = vmul.f32 0.5, %v2286
    %v2288 = vsub.f32 1.5, %v2287
    %v2289 = vmul.f32 %v2284, %v2288
    %vm2290 = vweird.f32 %v2036
    %vm2291 = vweird.f32 %v2284
    %vm2292 = vmor %vm2290, %vm2291
    %v2293 = vsel %vm2292, %v2284, %v2289
    %v2294 = vrsqrt.pop %v2037
    %v2295 = vmul.f32 %v2294, %v2037
    %v2296 = vmul.f32 %v2295, %v2294
    %v2297 = vmul.f32 0.5, %v2296
    %v2298 = vsub.f32 1.5, %v2297
    %v2299 = vmul.f32 %v2294, %v2298
    %vm2300 = vweird.f32 %v2037
    %vm2301 = vweird.f32 %v2294
    %vm2302 = vmor %vm2300, %vm2301
    %v2303 = vsel %vm2302, %v2294, %v2299
    %v2304 = vrsqrt.pop %v2038
    %v2305 = vmul.f32 %v2304, %v2038
    %v2306 = vmul.f32 %v2305, %v2304
    %v2307 = vmul.f32 0.5, %v2306
    %v2308 = vsub.f32 1.5, %v2307
    %v2309 = vmul.f32 %v2304, %v2308
    %vm2310 = vweird.f32 %v2038
    %vm2311 = vweird.f32 %v2304
    %vm2312 = vmor %vm2310, %vm2311
    %v2313 = vsel %vm2312, %v2304, %v2309
    %v2314 = vrsqrt.pop %v2039
    %v2315 = vmul.f32 %v2314, %v2039
    %v2316 = vmul.f32 %v2315, %v2314
    %v2317 = vmul.f32 0.5, %v2316
    %v2318 = vsub.f32 1.5, %v2317
    %v2319 = vmul.f32 %v2314, %v2318
    %vm2320 = vweird.f32 %v2039
    %vm2321 = vweird.f32 %v2314
    %vm2322 = vmor %vm2320, %vm2321
    %v2323 = vsel %vm2322, %v2314, %v2319
    %v2324 = vrsqrt.pop %v2040
    %v2325 = vmul.f32 %v2324, %v2040
    %v2326 = vmul.f32 %v2325, %v2324
    %v2327 = vmul.f32 0.5, %v2326
    %v2328 = vsub.f32 1.5, %v2327
    %v2329 = vmul.f32 %v2324, %v2328
    %vm2330 = vweird.f32 %v2040
    %vm2331 = vweird.f32 %v2324
    %vm2332 = vmor %vm2330, %vm2331
    %v2333 = vsel %vm2332, %v2324, %v2329
    %v2334 = vrsqrt.pop %v2041
    %v2335 = vmul.f32 %v2334, %v2041
    %v2336 = vmul.f32 %v2335, %v2334
    %v2337 = vmul.f32 0.5, %v2336
    %v2338 = vsub.f32 1.5, %v2337
    %v2339 = vmul.f32 %v2334, %v2338
    %vm2340 = vweird.f32 %v2041
    %vm2341 = vweird.f32 %v2334
    %vm2342 = vmor %vm2340, %vm2341
    %v2343 = vsel %vm2342, %v2334, %v2339
    %v2344 = vrsqrt.pop %v2042
    %v2345 = vmul.f32 %v2344, %v2042
    %v2346 = vmul.f32 %v2345, %v2344
    %v2347 = vmul.f32 0.5, %v2346
    %v2348 = vsub.f32 1.5, %v2347
    %v2349 = vmul.f32 %v2344, %v2348
    %vm2350 = vweird.f32 %v2042
    %vm2351 = vweird.f32 %v2344
    %vm2352 = vmor %vm2350, %vm2351
    %v2353 = vsel %vm2352, %v2344, %v2349
    %v2354 = vrsqrt.pop %v2043
    %v2355 = vmul.f32 %v2354, %v2043
    %v2356 = vmul.f32 %v2355, %v2354
    %v2357 = vmul.f32 0.5, %v2356
    %v2358 = vsub.f32 1.5, %v2357
    %v2359 = vmul.f32 %v2354, %v2358
    %vm2360 = vweird.f32 %v2043
    %vm2361 = vweird.f32 %v2354
    %vm2362 = vmor %vm2360, %vm2361
    %v2363 = vsel %vm2362, %v2354, %v2359
    %v2364 = vld [vmem:[%s5] sm:$0x1]
    %v2366 = vperm.slane %v2364, 0
    %v2368 = vmul.f32 %v2366, %v2053
    %v2369 = vmul.f32 %v2366, %v2063
    %v2370 = vmul.f32 %v2366, %v2073
    %v2371 = vmul.f32 %v2366, %v2083
    %v2372 = vmul.f32 %v2366, %v2093
    %v2373 = vmul.f32 %v2366, %v2103
    %v2374 = vmul.f32 %v2366, %v2113
    %v2375 = vmul.f32 %v2366, %v2123
    %v2376 = vmul.f32 %v2366, %v2133
    %v2377 = vmul.f32 %v2366, %v2143
    %v2378 = vmul.f32 %v2366, %v2153
    %v2379 = vmul.f32 %v2366, %v2163
    %v2380 = vmul.f32 %v2366, %v2173
    %v2381 = vmul.f32 %v2366, %v2183
    %v2382 = vmul.f32 %v2366, %v2193
    %v2383 = vmul.f32 %v2366, %v2203
    %v2384 = vmul.f32 %v2366, %v2213
    %v2385 = vmul.f32 %v2366, %v2223
    %v2386 = vmul.f32 %v2366, %v2233
    %v2387 = vmul.f32 %v2366, %v2243
    %v2388 = vmul.f32 %v2366, %v2253
    %v2389 = vmul.f32 %v2366, %v2263
    %v2390 = vmul.f32 %v2366, %v2273
    %v2391 = vmul.f32 %v2366, %v2283
    %v2392 = vmul.f32 %v2366, %v2293
    %v2393 = vmul.f32 %v2366, %v2303
    %v2394 = vmul.f32 %v2366, %v2313
    %v2395 = vmul.f32 %v2366, %v2323
    %v2396 = vmul.f32 %v2366, %v2333
    %v2397 = vmul.f32 %v2366, %v2343
    %v2398 = vmul.f32 %v2366, %v2353
    %v2399 = vmul.f32 %v2366, %v2363
    %v2400 = vmul.f32 %v1805, %v2368
    %v2401 = vmul.f32 %v1807, %v2369
    %v2402 = vmul.f32 %v1810, %v2370
    %v2403 = vmul.f32 %v1812, %v2371
    %v2404 = vmul.f32 %v1815, %v2372
    %v2405 = vmul.f32 %v1817, %v2373
    %v2406 = vmul.f32 %v1820, %v2374
    %v2407 = vmul.f32 %v1822, %v2375
    %v2408 = vmul.f32 %v1825, %v2376
    %v2409 = vmul.f32 %v1827, %v2377
    %v2410 = vmul.f32 %v1830, %v2378
    %v2411 = vmul.f32 %v1832, %v2379
    %v2412 = vmul.f32 %v1835, %v2380
    %v2413 = vmul.f32 %v1837, %v2381
    %v2414 = vmul.f32 %v1840, %v2382
    %v2415 = vmul.f32 %v1842, %v2383
    %v2416 = vmul.f32 %v1845, %v2384
    %v2417 = vmul.f32 %v1847, %v2385
    %v2418 = vmul.f32 %v1850, %v2386
    %v2419 = vmul.f32 %v1852, %v2387
    %v2420 = vmul.f32 %v1855, %v2388
    %v2421 = vmul.f32 %v1857, %v2389
    %v2422 = vmul.f32 %v1860, %v2390
    %v2423 = vmul.f32 %v1862, %v2391
    %v2424 = vmul.f32 %v1865, %v2392
    %v2425 = vmul.f32 %v1867, %v2393
    %v2426 = vmul.f32 %v1870, %v2394
    %v2427 = vmul.f32 %v1872, %v2395
    %v2428 = vmul.f32 %v1875, %v2396
    %v2429 = vmul.f32 %v1877, %v2397
    %v2430 = vmul.f32 %v1880, %v2398
    %v2431 = vmul.f32 %v1882, %v2399
    %v2432 = vmax.f32 %v2400, 0.0
    %v2433 = vmax.f32 %v2401, 0.0
    %v2434 = vmax.f32 %v2402, 0.0
    %v2435 = vmax.f32 %v2403, 0.0
    %v2436 = vmax.f32 %v2404, 0.0
    %v2437 = vmax.f32 %v2405, 0.0
    %v2438 = vmax.f32 %v2406, 0.0
    %v2439 = vmax.f32 %v2407, 0.0
    %v2440 = vmax.f32 %v2408, 0.0
    %v2441 = vmax.f32 %v2409, 0.0
    %v2442 = vmax.f32 %v2410, 0.0
    %v2443 = vmax.f32 %v2411, 0.0
    %v2444 = vmax.f32 %v2412, 0.0
    %v2445 = vmax.f32 %v2413, 0.0
    %v2446 = vmax.f32 %v2414, 0.0
    %v2447 = vmax.f32 %v2415, 0.0
    %v2448 = vmax.f32 %v2416, 0.0
    %v2449 = vmax.f32 %v2417, 0.0
    %v2450 = vmax.f32 %v2418, 0.0
    %v2451 = vmax.f32 %v2419, 0.0
    %v2452 = vmax.f32 %v2420, 0.0
    %v2453 = vmax.f32 %v2421, 0.0
    %v2454 = vmax.f32 %v2422, 0.0
    %v2455 = vmax.f32 %v2423, 0.0
    %v2456 = vmax.f32 %v2424, 0.0
    %v2457 = vmax.f32 %v2425, 0.0
    %v2458 = vmax.f32 %v2426, 0.0
    %v2459 = vmax.f32 %v2427, 0.0
    %v2460 = vmax.f32 %v2428, 0.0
    %v2461 = vmax.f32 %v2429, 0.0
    %v2462 = vmax.f32 %v2430, 0.0
    %v2463 = vmax.f32 %v2431, 0.0
    %vm2464 = vcmp.ne.f32.partialorder %v2400, %v2400
    %vm2465 = vcmp.ne.f32.partialorder %v2401, %v2401
    %vm2466 = vcmp.ne.f32.partialorder %v2402, %v2402
    %vm2467 = vcmp.ne.f32.partialorder %v2403, %v2403
    %vm2468 = vcmp.ne.f32.partialorder %v2404, %v2404
    %vm2469 = vcmp.ne.f32.partialorder %v2405, %v2405
    %vm2470 = vcmp.ne.f32.partialorder %v2406, %v2406
    %vm2471 = vcmp.ne.f32.partialorder %v2407, %v2407
    %vm2472 = vcmp.ne.f32.partialorder %v2408, %v2408
    %vm2473 = vcmp.ne.f32.partialorder %v2409, %v2409
    %vm2474 = vcmp.ne.f32.partialorder %v2410, %v2410
    %vm2475 = vcmp.ne.f32.partialorder %v2411, %v2411
    %vm2476 = vcmp.ne.f32.partialorder %v2412, %v2412
    %vm2477 = vcmp.ne.f32.partialorder %v2413, %v2413
    %vm2478 = vcmp.ne.f32.partialorder %v2414, %v2414
    %vm2479 = vcmp.ne.f32.partialorder %v2415, %v2415
    %vm2480 = vcmp.ne.f32.partialorder %v2416, %v2416
    %vm2481 = vcmp.ne.f32.partialorder %v2417, %v2417
    %vm2482 = vcmp.ne.f32.partialorder %v2418, %v2418
    %vm2483 = vcmp.ne.f32.partialorder %v2419, %v2419
    %vm2484 = vcmp.ne.f32.partialorder %v2420, %v2420
    %vm2485 = vcmp.ne.f32.partialorder %v2421, %v2421
    %vm2486 = vcmp.ne.f32.partialorder %v2422, %v2422
    %vm2487 = vcmp.ne.f32.partialorder %v2423, %v2423
    %vm2488 = vcmp.ne.f32.partialorder %v2424, %v2424
    %vm2489 = vcmp.ne.f32.partialorder %v2425, %v2425
    %vm2490 = vcmp.ne.f32.partialorder %v2426, %v2426
    %vm2491 = vcmp.ne.f32.partialorder %v2427, %v2427
    %vm2492 = vcmp.ne.f32.partialorder %v2428, %v2428
    %vm2493 = vcmp.ne.f32.partialorder %v2429, %v2429
    %vm2494 = vcmp.ne.f32.partialorder %v2430, %v2430
    %vm2495 = vcmp.ne.f32.partialorder %v2431, %v2431
    %v2496 = vadd.f32 %v2400, 0.0
    %v2497 = vadd.f32 %v2401, 0.0
    %v2498 = vadd.f32 %v2402, 0.0
    %v2499 = vadd.f32 %v2403, 0.0
    %v2500 = vadd.f32 %v2404, 0.0
    %v2501 = vadd.f32 %v2405, 0.0
    %v2502 = vadd.f32 %v2406, 0.0
    %v2503 = vadd.f32 %v2407, 0.0
    %v2504 = vadd.f32 %v2408, 0.0
    %v2505 = vadd.f32 %v2409, 0.0
    %v2506 = vadd.f32 %v2410, 0.0
    %v2507 = vadd.f32 %v2411, 0.0
    %v2508 = vadd.f32 %v2412, 0.0
    %v2509 = vadd.f32 %v2413, 0.0
    %v2510 = vadd.f32 %v2414, 0.0
    %v2511 = vadd.f32 %v2415, 0.0
    %v2512 = vadd.f32 %v2416, 0.0
    %v2513 = vadd.f32 %v2417, 0.0
    %v2514 = vadd.f32 %v2418, 0.0
    %v2515 = vadd.f32 %v2419, 0.0
    %v2516 = vadd.f32 %v2420, 0.0
    %v2517 = vadd.f32 %v2421, 0.0
    %v2518 = vadd.f32 %v2422, 0.0
    %v2519 = vadd.f32 %v2423, 0.0
    %v2520 = vadd.f32 %v2424, 0.0
    %v2521 = vadd.f32 %v2425, 0.0
    %v2522 = vadd.f32 %v2426, 0.0
    %v2523 = vadd.f32 %v2427, 0.0
    %v2524 = vadd.f32 %v2428, 0.0
    %v2525 = vadd.f32 %v2429, 0.0
    %v2526 = vadd.f32 %v2430, 0.0
    %v2527 = vadd.f32 %v2431, 0.0
    %v2528 = vand.u32 2147483647, %v2400
    %v2529 = vand.u32 2147483647, %v2401
    %v2530 = vand.u32 2147483647, %v2402
    %v2531 = vand.u32 2147483647, %v2403
    %v2532 = vand.u32 2147483647, %v2404
    %v2533 = vand.u32 2147483647, %v2405
    %v2534 = vand.u32 2147483647, %v2406
    %v2535 = vand.u32 2147483647, %v2407
    %v2536 = vand.u32 2147483647, %v2408
    %v2537 = vand.u32 2147483647, %v2409
    %v2538 = vand.u32 2147483647, %v2410
    %v2539 = vand.u32 2147483647, %v2411
    %v2540 = vand.u32 2147483647, %v2412
    %v2541 = vand.u32 2147483647, %v2413
    %v2542 = vand.u32 2147483647, %v2414
    %v2543 = vand.u32 2147483647, %v2415
    %v2544 = vand.u32 2147483647, %v2416
    %v2545 = vand.u32 2147483647, %v2417
    %v2546 = vand.u32 2147483647, %v2418
    %v2547 = vand.u32 2147483647, %v2419
    %v2548 = vand.u32 2147483647, %v2420
    %v2549 = vand.u32 2147483647, %v2421
    %v2550 = vand.u32 2147483647, %v2422
    %v2551 = vand.u32 2147483647, %v2423
    %v2552 = vand.u32 2147483647, %v2424
    %v2553 = vand.u32 2147483647, %v2425
    %v2554 = vand.u32 2147483647, %v2426
    %v2555 = vand.u32 2147483647, %v2427
    %v2556 = vand.u32 2147483647, %v2428
    %v2557 = vand.u32 2147483647, %v2429
    %v2558 = vand.u32 2147483647, %v2430
    %v2559 = vand.u32 2147483647, %v2431
    %v2560 = vsub.f32 0.0, %v2528
    %v2561 = vsub.f32 0.0, %v2529
    %v2562 = vsub.f32 0.0, %v2530
    %v2563 = vsub.f32 0.0, %v2531
    %v2564 = vsub.f32 0.0, %v2532
    %v2565 = vsub.f32 0.0, %v2533
    %v2566 = vsub.f32 0.0, %v2534
    %v2567 = vsub.f32 0.0, %v2535
    %v2568 = vsub.f32 0.0, %v2536
    %v2569 = vsub.f32 0.0, %v2537
    %v2570 = vsub.f32 0.0, %v2538
    %v2571 = vsub.f32 0.0, %v2539
    %v2572 = vsub.f32 0.0, %v2540
    %v2573 = vsub.f32 0.0, %v2541
    %v2574 = vsub.f32 0.0, %v2542
    %v2575 = vsub.f32 0.0, %v2543
    %v2576 = vsub.f32 0.0, %v2544
    %v2577 = vsub.f32 0.0, %v2545
    %v2578 = vsub.f32 0.0, %v2546
    %v2579 = vsub.f32 0.0, %v2547
    %v2580 = vsub.f32 0.0, %v2548
    %v2581 = vsub.f32 0.0, %v2549
    %v2582 = vsub.f32 0.0, %v2550
    %v2583 = vsub.f32 0.0, %v2551
    %v2584 = vsub.f32 0.0, %v2552
    %v2585 = vsub.f32 0.0, %v2553
    %v2586 = vsub.f32 0.0, %v2554
    %v2587 = vsub.f32 0.0, %v2555
    %v2588 = vsub.f32 0.0, %v2556
    %v2589 = vsub.f32 0.0, %v2557
    %v2590 = vsub.f32 0.0, %v2558
    %v2591 = vsub.f32 0.0, %v2559
    %v2592 = vmul.f32 %v2560, 1.442695
    %v2593 = vpow.pop %v2592
    %v2594 = vmul.f32 %v2561, 1.442695
    %v2595 = vpow.pop %v2594
    %v2596 = vmul.f32 %v2562, 1.442695
    %v2597 = vpow.pop %v2596
    %v2598 = vmul.f32 %v2563, 1.442695
    %v2599 = vpow.pop %v2598
    %v2600 = vmul.f32 %v2564, 1.442695
    %v2601 = vpow.pop %v2600
    %v2602 = vmul.f32 %v2565, 1.442695
    %v2603 = vpow.pop %v2602
    %v2604 = vmul.f32 %v2566, 1.442695
    %v2605 = vpow.pop %v2604
    %v2606 = vmul.f32 %v2567, 1.442695
    %v2607 = vpow.pop %v2606
    %v2608 = vmul.f32 %v2568, 1.442695
    %v2609 = vpow.pop %v2608
    %v2610 = vmul.f32 %v2569, 1.442695
    %v2611 = vpow.pop %v2610
    %v2612 = vmul.f32 %v2570, 1.442695
    %v2613 = vpow.pop %v2612
    %v2614 = vmul.f32 %v2571, 1.442695
    %v2615 = vpow.pop %v2614
    %v2616 = vmul.f32 %v2572, 1.442695
    %v2617 = vpow.pop %v2616
    %v2618 = vmul.f32 %v2573, 1.442695
    %v2619 = vpow.pop %v2618
    %v2620 = vmul.f32 %v2574, 1.442695
    %v2621 = vpow.pop %v2620
    %v2622 = vmul.f32 %v2575, 1.442695
    %v2623 = vpow.pop %v2622
    %v2624 = vmul.f32 %v2576, 1.442695
    %v2625 = vpow.pop %v2624
    %v2626 = vmul.f32 %v2577, 1.442695
    %v2627 = vpow.pop %v2626
    %v2628 = vmul.f32 %v2578, 1.442695
    %v2629 = vpow.pop %v2628
    %v2630 = vmul.f32 %v2579, 1.442695
    %v2631 = vpow.pop %v2630
    %v2632 = vmul.f32 %v2580, 1.442695
    %v2633 = vpow.pop %v2632
    %v2634 = vmul.f32 %v2581, 1.442695
    %v2635 = vpow.pop %v2634
    %v2636 = vmul.f32 %v2582, 1.442695
    %v2637 = vpow.pop %v2636
    %v2638 = vmul.f32 %v2583, 1.442695
    %v2639 = vpow.pop %v2638
    %v2640 = vmul.f32 %v2584, 1.442695
    %v2641 = vpow.pop %v2640
    %v2642 = vmul.f32 %v2585, 1.442695
    %v2643 = vpow.pop %v2642
    %v2644 = vmul.f32 %v2586, 1.442695
    %v2645 = vpow.pop %v2644
    %v2646 = vmul.f32 %v2587, 1.442695
    %v2647 = vpow.pop %v2646
    %v2648 = vmul.f32 %v2588, 1.442695
    %v2649 = vpow.pop %v2648
    %v2650 = vmul.f32 %v2589, 1.442695
    %v2651 = vpow.pop %v2650
    %v2652 = vmul.f32 %v2590, 1.442695
    %v2653 = vpow.pop %v2652
    %v2654 = vmul.f32 %v2591, 1.442695
    %v2655 = vpow.pop %v2654
    %v2656 = vadd.f32 %v2593, 1.0
    %v2657 = vlog2.pop %v2656
    %v2658 = vmul.f32 %v2657, 0.6931472
    %v2659 = vmul.f32 -0.5, %v2593
    %v2660 = vadd.f32 %v2659, 1.0
    %v2661 = vmul.f32 %v2660, %v2593
    %v2662 = vand.u32 2147483647, %v2593
    %vm2663 = vcmp.lt.f32.partialorder %v2662, 0.0004427343
    %v2664 = vsel %vm2663, %v2661, %v2658
    %v2665 = vadd.f32 %v2595, 1.0
    %v2666 = vlog2.pop %v2665
    %v2667 = vmul.f32 %v2666, 0.6931472
    %v2668 = vmul.f32 -0.5, %v2595
    %v2669 = vadd.f32 %v2668, 1.0
    %v2670 = vmul.f32 %v2669, %v2595
    %v2671 = vand.u32 2147483647, %v2595
    %vm2672 = vcmp.lt.f32.partialorder %v2671, 0.0004427343
    %v2673 = vsel %vm2672, %v2670, %v2667
    %v2674 = vadd.f32 %v2597, 1.0
    %v2675 = vlog2.pop %v2674
    %v2676 = vmul.f32 %v2675, 0.6931472
    %v2677 = vmul.f32 -0.5, %v2597
    %v2678 = vadd.f32 %v2677, 1.0
    %v2679 = vmul.f32 %v2678, %v2597
    %v2680 = vand.u32 2147483647, %v2597
    %vm2681 = vcmp.lt.f32.partialorder %v2680, 0.0004427343
    %v2682 = vsel %vm2681, %v2679, %v2676
    %v2683 = vadd.f32 %v2599, 1.0
    %v2684 = vlog2.pop %v2683
    %v2685 = vmul.f32 %v2684, 0.6931472
    %v2686 = vmul.f32 -0.5, %v2599
    %v2687 = vadd.f32 %v2686, 1.0
    %v2688 = vmul.f32 %v2687, %v2599
    %v2689 = vand.u32 2147483647, %v2599
    %vm2690 = vcmp.lt.f32.partialorder %v2689, 0.0004427343
    %v2691 = vsel %vm2690, %v2688, %v2685
    %v2692 = vadd.f32 %v2601, 1.0
    %v2693 = vlog2.pop %v2692
    %v2694 = vmul.f32 %v2693, 0.6931472
    %v2695 = vmul.f32 -0.5, %v2601
    %v2696 = vadd.f32 %v2695, 1.0
    %v2697 = vmul.f32 %v2696, %v2601
    %v2698 = vand.u32 2147483647, %v2601
    %vm2699 = vcmp.lt.f32.partialorder %v2698, 0.0004427343
    %v2700 = vsel %vm2699, %v2697, %v2694
    %v2701 = vadd.f32 %v2603, 1.0
    %v2702 = vlog2.pop %v2701
    %v2703 = vmul.f32 %v2702, 0.6931472
    %v2704 = vmul.f32 -0.5, %v2603
    %v2705 = vadd.f32 %v2704, 1.0
    %v2706 = vmul.f32 %v2705, %v2603
    %v2707 = vand.u32 2147483647, %v2603
    %vm2708 = vcmp.lt.f32.partialorder %v2707, 0.0004427343
    %v2709 = vsel %vm2708, %v2706, %v2703
    %v2710 = vadd.f32 %v2605, 1.0
    %v2711 = vlog2.pop %v2710
    %v2712 = vmul.f32 %v2711, 0.6931472
    %v2713 = vmul.f32 -0.5, %v2605
    %v2714 = vadd.f32 %v2713, 1.0
    %v2715 = vmul.f32 %v2714, %v2605
    %v2716 = vand.u32 2147483647, %v2605
    %vm2717 = vcmp.lt.f32.partialorder %v2716, 0.0004427343
    %v2718 = vsel %vm2717, %v2715, %v2712
    %v2719 = vadd.f32 %v2607, 1.0
    %v2720 = vlog2.pop %v2719
    %v2721 = vmul.f32 %v2720, 0.6931472
    %v2722 = vmul.f32 -0.5, %v2607
    %v2723 = vadd.f32 %v2722, 1.0
    %v2724 = vmul.f32 %v2723, %v2607
    %v2725 = vand.u32 2147483647, %v2607
    %vm2726 = vcmp.lt.f32.partialorder %v2725, 0.0004427343
    %v2727 = vsel %vm2726, %v2724, %v2721
    %v2728 = vadd.f32 %v2609, 1.0
    %v2729 = vlog2.pop %v2728
    %v2730 = vmul.f32 %v2729, 0.6931472
    %v2731 = vmul.f32 -0.5, %v2609
    %v2732 = vadd.f32 %v2731, 1.0
    %v2733 = vmul.f32 %v2732, %v2609
    %v2734 = vand.u32 2147483647, %v2609
    %vm2735 = vcmp.lt.f32.partialorder %v2734, 0.0004427343
    %v2736 = vsel %vm2735, %v2733, %v2730
    %v2737 = vadd.f32 %v2611, 1.0
    %v2738 = vlog2.pop %v2737
    %v2739 = vmul.f32 %v2738, 0.6931472
    %v2740 = vmul.f32 -0.5, %v2611
    %v2741 = vadd.f32 %v2740, 1.0
    %v2742 = vmul.f32 %v2741, %v2611
    %v2743 = vand.u32 2147483647, %v2611
    %vm2744 = vcmp.lt.f32.partialorder %v2743, 0.0004427343
    %v2745 = vsel %vm2744, %v2742, %v2739
    %v2746 = vadd.f32 %v2613, 1.0
    %v2747 = vlog2.pop %v2746
    %v2748 = vmul.f32 %v2747, 0.6931472
    %v2749 = vmul.f32 -0.5, %v2613
    %v2750 = vadd.f32 %v2749, 1.0
    %v2751 = vmul.f32 %v2750, %v2613
    %v2752 = vand.u32 2147483647, %v2613
    %vm2753 = vcmp.lt.f32.partialorder %v2752, 0.0004427343
    %v2754 = vsel %vm2753, %v2751, %v2748
    %v2755 = vadd.f32 %v2615, 1.0
    %v2756 = vlog2.pop %v2755
    %v2757 = vmul.f32 %v2756, 0.6931472
    %v2758 = vmul.f32 -0.5, %v2615
    %v2759 = vadd.f32 %v2758, 1.0
    %v2760 = vmul.f32 %v2759, %v2615
    %v2761 = vand.u32 2147483647, %v2615
    %vm2762 = vcmp.lt.f32.partialorder %v2761, 0.0004427343
    %v2763 = vsel %vm2762, %v2760, %v2757
    %v2764 = vadd.f32 %v2617, 1.0
    %v2765 = vlog2.pop %v2764
    %v2766 = vmul.f32 %v2765, 0.6931472
    %v2767 = vmul.f32 -0.5, %v2617
    %v2768 = vadd.f32 %v2767, 1.0
    %v2769 = vmul.f32 %v2768, %v2617
    %v2770 = vand.u32 2147483647, %v2617
    %vm2771 = vcmp.lt.f32.partialorder %v2770, 0.0004427343
    %v2772 = vsel %vm2771, %v2769, %v2766
    %v2773 = vadd.f32 %v2619, 1.0
    %v2774 = vlog2.pop %v2773
    %v2775 = vmul.f32 %v2774, 0.6931472
    %v2776 = vmul.f32 -0.5, %v2619
    %v2777 = vadd.f32 %v2776, 1.0
    %v2778 = vmul.f32 %v2777, %v2619
    %v2779 = vand.u32 2147483647, %v2619
    %vm2780 = vcmp.lt.f32.partialorder %v2779, 0.0004427343
    %v2781 = vsel %vm2780, %v2778, %v2775
    %v2782 = vadd.f32 %v2621, 1.0
    %v2783 = vlog2.pop %v2782
    %v2784 = vmul.f32 %v2783, 0.6931472
    %v2785 = vmul.f32 -0.5, %v2621
    %v2786 = vadd.f32 %v2785, 1.0
    %v2787 = vmul.f32 %v2786, %v2621
    %v2788 = vand.u32 2147483647, %v2621
    %vm2789 = vcmp.lt.f32.partialorder %v2788, 0.0004427343
    %v2790 = vsel %vm2789, %v2787, %v2784
    %v2791 = vadd.f32 %v2623, 1.0
    %v2792 = vlog2.pop %v2791
    %v2793 = vmul.f32 %v2792, 0.6931472
    %v2794 = vmul.f32 -0.5, %v2623
    %v2795 = vadd.f32 %v2794, 1.0
    %v2796 = vmul.f32 %v2795, %v2623
    %v2797 = vand.u32 2147483647, %v2623
    %vm2798 = vcmp.lt.f32.partialorder %v2797, 0.0004427343
    %v2799 = vsel %vm2798, %v2796, %v2793
    %v2800 = vadd.f32 %v2625, 1.0
    %v2801 = vlog2.pop %v2800
    %v2802 = vmul.f32 %v2801, 0.6931472
    %v2803 = vmul.f32 -0.5, %v2625
    %v2804 = vadd.f32 %v2803, 1.0
    %v2805 = vmul.f32 %v2804, %v2625
    %v2806 = vand.u32 2147483647, %v2625
    %vm2807 = vcmp.lt.f32.partialorder %v2806, 0.0004427343
    %v2808 = vsel %vm2807, %v2805, %v2802
    %v2809 = vadd.f32 %v2627, 1.0
    %v2810 = vlog2.pop %v2809
    %v2811 = vmul.f32 %v2810, 0.6931472
    %v2812 = vmul.f32 -0.5, %v2627
    %v2813 = vadd.f32 %v2812, 1.0
    %v2814 = vmul.f32 %v2813, %v2627
    %v2815 = vand.u32 2147483647, %v2627
    %vm2816 = vcmp.lt.f32.partialorder %v2815, 0.0004427343
    %v2817 = vsel %vm2816, %v2814, %v2811
    %v2818 = vadd.f32 %v2629, 1.0
    %v2819 = vlog2.pop %v2818
    %v2820 = vmul.f32 %v2819, 0.6931472
    %v2821 = vmul.f32 -0.5, %v2629
    %v2822 = vadd.f32 %v2821, 1.0
    %v2823 = vmul.f32 %v2822, %v2629
    %v2824 = vand.u32 2147483647, %v2629
    %vm2825 = vcmp.lt.f32.partialorder %v2824, 0.0004427343
    %v2826 = vsel %vm2825, %v2823, %v2820
    %v2827 = vadd.f32 %v2631, 1.0
    %v2828 = vlog2.pop %v2827
    %v2829 = vmul.f32 %v2828, 0.6931472
    %v2830 = vmul.f32 -0.5, %v2631
    %v2831 = vadd.f32 %v2830, 1.0
    %v2832 = vmul.f32 %v2831, %v2631
    %v2833 = vand.u32 2147483647, %v2631
    %vm2834 = vcmp.lt.f32.partialorder %v2833, 0.0004427343
    %v2835 = vsel %vm2834, %v2832, %v2829
    %v2836 = vadd.f32 %v2633, 1.0
    %v2837 = vlog2.pop %v2836
    %v2838 = vmul.f32 %v2837, 0.6931472
    %v2839 = vmul.f32 -0.5, %v2633
    %v2840 = vadd.f32 %v2839, 1.0
    %v2841 = vmul.f32 %v2840, %v2633
    %v2842 = vand.u32 2147483647, %v2633
    %vm2843 = vcmp.lt.f32.partialorder %v2842, 0.0004427343
    %v2844 = vsel %vm2843, %v2841, %v2838
    %v2845 = vadd.f32 %v2635, 1.0
    %v2846 = vlog2.pop %v2845
    %v2847 = vmul.f32 %v2846, 0.6931472
    %v2848 = vmul.f32 -0.5, %v2635
    %v2849 = vadd.f32 %v2848, 1.0
    %v2850 = vmul.f32 %v2849, %v2635
    %v2851 = vand.u32 2147483647, %v2635
    %vm2852 = vcmp.lt.f32.partialorder %v2851, 0.0004427343
    %v2853 = vsel %vm2852, %v2850, %v2847
    %v2854 = vadd.f32 %v2637, 1.0
    %v2855 = vlog2.pop %v2854
    %v2856 = vmul.f32 %v2855, 0.6931472
    %v2857 = vmul.f32 -0.5, %v2637
    %v2858 = vadd.f32 %v2857, 1.0
    %v2859 = vmul.f32 %v2858, %v2637
    %v2860 = vand.u32 2147483647, %v2637
    %vm2861 = vcmp.lt.f32.partialorder %v2860, 0.0004427343
    %v2862 = vsel %vm2861, %v2859, %v2856
    %v2863 = vadd.f32 %v2639, 1.0
    %v2864 = vlog2.pop %v2863
    %v2865 = vmul.f32 %v2864, 0.6931472
    %v2866 = vmul.f32 -0.5, %v2639
    %v2867 = vadd.f32 %v2866, 1.0
    %v2868 = vmul.f32 %v2867, %v2639
    %v2869 = vand.u32 2147483647, %v2639
    %vm2870 = vcmp.lt.f32.partialorder %v2869, 0.0004427343
    %v2871 = vsel %vm2870, %v2868, %v2865
    %v2872 = vadd.f32 %v2641, 1.0
    %v2873 = vlog2.pop %v2872
    %v2874 = vmul.f32 %v2873, 0.6931472
    %v2875 = vmul.f32 -0.5, %v2641
    %v2876 = vadd.f32 %v2875, 1.0
    %v2877 = vmul.f32 %v2876, %v2641
    %v2878 = vand.u32 2147483647, %v2641
    %vm2879 = vcmp.lt.f32.partialorder %v2878, 0.0004427343
    %v2880 = vsel %vm2879, %v2877, %v2874
    %v2881 = vadd.f32 %v2643, 1.0
    %v2882 = vlog2.pop %v2881
    %v2883 = vmul.f32 %v2882, 0.6931472
    %v2884 = vmul.f32 -0.5, %v2643
    %v2885 = vadd.f32 %v2884, 1.0
    %v2886 = vmul.f32 %v2885, %v2643
    %v2887 = vand.u32 2147483647, %v2643
    %vm2888 = vcmp.lt.f32.partialorder %v2887, 0.0004427343
    %v2889 = vsel %vm2888, %v2886, %v2883
    %v2890 = vadd.f32 %v2645, 1.0
    %v2891 = vlog2.pop %v2890
    %v2892 = vmul.f32 %v2891, 0.6931472
    %v2893 = vmul.f32 -0.5, %v2645
    %v2894 = vadd.f32 %v2893, 1.0
    %v2895 = vmul.f32 %v2894, %v2645
    %v2896 = vand.u32 2147483647, %v2645
    %vm2897 = vcmp.lt.f32.partialorder %v2896, 0.0004427343
    %v2898 = vsel %vm2897, %v2895, %v2892
    %v2899 = vadd.f32 %v2647, 1.0
    %v2900 = vlog2.pop %v2899
    %v2901 = vmul.f32 %v2900, 0.6931472
    %v2902 = vmul.f32 -0.5, %v2647
    %v2903 = vadd.f32 %v2902, 1.0
    %v2904 = vmul.f32 %v2903, %v2647
    %v2905 = vand.u32 2147483647, %v2647
    %vm2906 = vcmp.lt.f32.partialorder %v2905, 0.0004427343
    %v2907 = vsel %vm2906, %v2904, %v2901
    %v2908 = vadd.f32 %v2649, 1.0
    %v2909 = vlog2.pop %v2908
    %v2910 = vmul.f32 %v2909, 0.6931472
    %v2911 = vmul.f32 -0.5, %v2649
    %v2912 = vadd.f32 %v2911, 1.0
    %v2913 = vmul.f32 %v2912, %v2649
    %v2914 = vand.u32 2147483647, %v2649
    %vm2915 = vcmp.lt.f32.partialorder %v2914, 0.0004427343
    %v2916 = vsel %vm2915, %v2913, %v2910
    %v2917 = vadd.f32 %v2651, 1.0
    %v2918 = vlog2.pop %v2917
    %v2919 = vmul.f32 %v2918, 0.6931472
    %v2920 = vmul.f32 -0.5, %v2651
    %v2921 = vadd.f32 %v2920, 1.0
    %v2922 = vmul.f32 %v2921, %v2651
    %v2923 = vand.u32 2147483647, %v2651
    %vm2924 = vcmp.lt.f32.partialorder %v2923, 0.0004427343
    %v2925 = vsel %vm2924, %v2922, %v2919
    %v2926 = vadd.f32 %v2653, 1.0
    %v2927 = vlog2.pop %v2926
    %v2928 = vmul.f32 %v2927, 0.6931472
    %v2929 = vmul.f32 -0.5, %v2653
    %v2930 = vadd.f32 %v2929, 1.0
    %v2931 = vmul.f32 %v2930, %v2653
    %v2932 = vand.u32 2147483647, %v2653
    %vm2933 = vcmp.lt.f32.partialorder %v2932, 0.0004427343
    %v2934 = vsel %vm2933, %v2931, %v2928
    %v2935 = vadd.f32 %v2655, 1.0
    %v2936 = vlog2.pop %v2935
    %v2937 = vmul.f32 %v2936, 0.6931472
    %v2938 = vmul.f32 -0.5, %v2655
    %v2939 = vadd.f32 %v2938, 1.0
    %v2940 = vmul.f32 %v2939, %v2655
    %v2941 = vand.u32 2147483647, %v2655
    %vm2942 = vcmp.lt.f32.partialorder %v2941, 0.0004427343
    %v2943 = vsel %vm2942, %v2940, %v2937
    %v2944 = vadd.f32 %v2432, %v2664
    %v2945 = vadd.f32 %v2433, %v2673
    %v2946 = vadd.f32 %v2434, %v2682
    %v2947 = vadd.f32 %v2435, %v2691
    %v2948 = vadd.f32 %v2436, %v2700
    %v2949 = vadd.f32 %v2437, %v2709
    %v2950 = vadd.f32 %v2438, %v2718
    %v2951 = vadd.f32 %v2439, %v2727
    %v2952 = vadd.f32 %v2440, %v2736
    %v2953 = vadd.f32 %v2441, %v2745
    %v2954 = vadd.f32 %v2442, %v2754
    %v2955 = vadd.f32 %v2443, %v2763
    %v2956 = vadd.f32 %v2444, %v2772
    %v2957 = vadd.f32 %v2445, %v2781
    %v2958 = vadd.f32 %v2446, %v2790
    %v2959 = vadd.f32 %v2447, %v2799
    %v2960 = vadd.f32 %v2448, %v2808
    %v2961 = vadd.f32 %v2449, %v2817
    %v2962 = vadd.f32 %v2450, %v2826
    %v2963 = vadd.f32 %v2451, %v2835
    %v2964 = vadd.f32 %v2452, %v2844
    %v2965 = vadd.f32 %v2453, %v2853
    %v2966 = vadd.f32 %v2454, %v2862
    %v2967 = vadd.f32 %v2455, %v2871
    %v2968 = vadd.f32 %v2456, %v2880
    %v2969 = vadd.f32 %v2457, %v2889
    %v2970 = vadd.f32 %v2458, %v2898
    %v2971 = vadd.f32 %v2459, %v2907
    %v2972 = vadd.f32 %v2460, %v2916
    %v2973 = vadd.f32 %v2461, %v2925
    %v2974 = vadd.f32 %v2462, %v2934
    %v2975 = vadd.f32 %v2463, %v2943
    %v2976 = vsel %vm2464, %v2496, %v2944
    %v2977 = vsel %vm2465, %v2497, %v2945
    %v2978 = vsel %vm2466, %v2498, %v2946
    %v2979 = vsel %vm2467, %v2499, %v2947
    %v2980 = vsel %vm2468, %v2500, %v2948
    %v2981 = vsel %vm2469, %v2501, %v2949
    %v2982 = vsel %vm2470, %v2502, %v2950
    %v2983 = vsel %vm2471, %v2503, %v2951
    %v2984 = vsel %vm2472, %v2504, %v2952
    %v2985 = vsel %vm2473, %v2505, %v2953
    %v2986 = vsel %vm2474, %v2506, %v2954
    %v2987 = vsel %vm2475, %v2507, %v2955
    %v2988 = vsel %vm2476, %v2508, %v2956
    %v2989 = vsel %vm2477, %v2509, %v2957
    %v2990 = vsel %vm2478, %v2510, %v2958
    %v2991 = vsel %vm2479, %v2511, %v2959
    %v2992 = vsel %vm2480, %v2512, %v2960
    %v2993 = vsel %vm2481, %v2513, %v2961
    %v2994 = vsel %vm2482, %v2514, %v2962
    %v2995 = vsel %vm2483, %v2515, %v2963
    %v2996 = vsel %vm2484, %v2516, %v2964
    %v2997 = vsel %vm2485, %v2517, %v2965
    %v2998 = vsel %vm2486, %v2518, %v2966
    %v2999 = vsel %vm2487, %v2519, %v2967
    %v3000 = vsel %vm2488, %v2520, %v2968
    %v3001 = vsel %vm2489, %v2521, %v2969
    %v3002 = vsel %vm2490, %v2522, %v2970
    %v3003 = vsel %vm2491, %v2523, %v2971
    %v3004 = vsel %vm2492, %v2524, %v2972
    %v3005 = vsel %vm2493, %v2525, %v2973
    %v3006 = vsel %vm2494, %v2526, %v2974
    %v3007 = vsel %vm2495, %v2527, %v2975
    %v3008 = vlaneseq
    %v3009 = vand.u32 %v3008, 127
    %s3010 = smul.u32 0, 256
    %v3011 = vlaneseq
    %v3012 = vshrl.u32 %v3011, 7
    %v3013 = vadd.s32 %v3012, 8
    %v3014 = vadd.s32 %v3012, 16
    %v3015 = vadd.s32 %v3012, 24
    %v3016 = vadd.s32 %v3012, 32
    %v3017 = vadd.s32 %v3012, 40
    %v3018 = vadd.s32 %v3012, 48
    %v3019 = vadd.s32 %v3012, 56
    %v3020 = vadd.s32 %v3012, 64
    %v3021 = vadd.s32 %v3012, 72
    %v3022 = vadd.s32 %v3012, 80
    %v3023 = vadd.s32 %v3012, 88
    %v3024 = vadd.s32 %v3012, 96
    %v3025 = vadd.s32 %v3012, 104
    %v3026 = vadd.s32 %v3012, 112
    %v3027 = vadd.s32 %v3012, 120
    %v3028 = vadd.s32 %v3012, 128
    %v3029 = vadd.s32 %v3012, 136
    %v3030 = vadd.s32 %v3012, 144
    %v3031 = vadd.s32 %v3012, 152
    %v3032 = vadd.s32 %v3012, 160
    %v3033 = vadd.s32 %v3012, 168
    %v3034 = vadd.s32 %v3012, 176
    %v3035 = vadd.s32 %v3012, 184
    %v3036 = vadd.s32 %v3012, 192
    %v3037 = vadd.s32 %v3012, 200
    %v3038 = vadd.s32 %v3012, 208
    %v3039 = vadd.s32 %v3012, 216
    %v3040 = vadd.s32 %v3012, 224
    %v3041 = vadd.s32 %v3012, 232
    %v3042 = vadd.s32 %v3012, 240
    %v3043 = vadd.s32 %v3012, 248
    %v3044 = vstv %s3010
    %v3045 = vadd.s32 %v3044, %v3012
    %v3046 = vadd.s32 %v3044, %v3013
    %v3047 = vadd.s32 %v3044, %v3014
    %v3048 = vadd.s32 %v3044, %v3015
    %v3049 = vadd.s32 %v3044, %v3016
    %v3050 = vadd.s32 %v3044, %v3017
    %v3051 = vadd.s32 %v3044, %v3018
    %v3052 = vadd.s32 %v3044, %v3019
    %v3053 = vadd.s32 %v3044, %v3020
    %v3054 = vadd.s32 %v3044, %v3021
    %v3055 = vadd.s32 %v3044, %v3022
    %v3056 = vadd.s32 %v3044, %v3023
    %v3057 = vadd.s32 %v3044, %v3024
    %v3058 = vadd.s32 %v3044, %v3025
    %v3059 = vadd.s32 %v3044, %v3026
    %v3060 = vadd.s32 %v3044, %v3027
    %v3061 = vadd.s32 %v3044, %v3028
    %v3062 = vadd.s32 %v3044, %v3029
    %v3063 = vadd.s32 %v3044, %v3030
    %v3064 = vadd.s32 %v3044, %v3031
    %v3065 = vadd.s32 %v3044, %v3032
    %v3066 = vadd.s32 %v3044, %v3033
    %v3067 = vadd.s32 %v3044, %v3034
    %v3068 = vadd.s32 %v3044, %v3035
    %v3069 = vadd.s32 %v3044, %v3036
    %v3070 = vadd.s32 %v3044, %v3037
    %v3071 = vadd.s32 %v3044, %v3038
    %v3072 = vadd.s32 %v3044, %v3039
    %v3073 = vadd.s32 %v3044, %v3040
    %v3074 = vadd.s32 %v3044, %v3041
    %v3075 = vadd.s32 %v3044, %v3042
    %v3076 = vadd.s32 %v3044, %v3043
    %vm3077 = vcmp.lt.s32.totalorder %v3045, 200
    %vm3078 = vcmp.lt.s32.totalorder %v3046, 200
    %vm3079 = vcmp.lt.s32.totalorder %v3047, 200
    %vm3080 = vcmp.lt.s32.totalorder %v3048, 200
    %vm3081 = vcmp.lt.s32.totalorder %v3049, 200
    %vm3082 = vcmp.lt.s32.totalorder %v3050, 200
    %vm3083 = vcmp.lt.s32.totalorder %v3051, 200
    %vm3084 = vcmp.lt.s32.totalorder %v3052, 200
    %vm3085 = vcmp.lt.s32.totalorder %v3053, 200
    %vm3086 = vcmp.lt.s32.totalorder %v3054, 200
    %vm3087 = vcmp.lt.s32.totalorder %v3055, 200
    %vm3088 = vcmp.lt.s32.totalorder %v3056, 200
    %vm3089 = vcmp.lt.s32.totalorder %v3057, 200
    %vm3090 = vcmp.lt.s32.totalorder %v3058, 200
    %vm3091 = vcmp.lt.s32.totalorder %v3059, 200
    %vm3092 = vcmp.lt.s32.totalorder %v3060, 200
    %vm3093 = vcmp.lt.s32.totalorder %v3061, 200
    %vm3094 = vcmp.lt.s32.totalorder %v3062, 200
    %vm3095 = vcmp.lt.s32.totalorder %v3063, 200
    %vm3096 = vcmp.lt.s32.totalorder %v3064, 200
    %vm3097 = vcmp.lt.s32.totalorder %v3065, 200
    %vm3098 = vcmp.lt.s32.totalorder %v3066, 200
    %vm3099 = vcmp.lt.s32.totalorder %v3067, 200
    %vm3100 = vcmp.lt.s32.totalorder %v3068, 200
    %vm3101 = vcmp.lt.s32.totalorder %v3069, 200
    %vm3102 = vcmp.lt.s32.totalorder %v3070, 200
    %vm3103 = vcmp.lt.s32.totalorder %v3071, 200
    %vm3104 = vcmp.lt.s32.totalorder %v3072, 200
    %vm3105 = vcmp.lt.s32.totalorder %v3073, 200
    %vm3106 = vcmp.lt.s32.totalorder %v3074, 200
    %vm3107 = vcmp.lt.s32.totalorder %v3075, 200
    %vm3108 = vcmp.lt.s32.totalorder %v3076, 200
    %3109 = vset.pattern.permute.xlu0 2
    %3110 = vperm.xlu0 %3109, %v66
    %v3111 = vpop.permute.xlu0 %3110
    %3112 = vset.pattern.permute.xlu0 2
    %3113 = vperm.xlu0 %3112, %v67
    %v3114 = vpop.permute.xlu0 %3113
    %3115 = vset.pattern.permute.xlu0 2
    %3116 = vperm.xlu0 %3115, %v68
    %v3117 = vpop.permute.xlu0 %3116
    %3118 = vset.pattern.permute.xlu0 2
    %3119 = vperm.xlu0 %3118, %v69
    %v3120 = vpop.permute.xlu0 %3119
    %3121 = vset.pattern.permute.xlu0 2
    %3122 = vperm.xlu0 %3121, %v70
    %v3123 = vpop.permute.xlu0 %3122
    %3124 = vset.pattern.permute.xlu0 2
    %3125 = vperm.xlu0 %3124, %v71
    %v3126 = vpop.permute.xlu0 %3125
    %3127 = vset.pattern.permute.xlu0 2
    %3128 = vperm.xlu0 %3127, %v72
    %v3129 = vpop.permute.xlu0 %3128
    %3130 = vset.pattern.permute.xlu0 2
    %3131 = vperm.xlu0 %3130, %v73
    %v3132 = vpop.permute.xlu0 %3131
    %3133 = vset.pattern.permute.xlu0 2
    %3134 = vperm.xlu0 %3133, %v74
    %v3135 = vpop.permute.xlu0 %3134
    %3136 = vset.pattern.permute.xlu0 2
    %3137 = vperm.xlu0 %3136, %v75
    %v3138 = vpop.permute.xlu0 %3137
    %3139 = vset.pattern.permute.xlu0 2
    %3140 = vperm.xlu0 %3139, %v76
    %v3141 = vpop.permute.xlu0 %3140
    %3142 = vset.pattern.permute.xlu0 2
    %3143 = vperm.xlu0 %3142, %v77
    %v3144 = vpop.permute.xlu0 %3143
    %3145 = vset.pattern.permute.xlu0 2
    %3146 = vperm.xlu0 %3145, %v78
    %v3147 = vpop.permute.xlu0 %3146
    %3148 = vset.pattern.permute.xlu0 2
    %3149 = vperm.xlu0 %3148, %v79
    %v3150 = vpop.permute.xlu0 %3149
    %3151 = vset.pattern.permute.xlu0 2
    %3152 = vperm.xlu0 %3151, %v80
    %v3153 = vpop.permute.xlu0 %3152
    %3154 = vset.pattern.permute.xlu0 2
    %3155 = vperm.xlu0 %3154, %v81
    %v3156 = vpop.permute.xlu0 %3155
    %3157 = vset.pattern.permute.xlu0 2
    %3158 = vperm.xlu0 %3157, %v82
    %v3159 = vpop.permute.xlu0 %3158
    %3160 = vset.pattern.permute.xlu0 2
    %3161 = vperm.xlu0 %3160, %v83
    %v3162 = vpop.permute.xlu0 %3161
    %3163 = vset.pattern.permute.xlu0 2
    %3164 = vperm.xlu0 %3163, %v84
    %v3165 = vpop.permute.xlu0 %3164
    %3166 = vset.pattern.permute.xlu0 2
    %3167 = vperm.xlu0 %3166, %v85
    %v3168 = vpop.permute.xlu0 %3167
    %3169 = vset.pattern.permute.xlu0 2
    %3170 = vperm.xlu0 %3169, %v86
    %v3171 = vpop.permute.xlu0 %3170
    %3172 = vset.pattern.permute.xlu0 2
    %3173 = vperm.xlu0 %3172, %v87
    %v3174 = vpop.permute.xlu0 %3173
    %3175 = vset.pattern.permute.xlu0 2
    %3176 = vperm.xlu0 %3175, %v88
    %v3177 = vpop.permute.xlu0 %3176
    %3178 = vset.pattern.permute.xlu0 2
    %3179 = vperm.xlu0 %3178, %v89
    %v3180 = vpop.permute.xlu0 %3179
    %3181 = vset.pattern.permute.xlu0 2
    %3182 = vperm.xlu0 %3181, %v90
    %v3183 = vpop.permute.xlu0 %3182
    %3184 = vset.pattern.permute.xlu0 2
    %3185 = vperm.xlu0 %3184, %v91
    %v3186 = vpop.permute.xlu0 %3185
    %3187 = vset.pattern.permute.xlu0 2
    %3188 = vperm.xlu0 %3187, %v92
    %v3189 = vpop.permute.xlu0 %3188
    %3190 = vset.pattern.permute.xlu0 2
    %3191 = vperm.xlu0 %3190, %v93
    %v3192 = vpop.permute.xlu0 %3191
    %3193 = vset.pattern.permute.xlu0 2
    %3194 = vperm.xlu0 %3193, %v94
    %v3195 = vpop.permute.xlu0 %3194
    %3196 = vset.pattern.permute.xlu0 2
    %3197 = vperm.xlu0 %3196, %v95
    %v3198 = vpop.permute.xlu0 %3197
    %3199 = vset.pattern.permute.xlu0 2
    %3200 = vperm.xlu0 %3199, %v96
    %v3201 = vpop.permute.xlu0 %3200
    %3202 = vset.pattern.permute.xlu0 2
    %3203 = vperm.xlu0 %3202, %v97
    %v3204 = vpop.permute.xlu0 %3203
    %vm3205 = vcmp.eq.s32.totalorder %v3111, %v3009
    %vm3206 = vcmp.eq.s32.totalorder %v3114, %v3009
    %vm3207 = vcmp.eq.s32.totalorder %v3117, %v3009
    %vm3208 = vcmp.eq.s32.totalorder %v3120, %v3009
    %vm3209 = vcmp.eq.s32.totalorder %v3123, %v3009
    %vm3210 = vcmp.eq.s32.totalorder %v3126, %v3009
    %vm3211 = vcmp.eq.s32.totalorder %v3129, %v3009
    %vm3212 = vcmp.eq.s32.totalorder %v3132, %v3009
    %vm3213 = vcmp.eq.s32.totalorder %v3135, %v3009
    %vm3214 = vcmp.eq.s32.totalorder %v3138, %v3009
    %vm3215 = vcmp.eq.s32.totalorder %v3141, %v3009
    %vm3216 = vcmp.eq.s32.totalorder %v3144, %v3009
    %vm3217 = vcmp.eq.s32.totalorder %v3147, %v3009
    %vm3218 = vcmp.eq.s32.totalorder %v3150, %v3009
    %vm3219 = vcmp.eq.s32.totalorder %v3153, %v3009
    %vm3220 = vcmp.eq.s32.totalorder %v3156, %v3009
    %vm3221 = vcmp.eq.s32.totalorder %v3159, %v3009
    %vm3222 = vcmp.eq.s32.totalorder %v3162, %v3009
    %vm3223 = vcmp.eq.s32.totalorder %v3165, %v3009
    %vm3224 = vcmp.eq.s32.totalorder %v3168, %v3009
    %vm3225 = vcmp.eq.s32.totalorder %v3171, %v3009
    %vm3226 = vcmp.eq.s32.totalorder %v3174, %v3009
    %vm3227 = vcmp.eq.s32.totalorder %v3177, %v3009
    %vm3228 = vcmp.eq.s32.totalorder %v3180, %v3009
    %vm3229 = vcmp.eq.s32.totalorder %v3183, %v3009
    %vm3230 = vcmp.eq.s32.totalorder %v3186, %v3009
    %vm3231 = vcmp.eq.s32.totalorder %v3189, %v3009
    %vm3232 = vcmp.eq.s32.totalorder %v3192, %v3009
    %vm3233 = vcmp.eq.s32.totalorder %v3195, %v3009
    %vm3234 = vcmp.eq.s32.totalorder %v3198, %v3009
    %vm3235 = vcmp.eq.s32.totalorder %v3201, %v3009
    %vm3236 = vcmp.eq.s32.totalorder %v3204, %v3009
    %v3237 = vsel %vm3205, 1, 0
    %v3238 = vsel %vm3206, 1, 0
    %v3239 = vsel %vm3207, 1, 0
    %v3240 = vsel %vm3208, 1, 0
    %v3241 = vsel %vm3209, 1, 0
    %v3242 = vsel %vm3210, 1, 0
    %v3243 = vsel %vm3211, 1, 0
    %v3244 = vsel %vm3212, 1, 0
    %v3245 = vsel %vm3213, 1, 0
    %v3246 = vsel %vm3214, 1, 0
    %v3247 = vsel %vm3215, 1, 0
    %v3248 = vsel %vm3216, 1, 0
    %v3249 = vsel %vm3217, 1, 0
    %v3250 = vsel %vm3218, 1, 0
    %v3251 = vsel %vm3219, 1, 0
    %v3252 = vsel %vm3220, 1, 0
    %v3253 = vsel %vm3221, 1, 0
    %v3254 = vsel %vm3222, 1, 0
    %v3255 = vsel %vm3223, 1, 0
    %v3256 = vsel %vm3224, 1, 0
    %v3257 = vsel %vm3225, 1, 0
    %v3258 = vsel %vm3226, 1, 0
    %v3259 = vsel %vm3227, 1, 0
    %v3260 = vsel %vm3228, 1, 0
    %v3261 = vsel %vm3229, 1, 0
    %v3262 = vsel %vm3230, 1, 0
    %v3263 = vsel %vm3231, 1, 0
    %v3264 = vsel %vm3232, 1, 0
    %v3265 = vsel %vm3233, 1, 0
    %v3266 = vsel %vm3234, 1, 0
    %v3267 = vsel %vm3235, 1, 0
    %v3268 = vsel %vm3236, 1, 0
    %v3269 = vcvt.s32.f32 %v3237
    %v3270 = vcvt.s32.f32 %v3238
    %v3271 = vcvt.s32.f32 %v3239
    %v3272 = vcvt.s32.f32 %v3240
    %v3273 = vcvt.s32.f32 %v3241
    %v3274 = vcvt.s32.f32 %v3242
    %v3275 = vcvt.s32.f32 %v3243
    %v3276 = vcvt.s32.f32 %v3244
    %v3277 = vcvt.s32.f32 %v3245
    %v3278 = vcvt.s32.f32 %v3246
    %v3279 = vcvt.s32.f32 %v3247
    %v3280 = vcvt.s32.f32 %v3248
    %v3281 = vcvt.s32.f32 %v3249
    %v3282 = vcvt.s32.f32 %v3250
    %v3283 = vcvt.s32.f32 %v3251
    %v3284 = vcvt.s32.f32 %v3252
    %v3285 = vcvt.s32.f32 %v3253
    %v3286 = vcvt.s32.f32 %v3254
    %v3287 = vcvt.s32.f32 %v3255
    %v3288 = vcvt.s32.f32 %v3256
    %v3289 = vcvt.s32.f32 %v3257
    %v3290 = vcvt.s32.f32 %v3258
    %v3291 = vcvt.s32.f32 %v3259
    %v3292 = vcvt.s32.f32 %v3260
    %v3293 = vcvt.s32.f32 %v3261
    %v3294 = vcvt.s32.f32 %v3262
    %v3295 = vcvt.s32.f32 %v3263
    %v3296 = vcvt.s32.f32 %v3264
    %v3297 = vcvt.s32.f32 %v3265
    %v3298 = vcvt.s32.f32 %v3266
    %v3299 = vcvt.s32.f32 %v3267
    %v3300 = vcvt.s32.f32 %v3268
    %v3301 = vpack.c.bf16 %v3270, %v3269
    %v3302 = vpack.c.bf16 %v3272, %v3271
    %v3303 = vpack.c.bf16 %v3274, %v3273
    %v3304 = vpack.c.bf16 %v3276, %v3275
    %v3305 = vpack.c.bf16 %v3278, %v3277
    %v3306 = vpack.c.bf16 %v3280, %v3279
    %v3307 = vpack.c.bf16 %v3282, %v3281
    %v3308 = vpack.c.bf16 %v3284, %v3283
    %v3309 = vpack.c.bf16 %v3286, %v3285
    %v3310 = vpack.c.bf16 %v3288, %v3287
    %v3311 = vpack.c.bf16 %v3290, %v3289
    %v3312 = vpack.c.bf16 %v3292, %v3291
    %v3313 = vpack.c.bf16 %v3294, %v3293
    %v3314 = vpack.c.bf16 %v3296, %v3295
    %v3315 = vpack.c.bf16 %v3298, %v3297
    %v3316 = vpack.c.bf16 %v3300, %v3299
    %3317 = vset.pattern.permute.xlu0 1
    %3318 = vperm.xlu0 %3317, %v66
    %v3319 = vpop.permute.xlu0 %3318
    %3320 = vset.pattern.permute.xlu0 1
    %3321 = vperm.xlu0 %3320, %v67
    %v3322 = vpop.permute.xlu0 %3321
    %3323 = vset.pattern.permute.xlu0 1
    %3324 = vperm.xlu0 %3323, %v68
    %v3325 = vpop.permute.xlu0 %3324
    %3326 = vset.pattern.permute.xlu0 1
    %3327 = vperm.xlu0 %3326, %v69
    %v3328 = vpop.permute.xlu0 %3327
    %3329 = vset.pattern.permute.xlu0 1
    %3330 = vperm.xlu0 %3329, %v70
    %v3331 = vpop.permute.xlu0 %3330
    %3332 = vset.pattern.permute.xlu0 1
    %3333 = vperm.xlu0 %3332, %v71
    %v3334 = vpop.permute.xlu0 %3333
    %3335 = vset.pattern.permute.xlu0 1
    %3336 = vperm.xlu0 %3335, %v72
    %v3337 = vpop.permute.xlu0 %3336
    %3338 = vset.pattern.permute.xlu0 1
    %3339 = vperm.xlu0 %3338, %v73
    %v3340 = vpop.permute.xlu0 %3339
    %3341 = vset.pattern.permute.xlu0 1
    %3342 = vperm.xlu0 %3341, %v74
    %v3343 = vpop.permute.xlu0 %3342
    %3344 = vset.pattern.permute.xlu0 1
    %3345 = vperm.xlu0 %3344, %v75
    %v3346 = vpop.permute.xlu0 %3345
    %3347 = vset.pattern.permute.xlu0 1
    %3348 = vperm.xlu0 %3347, %v76
    %v3349 = vpop.permute.xlu0 %3348
    %3350 = vset.pattern.permute.xlu0 1
    %3351 = vperm.xlu0 %3350, %v77
    %v3352 = vpop.permute.xlu0 %3351
    %3353 = vset.pattern.permute.xlu0 1
    %3354 = vperm.xlu0 %3353, %v78
    %v3355 = vpop.permute.xlu0 %3354
    %3356 = vset.pattern.permute.xlu0 1
    %3357 = vperm.xlu0 %3356, %v79
    %v3358 = vpop.permute.xlu0 %3357
    %3359 = vset.pattern.permute.xlu0 1
    %3360 = vperm.xlu0 %3359, %v80
    %v3361 = vpop.permute.xlu0 %3360
    %3362 = vset.pattern.permute.xlu0 1
    %3363 = vperm.xlu0 %3362, %v81
    %v3364 = vpop.permute.xlu0 %3363
    %3365 = vset.pattern.permute.xlu0 1
    %3366 = vperm.xlu0 %3365, %v82
    %v3367 = vpop.permute.xlu0 %3366
    %3368 = vset.pattern.permute.xlu0 1
    %3369 = vperm.xlu0 %3368, %v83
    %v3370 = vpop.permute.xlu0 %3369
    %3371 = vset.pattern.permute.xlu0 1
    %3372 = vperm.xlu0 %3371, %v84
    %v3373 = vpop.permute.xlu0 %3372
    %3374 = vset.pattern.permute.xlu0 1
    %3375 = vperm.xlu0 %3374, %v85
    %v3376 = vpop.permute.xlu0 %3375
    %3377 = vset.pattern.permute.xlu0 1
    %3378 = vperm.xlu0 %3377, %v86
    %v3379 = vpop.permute.xlu0 %3378
    %3380 = vset.pattern.permute.xlu0 1
    %3381 = vperm.xlu0 %3380, %v87
    %v3382 = vpop.permute.xlu0 %3381
    %3383 = vset.pattern.permute.xlu0 1
    %3384 = vperm.xlu0 %3383, %v88
    %v3385 = vpop.permute.xlu0 %3384
    %3386 = vset.pattern.permute.xlu0 1
    %3387 = vperm.xlu0 %3386, %v89
    %v3388 = vpop.permute.xlu0 %3387
    %3389 = vset.pattern.permute.xlu0 1
    %3390 = vperm.xlu0 %3389, %v90
    %v3391 = vpop.permute.xlu0 %3390
    %3392 = vset.pattern.permute.xlu0 1
    %3393 = vperm.xlu0 %3392, %v91
    %v3394 = vpop.permute.xlu0 %3393
    %3395 = vset.pattern.permute.xlu0 1
    %3396 = vperm.xlu0 %3395, %v92
    %v3397 = vpop.permute.xlu0 %3396
    %3398 = vset.pattern.permute.xlu0 1
    %3399 = vperm.xlu0 %3398, %v93
    %v3400 = vpop.permute.xlu0 %3399
    %3401 = vset.pattern.permute.xlu0 1
    %3402 = vperm.xlu0 %3401, %v94
    %v3403 = vpop.permute.xlu0 %3402
    %3404 = vset.pattern.permute.xlu0 1
    %3405 = vperm.xlu0 %3404, %v95
    %v3406 = vpop.permute.xlu0 %3405
    %3407 = vset.pattern.permute.xlu0 1
    %3408 = vperm.xlu0 %3407, %v96
    %v3409 = vpop.permute.xlu0 %3408
    %3410 = vset.pattern.permute.xlu0 1
    %3411 = vperm.xlu0 %3410, %v97
    %v3412 = vpop.permute.xlu0 %3411
    %vm3413 = vcmp.eq.s32.totalorder %v3319, %v3009
    %vm3414 = vcmp.eq.s32.totalorder %v3322, %v3009
    %vm3415 = vcmp.eq.s32.totalorder %v3325, %v3009
    %vm3416 = vcmp.eq.s32.totalorder %v3328, %v3009
    %vm3417 = vcmp.eq.s32.totalorder %v3331, %v3009
    %vm3418 = vcmp.eq.s32.totalorder %v3334, %v3009
    %vm3419 = vcmp.eq.s32.totalorder %v3337, %v3009
    %vm3420 = vcmp.eq.s32.totalorder %v3340, %v3009
    %vm3421 = vcmp.eq.s32.totalorder %v3343, %v3009
    %vm3422 = vcmp.eq.s32.totalorder %v3346, %v3009
    %vm3423 = vcmp.eq.s32.totalorder %v3349, %v3009
    %vm3424 = vcmp.eq.s32.totalorder %v3352, %v3009
    %vm3425 = vcmp.eq.s32.totalorder %v3355, %v3009
    %vm3426 = vcmp.eq.s32.totalorder %v3358, %v3009
    %vm3427 = vcmp.eq.s32.totalorder %v3361, %v3009
    %vm3428 = vcmp.eq.s32.totalorder %v3364, %v3009
    %vm3429 = vcmp.eq.s32.totalorder %v3367, %v3009
    %vm3430 = vcmp.eq.s32.totalorder %v3370, %v3009
    %vm3431 = vcmp.eq.s32.totalorder %v3373, %v3009
    %vm3432 = vcmp.eq.s32.totalorder %v3376, %v3009
    %vm3433 = vcmp.eq.s32.totalorder %v3379, %v3009
    %vm3434 = vcmp.eq.s32.totalorder %v3382, %v3009
    %vm3435 = vcmp.eq.s32.totalorder %v3385, %v3009
    %vm3436 = vcmp.eq.s32.totalorder %v3388, %v3009
    %vm3437 = vcmp.eq.s32.totalorder %v3391, %v3009
    %vm3438 = vcmp.eq.s32.totalorder %v3394, %v3009
    %vm3439 = vcmp.eq.s32.totalorder %v3397, %v3009
    %vm3440 = vcmp.eq.s32.totalorder %v3400, %v3009
    %vm3441 = vcmp.eq.s32.totalorder %v3403, %v3009
    %vm3442 = vcmp.eq.s32.totalorder %v3406, %v3009
    %vm3443 = vcmp.eq.s32.totalorder %v3409, %v3009
    %vm3444 = vcmp.eq.s32.totalorder %v3412, %v3009
    %v3445 = vsel %vm3077, 1, 0
    %v3446 = vsel %vm3078, 1, 0
    %v3447 = vsel %vm3079, 1, 0
    %v3448 = vsel %vm3080, 1, 0
    %v3449 = vsel %vm3081, 1, 0
    %v3450 = vsel %vm3082, 1, 0
    %v3451 = vsel %vm3083, 1, 0
    %v3452 = vsel %vm3084, 1, 0
    %v3453 = vsel %vm3085, 1, 0
    %v3454 = vsel %vm3086, 1, 0
    %v3455 = vsel %vm3087, 1, 0
    %v3456 = vsel %vm3088, 1, 0
    %v3457 = vsel %vm3089, 1, 0
    %v3458 = vsel %vm3090, 1, 0
    %v3459 = vsel %vm3091, 1, 0
    %v3460 = vsel %vm3092, 1, 0
    %v3461 = vsel %vm3093, 1, 0
    %v3462 = vsel %vm3094, 1, 0
    %v3463 = vsel %vm3095, 1, 0
    %v3464 = vsel %vm3096, 1, 0
    %v3465 = vsel %vm3097, 1, 0
    %v3466 = vsel %vm3098, 1, 0
    %v3467 = vsel %vm3099, 1, 0
    %v3468 = vsel %vm3100, 1, 0
    %v3469 = vsel %vm3101, 1, 0
    %v3470 = vsel %vm3102, 1, 0
    %v3471 = vsel %vm3103, 1, 0
    %v3472 = vsel %vm3104, 1, 0
    %v3473 = vsel %vm3105, 1, 0
    %v3474 = vsel %vm3106, 1, 0
    %v3475 = vsel %vm3107, 1, 0
    %v3476 = vsel %vm3108, 1, 0
    %vm3477 = vcmp.eq.s32.totalorder %v3445, 1
    %vm3478 = vcmp.eq.s32.totalorder %v3446, 1
    %vm3479 = vcmp.eq.s32.totalorder %v3447, 1
    %vm3480 = vcmp.eq.s32.totalorder %v3448, 1
    %vm3481 = vcmp.eq.s32.totalorder %v3449, 1
    %vm3482 = vcmp.eq.s32.totalorder %v3450, 1
    %vm3483 = vcmp.eq.s32.totalorder %v3451, 1
    %vm3484 = vcmp.eq.s32.totalorder %v3452, 1
    %vm3485 = vcmp.eq.s32.totalorder %v3453, 1
    %vm3486 = vcmp.eq.s32.totalorder %v3454, 1
    %vm3487 = vcmp.eq.s32.totalorder %v3455, 1
    %vm3488 = vcmp.eq.s32.totalorder %v3456, 1
    %vm3489 = vcmp.eq.s32.totalorder %v3457, 1
    %vm3490 = vcmp.eq.s32.totalorder %v3458, 1
    %vm3491 = vcmp.eq.s32.totalorder %v3459, 1
    %vm3492 = vcmp.eq.s32.totalorder %v3460, 1
    %vm3493 = vcmp.eq.s32.totalorder %v3461, 1
    %vm3494 = vcmp.eq.s32.totalorder %v3462, 1
    %vm3495 = vcmp.eq.s32.totalorder %v3463, 1
    %vm3496 = vcmp.eq.s32.totalorder %v3464, 1
    %vm3497 = vcmp.eq.s32.totalorder %v3465, 1
    %vm3498 = vcmp.eq.s32.totalorder %v3466, 1
    %vm3499 = vcmp.eq.s32.totalorder %v3467, 1
    %vm3500 = vcmp.eq.s32.totalorder %v3468, 1
    %vm3501 = vcmp.eq.s32.totalorder %v3469, 1
    %vm3502 = vcmp.eq.s32.totalorder %v3470, 1
    %vm3503 = vcmp.eq.s32.totalorder %v3471, 1
    %vm3504 = vcmp.eq.s32.totalorder %v3472, 1
    %vm3505 = vcmp.eq.s32.totalorder %v3473, 1
    %vm3506 = vcmp.eq.s32.totalorder %v3474, 1
    %vm3507 = vcmp.eq.s32.totalorder %v3475, 1
    %vm3508 = vcmp.eq.s32.totalorder %v3476, 1
    %vm3509 = vmand %vm3413, %vm3477
    %vm3510 = vmand %vm3414, %vm3478
    %vm3511 = vmand %vm3415, %vm3479
    %vm3512 = vmand %vm3416, %vm3480
    %vm3513 = vmand %vm3417, %vm3481
    %vm3514 = vmand %vm3418, %vm3482
    %vm3515 = vmand %vm3419, %vm3483
    %vm3516 = vmand %vm3420, %vm3484
    %vm3517 = vmand %vm3421, %vm3485
    %vm3518 = vmand %vm3422, %vm3486
    %vm3519 = vmand %vm3423, %vm3487
    %vm3520 = vmand %vm3424, %vm3488
    %vm3521 = vmand %vm3425, %vm3489
    %vm3522 = vmand %vm3426, %vm3490
    %vm3523 = vmand %vm3427, %vm3491
    %vm3524 = vmand %vm3428, %vm3492
    %vm3525 = vmand %vm3429, %vm3493
    %vm3526 = vmand %vm3430, %vm3494
    %vm3527 = vmand %vm3431, %vm3495
    %vm3528 = vmand %vm3432, %vm3496
    %vm3529 = vmand %vm3433, %vm3497
    %vm3530 = vmand %vm3434, %vm3498
    %vm3531 = vmand %vm3435, %vm3499
    %vm3532 = vmand %vm3436, %vm3500
    %vm3533 = vmand %vm3437, %vm3501
    %vm3534 = vmand %vm3438, %vm3502
    %vm3535 = vmand %vm3439, %vm3503
    %vm3536 = vmand %vm3440, %vm3504
    %vm3537 = vmand %vm3441, %vm3505
    %vm3538 = vmand %vm3442, %vm3506
    %vm3539 = vmand %vm3443, %vm3507
    %vm3540 = vmand %vm3444, %vm3508
    %v3541 = vsel %vm3509, 1, 0
    %v3542 = vsel %vm3510, 1, 0
    %v3543 = vsel %vm3511, 1, 0
    %v3544 = vsel %vm3512, 1, 0
    %v3545 = vsel %vm3513, 1, 0
    %v3546 = vsel %vm3514, 1, 0
    %v3547 = vsel %vm3515, 1, 0
    %v3548 = vsel %vm3516, 1, 0
    %v3549 = vsel %vm3517, 1, 0
    %v3550 = vsel %vm3518, 1, 0
    %v3551 = vsel %vm3519, 1, 0
    %v3552 = vsel %vm3520, 1, 0
    %v3553 = vsel %vm3521, 1, 0
    %v3554 = vsel %vm3522, 1, 0
    %v3555 = vsel %vm3523, 1, 0
    %v3556 = vsel %vm3524, 1, 0
    %v3557 = vsel %vm3525, 1, 0
    %v3558 = vsel %vm3526, 1, 0
    %v3559 = vsel %vm3527, 1, 0
    %v3560 = vsel %vm3528, 1, 0
    %v3561 = vsel %vm3529, 1, 0
    %v3562 = vsel %vm3530, 1, 0
    %v3563 = vsel %vm3531, 1, 0
    %v3564 = vsel %vm3532, 1, 0
    %v3565 = vsel %vm3533, 1, 0
    %v3566 = vsel %vm3534, 1, 0
    %v3567 = vsel %vm3535, 1, 0
    %v3568 = vsel %vm3536, 1, 0
    %v3569 = vsel %vm3537, 1, 0
    %v3570 = vsel %vm3538, 1, 0
    %v3571 = vsel %vm3539, 1, 0
    %v3572 = vsel %vm3540, 1, 0
    %v3573 = vcvt.s32.f32 %v3541
    %v3574 = vcvt.s32.f32 %v3542
    %v3575 = vcvt.s32.f32 %v3543
    %v3576 = vcvt.s32.f32 %v3544
    %v3577 = vcvt.s32.f32 %v3545
    %v3578 = vcvt.s32.f32 %v3546
    %v3579 = vcvt.s32.f32 %v3547
    %v3580 = vcvt.s32.f32 %v3548
    %v3581 = vcvt.s32.f32 %v3549
    %v3582 = vcvt.s32.f32 %v3550
    %v3583 = vcvt.s32.f32 %v3551
    %v3584 = vcvt.s32.f32 %v3552
    %v3585 = vcvt.s32.f32 %v3553
    %v3586 = vcvt.s32.f32 %v3554
    %v3587 = vcvt.s32.f32 %v3555
    %v3588 = vcvt.s32.f32 %v3556
    %v3589 = vcvt.s32.f32 %v3557
    %v3590 = vcvt.s32.f32 %v3558
    %v3591 = vcvt.s32.f32 %v3559
    %v3592 = vcvt.s32.f32 %v3560
    %v3593 = vcvt.s32.f32 %v3561
    %v3594 = vcvt.s32.f32 %v3562
    %v3595 = vcvt.s32.f32 %v3563
    %v3596 = vcvt.s32.f32 %v3564
    %v3597 = vcvt.s32.f32 %v3565
    %v3598 = vcvt.s32.f32 %v3566
    %v3599 = vcvt.s32.f32 %v3567
    %v3600 = vcvt.s32.f32 %v3568
    %v3601 = vcvt.s32.f32 %v3569
    %v3602 = vcvt.s32.f32 %v3570
    %v3603 = vcvt.s32.f32 %v3571
    %v3604 = vcvt.s32.f32 %v3572
    %v3605 = vpack.c.bf16 %v3574, %v3573
    %v3606 = vpack.c.bf16 %v3576, %v3575
    %v3607 = vpack.c.bf16 %v3578, %v3577
    %v3608 = vpack.c.bf16 %v3580, %v3579
    %v3609 = vpack.c.bf16 %v3582, %v3581
    %v3610 = vpack.c.bf16 %v3584, %v3583
    %v3611 = vpack.c.bf16 %v3586, %v3585
    %v3612 = vpack.c.bf16 %v3588, %v3587
    %v3613 = vpack.c.bf16 %v3590, %v3589
    %v3614 = vpack.c.bf16 %v3592, %v3591
    %v3615 = vpack.c.bf16 %v3594, %v3593
    %v3616 = vpack.c.bf16 %v3596, %v3595
    %v3617 = vpack.c.bf16 %v3598, %v3597
    %v3618 = vpack.c.bf16 %v3600, %v3599
    %v3619 = vpack.c.bf16 %v3602, %v3601
    %v3620 = vpack.c.bf16 %v3604, %v3603
    %v3621 = vld [vmem:[%s6] sm:$0xf]
    %v3622 = vld [vmem:[%s6 + $0x4] sm:$0xf]
    %v3625 = vunpack.c.l.b16 %v3621
    %v3626 = vunpack.c.l.b16 %v3622
    %v3627 = vpack.c.b16 %v3626, %v3625
    %vm3629 = vcmask 130048
    %v3631 = vsel %vm3629, %v3301, 0
    %v3634 = vsel %vm3629, %v3302, 0
    %v3637 = vsel %vm3629, %v3303, 0
    %v3640 = vsel %vm3629, %v3304, 0
    %v3643 = vsel %vm3629, %v3305, 0
    %v3646 = vsel %vm3629, %v3306, 0
    %v3649 = vsel %vm3629, %v3307, 0
    %v3652 = vsel %vm3629, %v3308, 0
    %v3655 = vsel %vm3629, %v3309, 0
    %v3658 = vsel %vm3629, %v3310, 0
    %v3661 = vsel %vm3629, %v3311, 0
    %v3664 = vsel %vm3629, %v3312, 0
    %v3667 = vsel %vm3629, %v3313, 0
    %v3670 = vsel %vm3629, %v3314, 0
    %v3673 = vsel %vm3629, %v3315, 0
    %v3676 = vsel %vm3629, %v3316, 0
    %3678 = vmatpush.bf16.msra.mxu0 0
    %3679 = vmatpush.bf16.msra.mxu0 0
    %3680 = vmatpush.bf16.msra.mxu0 0
    %3681 = vmatpush.bf16.msra.mxu0 0
    %3682 = vmatpush.bf16.msra.mxu0 0
    %3683 = vmatpush.bf16.msra.mxu0 0
    %3684 = vmatpush.bf16.msra.mxu0 0
    %3685 = vmatpush.bf16.msra.mxu0 %v3627
    %3686 = vmatmul.bf16.gmra.mxu0 %v3631
    %v3687 = vpop.f32.mrf.mxu0
    %v3688 = vadd.f32 0.0, %v3687
    %v3689 = vpop.f32.mrf.mxu0
    %v3690 = vadd.f32 0.0, %v3689
    %3691 = vmatmul.bf16.gmra.mxu0 %v3634
    %v3692 = vpop.f32.mrf.mxu0
    %v3693 = vadd.f32 0.0, %v3692
    %v3694 = vpop.f32.mrf.mxu0
    %v3695 = vadd.f32 0.0, %v3694
    %3696 = vmatmul.bf16.gmra.mxu0 %v3637
    %v3697 = vpop.f32.mrf.mxu0
    %v3698 = vadd.f32 0.0, %v3697
    %v3699 = vpop.f32.mrf.mxu0
    %v3700 = vadd.f32 0.0, %v3699
    %3701 = vmatmul.bf16.gmra.mxu0 %v3640
    %v3702 = vpop.f32.mrf.mxu0
    %v3703 = vadd.f32 0.0, %v3702
    %v3704 = vpop.f32.mrf.mxu0
    %v3705 = vadd.f32 0.0, %v3704
    %3706 = vmatmul.bf16.gmra.mxu0 %v3643
    %v3707 = vpop.f32.mrf.mxu0
    %v3708 = vadd.f32 0.0, %v3707
    %v3709 = vpop.f32.mrf.mxu0
    %v3710 = vadd.f32 0.0, %v3709
    %3711 = vmatmul.bf16.gmra.mxu0 %v3646
    %v3712 = vpop.f32.mrf.mxu0
    %v3713 = vadd.f32 0.0, %v3712
    %v3714 = vpop.f32.mrf.mxu0
    %v3715 = vadd.f32 0.0, %v3714
    %3716 = vmatmul.bf16.gmra.mxu0 %v3649
    %v3717 = vpop.f32.mrf.mxu0
    %v3718 = vadd.f32 0.0, %v3717
    %v3719 = vpop.f32.mrf.mxu0
    %v3720 = vadd.f32 0.0, %v3719
    %3721 = vmatmul.bf16.gmra.mxu0 %v3652
    %v3722 = vpop.f32.mrf.mxu0
    %v3723 = vadd.f32 0.0, %v3722
    %v3724 = vpop.f32.mrf.mxu0
    %v3725 = vadd.f32 0.0, %v3724
    %3726 = vmatmul.bf16.gmra.mxu0 %v3655
    %v3727 = vpop.f32.mrf.mxu0
    %v3728 = vadd.f32 0.0, %v3727
    %v3729 = vpop.f32.mrf.mxu0
    %v3730 = vadd.f32 0.0, %v3729
    %3731 = vmatmul.bf16.gmra.mxu0 %v3658
    %v3732 = vpop.f32.mrf.mxu0
    %v3733 = vadd.f32 0.0, %v3732
    %v3734 = vpop.f32.mrf.mxu0
    %v3735 = vadd.f32 0.0, %v3734
    %3736 = vmatmul.bf16.gmra.mxu0 %v3661
    %v3737 = vpop.f32.mrf.mxu0
    %v3738 = vadd.f32 0.0, %v3737
    %v3739 = vpop.f32.mrf.mxu0
    %v3740 = vadd.f32 0.0, %v3739
    %3741 = vmatmul.bf16.gmra.mxu0 %v3664
    %v3742 = vpop.f32.mrf.mxu0
    %v3743 = vadd.f32 0.0, %v3742
    %v3744 = vpop.f32.mrf.mxu0
    %v3745 = vadd.f32 0.0, %v3744
    %3746 = vmatmul.bf16.gmra.mxu0 %v3667
    %v3747 = vpop.f32.mrf.mxu0
    %v3748 = vadd.f32 0.0, %v3747
    %v3749 = vpop.f32.mrf.mxu0
    %v3750 = vadd.f32 0.0, %v3749
    %3751 = vmatmul.bf16.gmra.mxu0 %v3670
    %v3752 = vpop.f32.mrf.mxu0
    %v3753 = vadd.f32 0.0, %v3752
    %v3754 = vpop.f32.mrf.mxu0
    %v3755 = vadd.f32 0.0, %v3754
    %3756 = vmatmul.bf16.gmra.mxu0 %v3673
    %v3757 = vpop.f32.mrf.mxu0
    %v3758 = vadd.f32 0.0, %v3757
    %v3759 = vpop.f32.mrf.mxu0
    %v3760 = vadd.f32 0.0, %v3759
    %3761 = vmatmul.bf16.gmra.mxu0 %v3676
    %v3762 = vpop.f32.mrf.mxu0
    %v3763 = vadd.f32 0.0, %v3762
    %v3764 = vpop.f32.mrf.mxu0
    %v3765 = vadd.f32 0.0, %v3764
    %3766 = vdwg.mxu0
    %v3767 = vmul.f32 %v3688, %v2976
    %v3768 = vmul.f32 %v3690, %v2977
    %v3769 = vmul.f32 %v3693, %v2978
    %v3770 = vmul.f32 %v3695, %v2979
    %v3771 = vmul.f32 %v3698, %v2980
    %v3772 = vmul.f32 %v3700, %v2981
    %v3773 = vmul.f32 %v3703, %v2982
    %v3774 = vmul.f32 %v3705, %v2983
    %v3775 = vmul.f32 %v3708, %v2984
    %v3776 = vmul.f32 %v3710, %v2985
    %v3777 = vmul.f32 %v3713, %v2986
    %v3778 = vmul.f32 %v3715, %v2987
    %v3779 = vmul.f32 %v3718, %v2988
    %v3780 = vmul.f32 %v3720, %v2989
    %v3781 = vmul.f32 %v3723, %v2990
    %v3782 = vmul.f32 %v3725, %v2991
    %v3783 = vmul.f32 %v3728, %v2992
    %v3784 = vmul.f32 %v3730, %v2993
    %v3785 = vmul.f32 %v3733, %v2994
    %v3786 = vmul.f32 %v3735, %v2995
    %v3787 = vmul.f32 %v3738, %v2996
    %v3788 = vmul.f32 %v3740, %v2997
    %v3789 = vmul.f32 %v3743, %v2998
    %v3790 = vmul.f32 %v3745, %v2999
    %v3791 = vmul.f32 %v3748, %v3000
    %v3792 = vmul.f32 %v3750, %v3001
    %v3793 = vmul.f32 %v3753, %v3002
    %v3794 = vmul.f32 %v3755, %v3003
    %v3795 = vmul.f32 %v3758, %v3004
    %v3796 = vmul.f32 %v3760, %v3005
    %v3797 = vmul.f32 %v3763, %v3006
    %v3798 = vmul.f32 %v3765, %v3007
    %v3799 = vpack.c.bf16 %v3768, %v3767
    %v3800 = vpack.c.bf16 %v3770, %v3769
    %v3801 = vpack.c.bf16 %v3772, %v3771
    %v3802 = vpack.c.bf16 %v3774, %v3773
    %v3803 = vpack.c.bf16 %v3776, %v3775
    %v3804 = vpack.c.bf16 %v3778, %v3777
    %v3805 = vpack.c.bf16 %v3780, %v3779
    %v3806 = vpack.c.bf16 %v3782, %v3781
    %v3807 = vpack.c.bf16 %v3784, %v3783
    %v3808 = vpack.c.bf16 %v3786, %v3785
    %v3809 = vpack.c.bf16 %v3788, %v3787
    %v3810 = vpack.c.bf16 %v3790, %v3789
    %v3811 = vpack.c.bf16 %v3792, %v3791
    %v3812 = vpack.c.bf16 %v3794, %v3793
    %v3813 = vpack.c.bf16 %v3796, %v3795
    %v3814 = vpack.c.bf16 %v3798, %v3797
    %v3815 = vld [vmem:[#allocation2] sm:$0xff]
    %v3816 = vld [vmem:[#allocation2 + $0x8] sm:$0xff]
    %3817 = vxpose.xlu0.c.b16.start [1/8] %v3605, 128
    %3818 = vxpose.xlu0.c.b16.cont [2/8] %v3606, 128
    %3819 = vxpose.xlu0.c.b16.cont [3/8] %v3607, 128
    %3820 = vxpose.xlu0.c.b16.cont [4/8] %v3608, 128
    %3821 = vxpose.xlu0.c.b16.cont [5/8] %v3609, 128
    %3822 = vxpose.xlu0.c.b16.cont [6/8] %v3610, 128
    %3823 = vxpose.xlu0.c.b16.cont [7/8] %v3611, 128
    %3824 = vxpose.xlu0.c.b16.end [8/8] %v3612, 128
    %v3825 = vpop.trf.xlu0
    %v3826 = vpop.trf.xlu0
    %v3827 = vpop.trf.xlu0
    %v3828 = vpop.trf.xlu0
    %v3829 = vpop.trf.xlu0
    %v3830 = vpop.trf.xlu0
    %v3831 = vpop.trf.xlu0
    %v3832 = vpop.trf.xlu0
    %3833 = vxpose.xlu0.c.b16.start [1/8] %v3613, 128
    %3834 = vxpose.xlu0.c.b16.cont [2/8] %v3614, 128
    %3835 = vxpose.xlu0.c.b16.cont [3/8] %v3615, 128
    %3836 = vxpose.xlu0.c.b16.cont [4/8] %v3616, 128
    %3837 = vxpose.xlu0.c.b16.cont [5/8] %v3617, 128
    %3838 = vxpose.xlu0.c.b16.cont [6/8] %v3618, 128
    %3839 = vxpose.xlu0.c.b16.cont [7/8] %v3619, 128
    %3840 = vxpose.xlu0.c.b16.end [8/8] %v3620, 128
    %v3841 = vpop.trf.xlu0
    %v3842 = vpop.trf.xlu0
    %v3843 = vpop.trf.xlu0
    %v3844 = vpop.trf.xlu0
    %v3845 = vpop.trf.xlu0
    %v3846 = vpop.trf.xlu0
    %v3847 = vpop.trf.xlu0
    %v3848 = vpop.trf.xlu0
    %3849 = vmatpush.bf16.msra.mxu0 %v3806
    %3850 = vmatpush.bf16.msra.mxu0 %v3805
    %3851 = vmatpush.bf16.msra.mxu0 %v3804
    %3852 = vmatpush.bf16.msra.mxu0 %v3803
    %3853 = vmatpush.bf16.msra.mxu0 %v3802
    %3854 = vmatpush.bf16.msra.mxu0 %v3801
    %3855 = vmatpush.bf16.msra.mxu0 %v3800
    %3856 = vmatpush.bf16.msra.mxu0 %v3799
    %3857 = vmatmul.bf16.gmra.mxu0 %v3825
    %v3858 = vpop.f32.mrf.mxu0
    %v3859 = vadd.f32 0.0, %v3858
    %v3860 = vpop.f32.mrf.mxu0
    %v3861 = vadd.f32 0.0, %v3860
    %3862 = vdwg.mxu0
    %3863 = vmatpush.bf16.msra.mxu0 %v3814
    %3864 = vmatpush.bf16.msra.mxu0 %v3813
    %3865 = vmatpush.bf16.msra.mxu0 %v3812
    %3866 = vmatpush.bf16.msra.mxu0 %v3811
    %3867 = vmatpush.bf16.msra.mxu0 %v3810
    %3868 = vmatpush.bf16.msra.mxu0 %v3809
    %3869 = vmatpush.bf16.msra.mxu0 %v3808
    %3870 = vmatpush.bf16.msra.mxu0 %v3807
    %3871 = vmatmul.bf16.gmra.mxu0 %v3841
    %v3872 = vpop.f32.mrf.mxu0
    %v3873 = vadd.f32 %v3859, %v3872
    %v3874 = vpop.f32.mrf.mxu0
    %v3875 = vadd.f32 %v3861, %v3874
    %3876 = vdwg.mxu0
    %v3877 = vadd.f32 %v3815, %v3873
    %v3878 = vadd.f32 %v3816, %v3875
    %3879 = vst [vmem:[#allocation2] sm:$0xff] %v3877
    %3880 = vst [vmem:[#allocation2 + $0x8] sm:$0xff] %v3878
    // Predicated region
    $region34: #{cfconv_forward.1} parent=1 // pred_check
      _
    $region35: #{cfconv_forward.1} parent=1 // pred_check_branch
      %3882 = sbr.rel (0) target = $region37
    $region36: #{cfconv_forward.1} parent=1 // pred_region
      %3884 = vsyncadd [#allocation3], 0
      %s3885 = sshll.u32 [#allocation2], 4
      %s3886 = int_to_ptr.vmem [resolvable:$true] %s3885
      %s3887 = sshll.u32 %s7, 4
      %s3888 = int_to_ptr.hbm [resolvable:$true] %s3887
      %3893 = dma.vmem_to_hbm [thread:$0]  %s3886, 256, %s3888, [#allocation3], 128, 128, 8
    $region37: #{cfconv_forward.1} parent=1 // pred_fallthru
      _
    // Predicated region
    $region38: #{cfconv_forward.1} parent=1 // pred_check
      _
    $region39: #{cfconv_forward.1} parent=1 // pred_check_branch
      %3895 = sbr.rel (0) target = $region41
    $region40: #{cfconv_forward.1} parent=1 // pred_region
      %3897 = dma.done [#allocation3], 256
    $region41: #{cfconv_forward.1} parent=1 // pred_fallthru
      _
    %3898 = vsyncpa [#allocation3], 1

</llo_original>
